<compile_context>
chip_gen: v7x
topology: tpu7x:2x2x1
jax: 0.10.0
libtpu: 0.0.40
codegen_flags: <defaults>
</compile_context>

<pallas_src>
import functools

import jax
import jax.numpy as jnp
from jax.experimental import pallas as pl
from jax.experimental.pallas import tpu as pltpu


def _convfuse_kernel(x_ref, wc_ref, bc_ref, w1_ref, b1_ref, w2_ref, b2_ref,
                     o_ref, *, img_w):
    # x_ref / o_ref : (NB, C, H*W)  NCHW with spatial flattened onto the lane axis
    # wc_ref        : (C, 9*C)      conv weight, column = (kh*3 + kw)*C + cin
    # bc_ref        : (C, 1)        conv bias (column)
    # w1_ref        : (2C, C)   b1_ref: (2C, 1)   first Linear (PyTorch layout)
    # w2_ref        : (C, 2C)   b2_ref: (C, 1)    second Linear (PyTorch layout)
    nb, chans, hw = x_ref.shape
    inv_hw = 1.0 / float(hw)

    # Lane-position masks for the first / last image column (lane index mod W).
    lane = jax.lax.broadcasted_iota(jnp.int32, (1, hw), 1)
    colpos = lane % img_w
    is_col0 = colpos == 0
    is_colL = colpos == (img_w - 1)

    for n in range(nb):                                   # nb is small and static
        xn = x_ref[n]                                     # (C, HW) single read
        # ---- strip sums (exact zero-padding handling, no padded copy) ----
        tot = jnp.sum(xn, axis=1, keepdims=True)          # (C, 1) only full pass
        col0 = jnp.sum(jnp.where(is_col0, xn, 0.0), axis=1, keepdims=True)
        colL = jnp.sum(jnp.where(is_colL, xn, 0.0), axis=1, keepdims=True)
        row0 = jnp.sum(xn[:, 0:img_w], axis=1, keepdims=True)
        rowL = jnp.sum(xn[:, hw - img_w:hw], axis=1, keepdims=True)
        c00 = xn[:, 0:1]                                  # corner pixels (C, 1)
        c0L = xn[:, img_w - 1:img_w]
        cL0 = xn[:, hw - img_w:hw - img_w + 1]
        cLL = xn[:, hw - 1:hw]

        # S[kh,kw] = sum_{h,w} x_pad[h+kh, w+kw]   (3x3 taps, pad=1, zero padding)
        s = jnp.concatenate([
            tot - rowL - colL + cLL,   # (0,0): drop last row,  last col
            tot - rowL,                # (0,1): drop last row
            tot - rowL - col0 + cL0,   # (0,2): drop last row,  first col
            tot - colL,                # (1,0): drop last col
            tot,                       # (1,1)
            tot - col0,                # (1,2): drop first col
            tot - row0 - colL + c0L,   # (2,0): drop first row, last col
            tot - row0,                # (2,1): drop first row
            tot - row0 - col0 + c00,   # (2,2): drop first row, first col
        ], axis=0)                                        # (9C, 1)

        # Lane-broadcast to 128 columns so every MXU operand is (8,128)-tile aligned
        # (all output columns identical; padded MACs are negligible vs HBM time).
        s128 = jnp.broadcast_to(s, (9 * chans, 128))

        # conv + global-avg-pool collapsed into one matmul, then the FC chain.
        pooled = jnp.dot(wc_ref[...], s128,
                         preferred_element_type=jnp.float32) * inv_hw + bc_ref[...]
        t1 = jnp.dot(w1_ref[...], pooled,
                     preferred_element_type=jnp.float32) + b1_ref[...]
        t = jnp.dot(w2_ref[...], t1,
                    preferred_element_type=jnp.float32) + b2_ref[...]    # (C, 128)
        gate = t[:, 0:1]                                                 # (C, 1)

        # Per-channel gate, lane-broadcast over H*W.  Re-read x from the VMEM block
        # so the image value is not kept live across the matmul chain.
        o_ref[n] = (x_ref[n] * gate).astype(o_ref.dtype)


def prepare_convfuse_params(wc, bc, w1, b1, w2, b2):
    """One-time parameter re-layout (call at load time, NOT per forward).

    wc: (Cout, Cin, 3, 3) OIHW    bc: (Cout,)
    w1: (2*Cout, Cout)            b1: (2*Cout,)
    w2: (Cout, 2*Cout)            b2: (Cout,)
    """
    cout, cin, kh, kw = wc.shape
    assert (kh, kw) == (3, 3), "ConvFuse uses a 3x3 conv"
    # column index = (kh*3 + kw)*Cin + cin, matching the kernel's tap ordering.
    wcm = jnp.transpose(wc, (0, 2, 3, 1)).reshape(cout, 9 * cin)
    return (wcm, bc.reshape(cout, 1), w1, b1.reshape(-1, 1), w2, b2.reshape(cout, 1))


def _pick_images_per_block(batch, bytes_per_image):
    # Prefer >= 2 grid steps (pipelining + megacore sharding of the 'parallel' axis),
    # then the largest image block that keeps double-buffered in+out under ~8 MiB.
    budget = 8 * 1024 * 1024
    for cand in (8, 4, 2):
        if batch % cand == 0 and batch // cand >= 2 and 4 * cand * bytes_per_image <= budget:
            return cand
    return 1


@jax.jit
def convfuse_forward(x_nchw, params):
    """Pallas ConvFuse.forward.  x_nchw: (N, C, H, W) f32; params from prepare_convfuse_params."""
    wcm, bcc, w1m, b1c, w2m, b2c = params
    batch, chans, height, width = x_nchw.shape
    cout = wcm.shape[0]
    hid = w1m.shape[0]
    assert cout == chans, "ConvFuse.expand requires conv out-channels == in-channels"
    assert x_nchw.dtype == jnp.float32, "kernel assumes f32 activations"
    hw = height * width

    bytes_per_image = chans * hw * 4
    nb = _pick_images_per_block(batch, bytes_per_image)

    # Rough VMEM bound: double-buffered x/out blocks + double-buffered weights.
    weight_bytes = 4 * (cout * 9 * chans + hid * chans + cout * hid + 2 * cout + hid)
    est_vmem = 4 * nb * bytes_per_image + 2 * weight_bytes
    if est_vmem > 14 * 1024 * 1024:
        # TODO(synk): H-tiled two-phase path (accumulate strip sums, then scale) for
        # images that exceed the default scoped-VMEM limit on v5e/v7x.
        raise NotImplementedError("image too large for the single-block ConvFuse kernel")

    # Free reshape: collapse spatial dims so H*W is the 128-lane axis (no transpose).
    x = x_nchw.reshape(batch, chans, hw)

    out = pl.pallas_call(
        functools.partial(_convfuse_kernel, img_w=width),
        out_shape=jax.ShapeDtypeStruct((batch, chans, hw), x.dtype),
        grid_spec=pltpu.PrefetchScalarGridSpec(
            num_scalar_prefetch=0,
            grid=(batch // nb,),
            in_specs=[
                pl.BlockSpec((nb, chans, hw), lambda i: (i, 0, 0)),     # x block
                pl.BlockSpec((cout, 9 * chans), lambda i: (0, 0)),      # conv weight
                pl.BlockSpec((cout, 1), lambda i: (0, 0)),              # conv bias
                pl.BlockSpec((hid, chans), lambda i: (0, 0)),           # fc1 weight
                pl.BlockSpec((hid, 1), lambda i: (0, 0)),               # fc1 bias
                pl.BlockSpec((cout, hid), lambda i: (0, 0)),            # fc2 weight
                pl.BlockSpec((cout, 1), lambda i: (0, 0)),              # fc2 bias
            ],
            out_specs=pl.BlockSpec((nb, chans, hw), lambda i: (i, 0, 0)),
        ),
        compiler_params=pltpu.CompilerParams(
            dimension_semantics=("parallel",)),
    )(x, wcm, bcc, w1m, b1c, w2m, b2c)

    return out.reshape(batch, chans, height, width)


def convfuse_reference(x, wc, bc, w1, b1, w2, b2):
    """Pure-JAX reference (lax conv + pool + linears) for correctness checking."""
    dn = ("NCHW", "OIHW", "NCHW")
    y = jax.lax.conv_general_dilated(
        x, wc, window_strides=(1, 1), padding=[(1, 1), (1, 1)],
        dimension_numbers=dn,
        precision=jax.lax.Precision.HIGHEST) + bc[None, :, None, None]
    p = jnp.mean(y, axis=(2, 3))                                   # (N, C)
    t = jnp.dot(p, w1.T, precision=jax.lax.Precision.HIGHEST) + b1
    t = jnp.dot(t, w2.T, precision=jax.lax.Precision.HIGHEST) + b2
    return t[:, :, None, None] * x


if __name__ == "__main__":
    # Module-consistent small shapes: embedding_dim_in=64 -> C_in = 128,
    # embedding_dim_out=128 (== 2*embedding_dim_in, required by the expand),
    # batch=2, spatial 16x16.
    E_in, E_out = 64, 128
    N, C, H, W = 2, 2 * E_in, 16, 16

    key = jax.random.PRNGKey(0)
    kx, kwc, kbc, kw1, kb1, kw2, kb2 = jax.random.split(key, 7)

    x = jax.random.normal(kx, (N, C, H, W), dtype=jnp.float32)
    wc = jax.random.normal(kwc, (E_out, C, 3, 3), dtype=jnp.float32) * 0.05
    bc = jax.random.normal(kbc, (E_out,), dtype=jnp.float32) * 0.05
    w1 = jax.random.normal(kw1, (2 * E_out, E_out), dtype=jnp.float32) * 0.05
    b1 = jax.random.normal(kb1, (2 * E_out,), dtype=jnp.float32) * 0.05
    w2 = jax.random.normal(kw2, (E_out, 2 * E_out), dtype=jnp.float32) * 0.05
    b2 = jax.random.normal(kb2, (E_out,), dtype=jnp.float32) * 0.05

    params = prepare_convfuse_params(wc, bc, w1, b1, w2, b2)   # one-time re-layout
    out = convfuse_forward(x, params)
    jax.block_until_ready(out)

    ref = convfuse_reference(x, wc, bc, w1, b1, w2, b2)
    assert out.shape == (N, C, H, W)
    assert jnp.allclose(out, ref, atol=2e-3, rtol=2e-3), \
        f"max abs diff {float(jnp.max(jnp.abs(out - ref)))}"

    print("KERNEL_OK")
</pallas_src>

<mosaic_0001>
module attributes {stable_mosaic.version = 11 : i64} {
  func.func @_convfuse_kernel(%arg0: i32, %arg1: memref<1x128x256xf32, #tpu.memory_space<vmem>>, %arg2: memref<128x1152xf32, #tpu.memory_space<vmem>>, %arg3: memref<128x1xf32, #tpu.memory_space<vmem>>, %arg4: memref<256x128xf32, #tpu.memory_space<vmem>>, %arg5: memref<256x1xf32, #tpu.memory_space<vmem>>, %arg6: memref<128x256xf32, #tpu.memory_space<vmem>>, %arg7: memref<128x1xf32, #tpu.memory_space<vmem>>, %arg8: memref<1x128x256xf32, #tpu.memory_space<vmem>>) attributes {dimension_semantics = [#tpu.dimension_semantics<parallel>], iteration_bounds = array<i64: 2>, scalar_prefetch = 0 : i64, scratch_operands = 0 : i64, tpu.core_type = #tpu.core_type<tc>, window_params = [{transform_indices = @transform_0, window_bounds = array<i64: 1, 128, 256>}, {pipeline_mode = #tpu.pipeline_mode<synchronous>, transform_indices = @transform_1, window_bounds = array<i64: 128, 1152>}, {pipeline_mode = #tpu.pipeline_mode<synchronous>, transform_indices = @transform_2, window_bounds = array<i64: 128, 1>}, {pipeline_mode = #tpu.pipeline_mode<synchronous>, transform_indices = @transform_3, window_bounds = array<i64: 256, 128>}, {pipeline_mode = #tpu.pipeline_mode<synchronous>, transform_indices = @transform_4, window_bounds = array<i64: 256, 1>}, {pipeline_mode = #tpu.pipeline_mode<synchronous>, transform_indices = @transform_5, window_bounds = array<i64: 128, 256>}, {pipeline_mode = #tpu.pipeline_mode<synchronous>, transform_indices = @transform_6, window_bounds = array<i64: 128, 1>}, {transform_indices = @transform_7, window_bounds = array<i64: 1, 128, 256>}]} {
    %0 = tpu.iota {dimensions = array<i32: 1>} : vector<1x256xi32>
    %c16_i32 = arith.constant 16 : i32
    %c0_i32 = arith.constant 0 : i32
    %1 = arith.cmpi eq, %c16_i32, %c0_i32 : i32
    %c1_i32 = arith.constant 1 : i32
    %2 = arith.select %1, %c1_i32, %c16_i32 : i32
    %3 = vector.broadcast %2 : i32 to vector<1x256xi32>
    %4 = arith.remsi %0, %3 : vector<1x256xi32>
    %c0_i32_0 = arith.constant 0 : i32
    %5 = vector.broadcast %c0_i32_0 : i32 to vector<1x256xi32>
    %6 = arith.cmpi ne, %4, %5 : vector<1x256xi32>
    %c0_i32_1 = arith.constant 0 : i32
    %7 = vector.broadcast %c0_i32_1 : i32 to vector<1x256xi32>
    %8 = arith.cmpi slt, %4, %7 : vector<1x256xi32>
    %c0_i32_2 = arith.constant 0 : i32
    %9 = arith.cmpi slt, %2, %c0_i32_2 : i32
    %10 = vector.broadcast %9 : i1 to vector<1x256xi1>
    %11 = vector.broadcast %10 : vector<1x256xi1> to vector<1x256xi1>
    %12 = arith.xori %8, %11 : vector<1x256xi1>
    %13 = arith.andi %12, %6 : vector<1x256xi1>
    %14 = vector.broadcast %2 : i32 to vector<1x256xi32>
    %15 = arith.addi %4, %14 : vector<1x256xi32>
    %16 = arith.select %13, %15, %4 : vector<1x256xi1>, vector<1x256xi32>
    %c0_i32_3 = arith.constant 0 : i32
    %17 = vector.broadcast %c0_i32_3 : i32 to vector<1x256xi32>
    %18 = arith.cmpi eq, %16, %17 : vector<1x256xi32>
    %c15_i32 = arith.constant 15 : i32
    %19 = vector.broadcast %c15_i32 : i32 to vector<1x256xi32>
    %20 = arith.cmpi eq, %16, %19 : vector<1x256xi32>
    %c0 = arith.constant 0 : index
    %c0_4 = arith.constant 0 : index
    %c0_5 = arith.constant 0 : index
    %21 = vector.load %arg1[%c0, %c0_4, %c0_5] : memref<1x128x256xf32, #tpu.memory_space<vmem>>, vector<1x128x256xf32>
    %22 = vector.shape_cast %21 : vector<1x128x256xf32> to vector<128x256xf32>
    %cst = arith.constant dense<0.000000e+00> : vector<128xf32>
    %23 = vector.multi_reduction <add>, %22, %cst [1] : vector<128x256xf32> to vector<128xf32>
    %24 = vector.shape_cast %23 : vector<128xf32> to vector<128x1xf32>
    %cst_6 = arith.constant 0.000000e+00 : f32
    %25 = vector.shape_cast %18 : vector<1x256xi1> to vector<1x256xi1>
    %26 = vector.broadcast %25 : vector<1x256xi1> to vector<128x256xi1>
    %27 = vector.broadcast %cst_6 : f32 to vector<128x256xf32>
    %28 = arith.select %26, %22, %27 : vector<128x256xi1>, vector<128x256xf32>
    %cst_7 = arith.constant dense<0.000000e+00> : vector<128xf32>
    %29 = vector.multi_reduction <add>, %28, %cst_7 [1] : vector<128x256xf32> to vector<128xf32>
    %30 = vector.shape_cast %29 : vector<128xf32> to vector<128x1xf32>
    %cst_8 = arith.constant 0.000000e+00 : f32
    %31 = vector.shape_cast %20 : vector<1x256xi1> to vector<1x256xi1>
    %32 = vector.broadcast %31 : vector<1x256xi1> to vector<128x256xi1>
    %33 = vector.broadcast %cst_8 : f32 to vector<128x256xf32>
    %34 = arith.select %32, %22, %33 : vector<128x256xi1>, vector<128x256xf32>
    %cst_9 = arith.constant dense<0.000000e+00> : vector<128xf32>
    %35 = vector.multi_reduction <add>, %34, %cst_9 [1] : vector<128x256xf32> to vector<128xf32>
    %36 = vector.shape_cast %35 : vector<128xf32> to vector<128x1xf32>
    %37 = vector.extract_strided_slice %22 {offsets = [0, 0], sizes = [128, 16], strides = [1, 1]} : vector<128x256xf32> to vector<128x16xf32>
    %cst_10 = arith.constant dense<0.000000e+00> : vector<128xf32>
    %38 = vector.multi_reduction <add>, %37, %cst_10 [1] : vector<128x16xf32> to vector<128xf32>
    %39 = vector.shape_cast %38 : vector<128xf32> to vector<128x1xf32>
    %40 = vector.extract_strided_slice %22 {offsets = [0, 240], sizes = [128, 16], strides = [1, 1]} : vector<128x256xf32> to vector<128x16xf32>
    %cst_11 = arith.constant dense<0.000000e+00> : vector<128xf32>
    %41 = vector.multi_reduction <add>, %40, %cst_11 [1] : vector<128x16xf32> to vector<128xf32>
    %42 = vector.shape_cast %41 : vector<128xf32> to vector<128x1xf32>
    %43 = vector.extract_strided_slice %22 {offsets = [0, 0], sizes = [128, 1], strides = [1, 1]} : vector<128x256xf32> to vector<128x1xf32>
    %44 = vector.extract_strided_slice %22 {offsets = [0, 15], sizes = [128, 1], strides = [1, 1]} : vector<128x256xf32> to vector<128x1xf32>
    %45 = vector.extract_strided_slice %22 {offsets = [0, 240], sizes = [128, 1], strides = [1, 1]} : vector<128x256xf32> to vector<128x1xf32>
    %46 = vector.extract_strided_slice %22 {offsets = [0, 255], sizes = [128, 1], strides = [1, 1]} : vector<128x256xf32> to vector<128x1xf32>
    %47 = arith.subf %24, %42 : vector<128x1xf32>
    %48 = arith.subf %47, %36 : vector<128x1xf32>
    %49 = arith.addf %48, %46 : vector<128x1xf32>
    %50 = arith.subf %24, %42 : vector<128x1xf32>
    %51 = arith.subf %24, %42 : vector<128x1xf32>
    %52 = arith.subf %51, %30 : vector<128x1xf32>
    %53 = arith.addf %52, %45 : vector<128x1xf32>
    %54 = arith.subf %24, %36 : vector<128x1xf32>
    %55 = arith.subf %24, %30 : vector<128x1xf32>
    %56 = arith.subf %24, %39 : vector<128x1xf32>
    %57 = arith.subf %56, %36 : vector<128x1xf32>
    %58 = arith.addf %57, %44 : vector<128x1xf32>
    %59 = arith.subf %24, %39 : vector<128x1xf32>
    %60 = arith.subf %24, %39 : vector<128x1xf32>
    %61 = arith.subf %60, %30 : vector<128x1xf32>
    %62 = arith.addf %61, %43 : vector<128x1xf32>
    %63 = tpu.concatenate %49, %50, %53, %54, %24, %55, %58, %59, %62 in 0 : vector<128x1xf32>, vector<128x1xf32>, vector<128x1xf32>, vector<128x1xf32>, vector<128x1xf32>, vector<128x1xf32>, vector<128x1xf32>, vector<128x1xf32>, vector<128x1xf32> -> vector<1152x1xf32>
    %64 = vector.shape_cast %63 : vector<1152x1xf32> to vector<1152x1xf32>
    %65 = vector.broadcast %64 : vector<1152x1xf32> to vector<1152x128xf32>
    %c0_12 = arith.constant 0 : index
    %c0_13 = arith.constant 0 : index
    %66 = vector.load %arg2[%c0_12, %c0_13] : memref<128x1152xf32, #tpu.memory_space<vmem>>, vector<128x1152xf32>
    %cst_14 = arith.constant dense<0.000000e+00> : vector<128x128xf32>
    %67 = tpu.matmul %66, %65, %cst_14 {dimension_numbers = #tpu.dot_dimension_numbers<[1], [0], [0], [1], [0, 0, 1, 1], [], []>} : vector<128x1152xf32>, vector<1152x128xf32>, vector<128x128xf32> -> vector<128x128xf32>
    %cst_15 = arith.constant 3.906250e-03 : f32
    %68 = vector.broadcast %cst_15 : f32 to vector<128x128xf32>
    %69 = arith.mulf %67, %68 : vector<128x128xf32>
    %c0_16 = arith.constant 0 : index
    %c0_17 = arith.constant 0 : index
    %70 = vector.load %arg3[%c0_16, %c0_17] : memref<128x1xf32, #tpu.memory_space<vmem>>, vector<128x1xf32>
    %71 = vector.broadcast %70 : vector<128x1xf32> to vector<128x128xf32>
    %72 = arith.addf %69, %71 : vector<128x128xf32>
    %c0_18 = arith.constant 0 : index
    %c0_19 = arith.constant 0 : index
    %73 = vector.load %arg4[%c0_18, %c0_19] : memref<256x128xf32, #tpu.memory_space<vmem>>, vector<256x128xf32>
    %cst_20 = arith.constant dense<0.000000e+00> : vector<256x128xf32>
    %74 = tpu.matmul %73, %72, %cst_20 {dimension_numbers = #tpu.dot_dimension_numbers<[1], [0], [0], [1], [0, 0, 1, 1], [], []>} : vector<256x128xf32>, vector<128x128xf32>, vector<256x128xf32> -> vector<256x128xf32>
    %c0_21 = arith.constant 0 : index
    %c0_22 = arith.constant 0 : index
    %75 = vector.load %arg5[%c0_21, %c0_22] : memref<256x1xf32, #tpu.memory_space<vmem>>, vector<256x1xf32>
    %76 = vector.broadcast %75 : vector<256x1xf32> to vector<256x128xf32>
    %77 = arith.addf %74, %76 : vector<256x128xf32>
    %c0_23 = arith.constant 0 : index
    %c0_24 = arith.constant 0 : index
    %78 = vector.load %arg6[%c0_23, %c0_24] : memref<128x256xf32, #tpu.memory_space<vmem>>, vector<128x256xf32>
    %cst_25 = arith.constant dense<0.000000e+00> : vector<128x128xf32>
    %79 = tpu.matmul %78, %77, %cst_25 {dimension_numbers = #tpu.dot_dimension_numbers<[1], [0], [0], [1], [0, 0, 1, 1], [], []>} : vector<128x256xf32>, vector<256x128xf32>, vector<128x128xf32> -> vector<128x128xf32>
    %c0_26 = arith.constant 0 : index
    %c0_27 = arith.constant 0 : index
    %80 = vector.load %arg7[%c0_26, %c0_27] : memref<128x1xf32, #tpu.memory_space<vmem>>, vector<128x1xf32>
    %81 = vector.broadcast %80 : vector<128x1xf32> to vector<128x128xf32>
    %82 = arith.addf %79, %81 : vector<128x128xf32>
    %83 = vector.extract_strided_slice %82 {offsets = [0, 0], sizes = [128, 1], strides = [1, 1]} : vector<128x128xf32> to vector<128x1xf32>
    %c0_28 = arith.constant 0 : index
    %c0_29 = arith.constant 0 : index
    %c0_30 = arith.constant 0 : index
    %84 = vector.load %arg1[%c0_28, %c0_29, %c0_30] : memref<1x128x256xf32, #tpu.memory_space<vmem>>, vector<1x128x256xf32>
    %85 = vector.shape_cast %84 : vector<1x128x256xf32> to vector<128x256xf32>
    %86 = vector.broadcast %83 : vector<128x1xf32> to vector<128x256xf32>
    %87 = arith.mulf %85, %86 : vector<128x256xf32>
    %c0_31 = arith.constant 0 : index
    %c0_32 = arith.constant 0 : index
    %c0_33 = arith.constant 0 : index
    %88 = vector.load %arg8[%c0_31, %c0_32, %c0_33] : memref<1x128x256xf32, #tpu.memory_space<vmem>>, vector<1x128x256xf32>
    %89 = vector.shape_cast %88 : vector<1x128x256xf32> to vector<128x256xf32>
    %90 = vector.shape_cast %87 : vector<128x256xf32> to vector<1x128x256xf32>
    tpu.vector_store %arg8[%c0_31, %c0_32, %c0_33], %90 {strides = array<i32>} : memref<1x128x256xf32, #tpu.memory_space<vmem>>, vector<1x128x256xf32>,
    return
  }
  func.func @transform_0(%arg0: i32) -> (i32, i32, i32) {
    %c0_i32 = arith.constant 0 : i32
    %c0_i32_0 = arith.constant 0 : i32
    %c0_i32_1 = arith.constant 0 : i32
    return %arg0, %c0_i32, %c0_i32_0 : i32, i32, i32
  }
  func.func @transform_1(%arg0: i32) -> (i32, i32) {
    %c0_i32 = arith.constant 0 : i32
    %c0_i32_0 = arith.constant 0 : i32
    %c0_i32_1 = arith.constant 0 : i32
    return %c0_i32, %c0_i32_0 : i32, i32
  }
  func.func @transform_2(%arg0: i32) -> (i32, i32) {
    %c0_i32 = arith.constant 0 : i32
    %c0_i32_0 = arith.constant 0 : i32
    %c0_i32_1 = arith.constant 0 : i32
    return %c0_i32, %c0_i32_0 : i32, i32
  }
  func.func @transform_3(%arg0: i32) -> (i32, i32) {
    %c0_i32 = arith.constant 0 : i32
    %c0_i32_0 = arith.constant 0 : i32
    %c0_i32_1 = arith.constant 0 : i32
    return %c0_i32, %c0_i32_0 : i32, i32
  }
  func.func @transform_4(%arg0: i32) -> (i32, i32) {
    %c0_i32 = arith.constant 0 : i32
    %c0_i32_0 = arith.constant 0 : i32
    %c0_i32_1 = arith.constant 0 : i32
    return %c0_i32, %c0_i32_0 : i32, i32
  }
  func.func @transform_5(%arg0: i32) -> (i32, i32) {
    %c0_i32 = arith.constant 0 : i32
    %c0_i32_0 = arith.constant 0 : i32
    %c0_i32_1 = arith.constant 0 : i32
    return %c0_i32, %c0_i32_0 : i32, i32
  }
  func.func @transform_6(%arg0: i32) -> (i32, i32) {
    %c0_i32 = arith.constant 0 : i32
    %c0_i32_0 = arith.constant 0 : i32
    %c0_i32_1 = arith.constant 0 : i32
    return %c0_i32, %c0_i32_0 : i32, i32
  }
  func.func @transform_7(%arg0: i32) -> (i32, i32, i32) {
    %c0_i32 = arith.constant 0 : i32
    %c0_i32_0 = arith.constant 0 : i32
    %c0_i32_1 = arith.constant 0 : i32
    return %arg0, %c0_i32, %c0_i32_0 : i32, i32, i32
  }
}

</mosaic_0001>

<llo_original>
// kernel: convfuse_forward.1
$region0: #{convfuse_forward.1}
  #allocation0 [shape = 'u32[]', space=smem, size = 0x4, offset = 0x4, fixed_abs, tag = 'smem constant byte address 0x4 - core index']
  #allocation1 [shape = 'u32[144,128]{1,0:T(1,128)}', space=vmem, size = 0x12000, scoped, tag = 'internal scratch']
  %s0 = inlined_call_operand.vmem [shape: f32[2,128,256], index: 0, kind: input, shape index: {}]
  %s1 = inlined_call_operand.vmem [shape: f32[128,1152], index: 1, kind: input, shape index: {}]
  %s2 = inlined_call_operand.vmem [shape: f32[128,1], index: 2, kind: input, shape index: {}]
  %s3 = inlined_call_operand.vmem [shape: f32[256,128], index: 3, kind: input, shape index: {}]
  %s4 = inlined_call_operand.vmem [shape: f32[256,1], index: 4, kind: input, shape index: {}]
  %s5 = inlined_call_operand.hbm [shape: f32[128,256], index: 5, kind: input, shape index: {}]
  %s6 = inlined_call_operand.vmem [shape: f32[128,1], index: 6, kind: input, shape index: {}]
  %s7 = inlined_call_operand.vmem [shape: f32[2,128,256], index: 7, kind: output, shape index: {}]
  %s8 = sld [smem:[#allocation0]]
  $region65: #{convfuse_forward.1} parent=0
    _
  %s10 = ssub.s32 1, %s8
  %s11 = scalar_select 0, %s10, %s8
  $region1: #{convfuse_forward.1} parent=0
    #allocation2 [shape = 'u8[131072]{0}', space=vmem, size = 0x20000, scoped, tag = 'input window, operand 5, single buffered']
    #allocation3 [shape = 's32[2]{0}', space=sflag, size = 0x8, scoped, tag = 'scoped memory for convfuse_forward.1']
    %12 = vsyncpa [#allocation3], 0
    loop: start=0, step=1, limit=4
    $region2: #{convfuse_forward.1} parent=1 // loop_pre_header
      _
    $region3: #{convfuse_forward.1} parent=1 // loop_header
      %s14 = sphi 0, %s18
      %p15 = scmp.ge.s32.totalorder %s14, 4
      %s24 = sphi 0, %s26
      %s27 = sphi 0, %s24
      %s28 = sphi 0, %s27
      %s44 = sphi 0, %s28
      %s48 = sphi 0, %s48
      %s50 = sphi 0, %s48
      %s51 = sphi 0, %s50
      %s65 = sphi 0, %s51
      %s69 = sphi 0, %s69
      %s71 = sphi 0, %s69
      %s72 = sphi 0, %s71
      %s86 = sphi 0, %s72
      %s90 = sphi 0, %s90
      %s92 = sphi 0, %s90
      %s93 = sphi 0, %s92
      %s107 = sphi 0, %s93
      %s111 = sphi 0, %s111
      %s113 = sphi 0, %s111
      %s114 = sphi 0, %s113
      %s128 = sphi 0, %s114
      %s132 = sphi 0, %s132
      %s134 = sphi 0, %s132
      %s135 = sphi 0, %s134
      %s149 = sphi 0, %s135
      %s153 = sphi 0, %s153
      %s155 = sphi 0, %s153
      %s156 = sphi 0, %s155
      %s170 = sphi 0, %s156
      %s176 = sphi 0, %s178
      %s179 = sphi 0, %s176
      %s180 = sphi 0, %s179
      %s196 = sphi 0, %s180
    $region4: #{convfuse_forward.1} parent=1 // loop_header_branch
      %17 = sbr.rel (%p15) target = $region8
    $region5: #{convfuse_forward.1} parent=1 // loop_body
      %s19 = ssub.s32 %s14, 1
      %s20 = ssub.s32 %s14, 2
      %s21 = sadd.s32 %s14, 1
      %s22 = ssub.s32 %s14, %s21
      %p23 = scmp.eq.s32.totalorder %s22, 0
      %s25 = sadd.s32 %s24, 1
      %s26 = scalar_select %p23, %s24, %s25
      %p29 = pneg %p23
      %p30 = scmp.eq.s32.totalorder %s14, 1
      %p31 = por %p29, %p30
      %p32 = scmp.ne.s32.totalorder %s24, %s27
      %p33 = scmp.eq.s32.totalorder %s14, 0
      %p34 = por %p32, %p33
      %p35 = scmp.ne.s32.totalorder %s24, %s27
      %p36 = scmp.eq.s32.totalorder %s19, 1
      %p37 = por %p35, %p36
      %p38 = scmp.ne.s32.totalorder %s27, %s28
      %p39 = scmp.eq.s32.totalorder %s19, 0
      %p40 = por %p38, %p39
      %p41 = scmp.ne.s32.totalorder %s27, %s28
      %p42 = scmp.eq.s32.totalorder %s20, 1
      %p43 = por %p41, %p42
      %p45 = scmp.ne.s32.totalorder %s28, %s44
      %p46 = scmp.eq.s32.totalorder %s20, 0
      %p47 = por %p45, %p46
      %s49 = sadd.s32 %s48, 1
      %p52 = scmp.eq.s32.totalorder %s14, 1
      %p53 = scmp.ne.s32.totalorder %s48, %s50
      %p54 = scmp.eq.s32.totalorder %s14, 0
      %p55 = por %p53, %p54
      %p56 = scmp.ne.s32.totalorder %s48, %s50
      %p57 = scmp.eq.s32.totalorder %s19, 1
      %p58 = por %p56, %p57
      %p59 = scmp.ne.s32.totalorder %s50, %s51
      %p60 = scmp.eq.s32.totalorder %s19, 0
      %p61 = por %p59, %p60
      %p62 = scmp.ne.s32.totalorder %s50, %s51
      %p63 = scmp.eq.s32.totalorder %s20, 1
      %p64 = por %p62, %p63
      %p66 = scmp.ne.s32.totalorder %s51, %s65
      %p67 = scmp.eq.s32.totalorder %s20, 0
      %p68 = por %p66, %p67
      %s70 = sadd.s32 %s69, 1
      %p73 = scmp.eq.s32.totalorder %s14, 1
      %p74 = scmp.ne.s32.totalorder %s69, %s71
      %p75 = scmp.eq.s32.totalorder %s14, 0
      %p76 = por %p74, %p75
      %p77 = scmp.ne.s32.totalorder %s69, %s71
      %p78 = scmp.eq.s32.totalorder %s19, 1
      %p79 = por %p77, %p78
      %p80 = scmp.ne.s32.totalorder %s71, %s72
      %p81 = scmp.eq.s32.totalorder %s19, 0
      %p82 = por %p80, %p81
      %p83 = scmp.ne.s32.totalorder %s71, %s72
      %p84 = scmp.eq.s32.totalorder %s20, 1
      %p85 = por %p83, %p84
      %p87 = scmp.ne.s32.totalorder %s72, %s86
      %p88 = scmp.eq.s32.totalorder %s20, 0
      %p89 = por %p87, %p88
      %s91 = sadd.s32 %s90, 1
      %p94 = scmp.eq.s32.totalorder %s14, 1
      %p95 = scmp.ne.s32.totalorder %s90, %s92
      %p96 = scmp.eq.s32.totalorder %s14, 0
      %p97 = por %p95, %p96
      %p98 = scmp.ne.s32.totalorder %s90, %s92
      %p99 = scmp.eq.s32.totalorder %s19, 1
      %p100 = por %p98, %p99
      %p101 = scmp.ne.s32.totalorder %s92, %s93
      %p102 = scmp.eq.s32.totalorder %s19, 0
      %p103 = por %p101, %p102
      %p104 = scmp.ne.s32.totalorder %s92, %s93
      %p105 = scmp.eq.s32.totalorder %s20, 1
      %p106 = por %p104, %p105
      %p108 = scmp.ne.s32.totalorder %s93, %s107
      %p109 = scmp.eq.s32.totalorder %s20, 0
      %p110 = por %p108, %p109
      %s112 = sadd.s32 %s111, 1
      %p115 = scmp.eq.s32.totalorder %s14, 1
      %p116 = scmp.ne.s32.totalorder %s111, %s113
      %p117 = scmp.eq.s32.totalorder %s14, 0
      %p118 = por %p116, %p117
      %p119 = scmp.ne.s32.totalorder %s111, %s113
      %p120 = scmp.eq.s32.totalorder %s19, 1
      %p121 = por %p119, %p120
      %p122 = scmp.ne.s32.totalorder %s113, %s114
      %p123 = scmp.eq.s32.totalorder %s19, 0
      %p124 = por %p122, %p123
      %p125 = scmp.ne.s32.totalorder %s113, %s114
      %p126 = scmp.eq.s32.totalorder %s20, 1
      %p127 = por %p125, %p126
      %p129 = scmp.ne.s32.totalorder %s114, %s128
      %p130 = scmp.eq.s32.totalorder %s20, 0
      %p131 = por %p129, %p130
      %s133 = sadd.s32 %s132, 1
      %p136 = scmp.eq.s32.totalorder %s14, 1
      %p137 = scmp.ne.s32.totalorder %s132, %s134
      %p138 = scmp.eq.s32.totalorder %s14, 0
      %p139 = por %p137, %p138
      %p140 = scmp.ne.s32.totalorder %s132, %s134
      %p141 = scmp.eq.s32.totalorder %s19, 1
      %p142 = por %p140, %p141
      %p143 = scmp.ne.s32.totalorder %s134, %s135
      %p144 = scmp.eq.s32.totalorder %s19, 0
      %p145 = por %p143, %p144
      %p146 = scmp.ne.s32.totalorder %s134, %s135
      %p147 = scmp.eq.s32.totalorder %s20, 1
      %p148 = por %p146, %p147
      %p150 = scmp.ne.s32.totalorder %s135, %s149
      %p151 = scmp.eq.s32.totalorder %s20, 0
      %p152 = por %p150, %p151
      %s154 = sadd.s32 %s153, 1
      %p157 = scmp.eq.s32.totalorder %s14, 1
      %p158 = scmp.ne.s32.totalorder %s153, %s155
      %p159 = scmp.eq.s32.totalorder %s14, 0
      %p160 = por %p158, %p159
      %p161 = scmp.ne.s32.totalorder %s153, %s155
      %p162 = scmp.eq.s32.totalorder %s19, 1
      %p163 = por %p161, %p162
      %p164 = scmp.ne.s32.totalorder %s155, %s156
      %p165 = scmp.eq.s32.totalorder %s19, 0
      %p166 = por %p164, %p165
      %p167 = scmp.ne.s32.totalorder %s155, %s156
      %p168 = scmp.eq.s32.totalorder %s20, 1
      %p169 = por %p167, %p168
      %p171 = scmp.ne.s32.totalorder %s156, %s170
      %p172 = scmp.eq.s32.totalorder %s20, 0
      %p173 = por %p171, %p172
      %s174 = ssub.s32 %s14, %s21
      %p175 = scmp.eq.s32.totalorder %s174, 0
      %s177 = sadd.s32 %s176, 1
      %s178 = scalar_select %p175, %s176, %s177
      %p181 = pneg %p175
      %p182 = scmp.eq.s32.totalorder %s14, 1
      %p183 = por %p181, %p182
      %p184 = scmp.ne.s32.totalorder %s176, %s179
      %p185 = scmp.eq.s32.totalorder %s14, 0
      %p186 = por %p184, %p185
      %p187 = scmp.ne.s32.totalorder %s176, %s179
      %p188 = scmp.eq.s32.totalorder %s19, 1
      %p189 = por %p187, %p188
      %p190 = scmp.ne.s32.totalorder %s179, %s180
      %p191 = scmp.eq.s32.totalorder %s19, 0
      %p192 = por %p190, %p191
      %p193 = scmp.ne.s32.totalorder %s179, %s180
      %p194 = scmp.eq.s32.totalorder %s20, 1
      %p195 = por %p193, %p194
      %p197 = scmp.ne.s32.totalorder %s180, %s196
      %p198 = scmp.eq.s32.totalorder %s20, 0
      %p199 = por %p197, %p198
      %p200 = scmp.le.s32.totalorder 1, %s14
      %p201 = scmp.lt.s32.totalorder %s14, 3
      %p202 = pnand %p200, %p201
      %p203 = pneg %p202
      // Predicated region
      $region9: #{convfuse_forward.1} parent=5 // pred_check
        _
      $region10: #{convfuse_forward.1} parent=5 // pred_check_branch
        %205 = sbr.rel (%p202) target = $region12
      $region11: #{convfuse_forward.1} parent=5 // pred_region
        %s206 = ssub.s32 %s14, 1
        // Predicated region
        $region13: #{convfuse_forward.1} parent=11 // pred_check
          %p207 = pneg %p61
        $region14: #{convfuse_forward.1} parent=11 // pred_check_branch
          %209 = sbr.rel (%p207) target = $region16
        $region15: #{convfuse_forward.1} parent=11 // pred_region
          _
        $region16: #{convfuse_forward.1} parent=11 // pred_fallthru
          _
        // Predicated region
        $region17: #{convfuse_forward.1} parent=11 // pred_check
          %p210 = pneg %p82
        $region18: #{convfuse_forward.1} parent=11 // pred_check_branch
          %212 = sbr.rel (%p210) target = $region20
        $region19: #{convfuse_forward.1} parent=11 // pred_region
          _
        $region20: #{convfuse_forward.1} parent=11 // pred_fallthru
          _
        // Predicated region
        $region21: #{convfuse_forward.1} parent=11 // pred_check
          %p213 = pneg %p103
        $region22: #{convfuse_forward.1} parent=11 // pred_check_branch
          %215 = sbr.rel (%p213) target = $region24
        $region23: #{convfuse_forward.1} parent=11 // pred_region
          _
        $region24: #{convfuse_forward.1} parent=11 // pred_fallthru
          _
        // Predicated region
        $region25: #{convfuse_forward.1} parent=11 // pred_check
          %p216 = pneg %p124
        $region26: #{convfuse_forward.1} parent=11 // pred_check_branch
          %218 = sbr.rel (%p216) target = $region28
        $region27: #{convfuse_forward.1} parent=11 // pred_region
          _
        $region28: #{convfuse_forward.1} parent=11 // pred_fallthru
          _
        // Predicated region
        $region29: #{convfuse_forward.1} parent=11 // pred_check
          %p219 = pneg %p145
        $region30: #{convfuse_forward.1} parent=11 // pred_check_branch
          %221 = sbr.rel (%p219) target = $region32
        $region31: #{convfuse_forward.1} parent=11 // pred_region
          %s223 = ssub.s32 4096, 4096
          %224 = vsyncadd [#allocation3], %s223
          %s225 = sshll.u32 [#allocation2], 4
          %s226 = int_to_ptr.vmem [resolvable:$true] %s225
          %231 = dma.hbm_to_vmem [thread:$0]  %s5, 4096, %s226, [#allocation3], 256, 256, 16
        $region32: #{convfuse_forward.1} parent=11 // pred_fallthru
          _
        // Predicated region
        $region33: #{convfuse_forward.1} parent=11 // pred_check
          %p232 = pneg %p166
        $region34: #{convfuse_forward.1} parent=11 // pred_check_branch
          %234 = sbr.rel (%p232) target = $region36
        $region35: #{convfuse_forward.1} parent=11 // pred_region
          _
        $region36: #{convfuse_forward.1} parent=11 // pred_fallthru
          _
      $region12: #{convfuse_forward.1} parent=5 // pred_fallthru
        _
      %p235 = scmp.lt.s32.totalorder %s14, 2
      // Predicated region
      $region37: #{convfuse_forward.1} parent=5 // pred_check
        %p236 = pneg %p235
      $region38: #{convfuse_forward.1} parent=5 // pred_check_branch
        %238 = sbr.rel (%p236) target = $region40
      $region39: #{convfuse_forward.1} parent=5 // pred_region
        // Predicated region
        $region41: #{convfuse_forward.1} parent=39 // pred_check
          %p239 = pneg %p34
        $region42: #{convfuse_forward.1} parent=39 // pred_check_branch
          %241 = sbr.rel (%p239) target = $region44
        $region43: #{convfuse_forward.1} parent=39 // pred_region
          %p242 = scmp.lt.s32.totalorder %s14, 1
          %s243 = scalar_select %p242, %s14, 1
          %s244 = smul.addr %s243, 32
          %s245 = smul.addr %s244, 8
          %s246 = scalar_lea.vmem %s0, %s245
        $region44: #{convfuse_forward.1} parent=39 // pred_fallthru
          _
      $region40: #{convfuse_forward.1} parent=5 // pred_fallthru
        _
      %p247 = scmp.le.s32.totalorder 1, %s14
      %p248 = scmp.lt.s32.totalorder %s14, 3
      %p249 = pnand %p247, %p248
      %p250 = pneg %p249
      // Predicated region
      $region45: #{convfuse_forward.1} parent=5 // pred_check
        _
      $region46: #{convfuse_forward.1} parent=5 // pred_check_branch
        %252 = sbr.rel (%p249) target = $region48
      $region47: #{convfuse_forward.1} parent=5 // pred_region
        %s253 = ssub.s32 %s14, 1
        // Predicated region
        $region49: #{convfuse_forward.1} parent=47 // pred_check
          %p254 = pneg %p145
        $region50: #{convfuse_forward.1} parent=47 // pred_check_branch
          %256 = sbr.rel (%p254) target = $region52
        $region51: #{convfuse_forward.1} parent=47 // pred_region
          %257 = dma.done [#allocation3], 4096
        $region52: #{convfuse_forward.1} parent=47 // pred_fallthru
          _
        %p258 = scmp.lt.s32.totalorder %s19, 1
        %s259 = scalar_select %p258, %s19, 1
        %s260 = smul.addr %s259, 32
        %s261 = smul.addr %s260, 8
        %s262 = scalar_lea.vmem %s0, %s261
        %p263 = pneg %p40
        %p264 = pneg %p37
        %p265 = pneg %p61
        %p266 = pneg %p58
        %p267 = pneg %p82
        %p268 = pneg %p79
        %p269 = pneg %p103
        %p270 = pneg %p100
        %p271 = pneg %p124
        %p272 = pneg %p121
        %p273 = pneg %p145
        %p274 = pneg %p142
        %p275 = pneg %p166
        %p276 = pneg %p163
        %p277 = pneg %p192
        %p278 = pneg %p189
        %p279 = scmp.lt.s32.totalorder %s19, 1
        %s280 = scalar_select %p279, %s19, 1
        %s281 = smul.addr %s280, 32
        %s282 = smul.addr %s281, 8
        %s283 = scalar_lea.vmem %s7, %s282
        %p284 = scmp.lt.s32.totalorder %s19, 1
        %s285 = scalar_select %p284, %s19, 1
        %s286 = smul.addr %s285, 32
        %s287 = smul.addr %s286, 8
        %s288 = scalar_lea.vmem %s0, %s287
        %p289 = scmp.lt.s32.totalorder %s19, 1
        %s290 = scalar_select %p289, %s19, 1
        %s291 = smul.addr %s290, 32
        %s292 = smul.addr %s291, 8
        %s293 = scalar_lea.vmem %s7, %s292
        %v294 = vlaneseq
        %v295 = vand.u32 %v294, 127
        %v296 = vadd.s32 %v295, 128
        %vm297 = vcmp.lt.s32.totalorder %v295, 0
        %v298 = vsub.s32 0, %v295
        %v299 = vsel %vm297, %v298, %v295
        %v300 = vshrl.u32 %v299, 4
        %v301 = vand.u32 %v299, 15
        %v302 = vsub.s32 0, %v301
        %v303 = vsel %vm297, %v302, %v301
        %vm304 = vcmp.lt.s32.totalorder %v296, 0
        %v305 = vsub.s32 0, %v296
        %v306 = vsel %vm304, %v305, %v296
        %v307 = vshrl.u32 %v306, 4
        %v308 = vand.u32 %v306, 15
        %v309 = vsub.s32 0, %v308
        %v310 = vsel %vm304, %v309, %v308
        %vm311 = vcmp.ne.s32.totalorder %v303, 0
        %vm312 = vcmp.ne.s32.totalorder %v310, 0
        %vm313 = vcmp.lt.s32.totalorder %v303, 0
        %vm314 = vcmp.lt.s32.totalorder %v310, 0
        %vm315 = vmand %vm313, %vm311
        %vm316 = vmand %vm314, %vm312
        %v317 = vadd.s32 %v303, 16
        %v318 = vadd.s32 %v310, 16
        %v319 = vsel %vm315, %v317, %v303
        %v320 = vsel %vm316, %v318, %v310
        %vm321 = vcmp.eq.s32.totalorder %v319, 0
        %vm322 = vcmp.eq.s32.totalorder %v320, 0
        %vm323 = vcmp.eq.s32.totalorder %v319, 15
        %vm324 = vcmp.eq.s32.totalorder %v320, 15
        %v325 = vld [vmem:[%s288] sm:$0xff]
        %v326 = vld [vmem:[%s288 + $0x8] sm:$0xff]
        %v327 = vld [vmem:[%s288 + $0x10] sm:$0xff]
        %v328 = vld [vmem:[%s288 + $0x18] sm:$0xff]
        %v329 = vld [vmem:[%s288 + $0x20] sm:$0xff]
        %v330 = vld [vmem:[%s288 + $0x28] sm:$0xff]
        %v331 = vld [vmem:[%s288 + $0x30] sm:$0xff]
        %v332 = vld [vmem:[%s288 + $0x38] sm:$0xff]
        %v333 = vld [vmem:[%s288 + $0x40] sm:$0xff]
        %v334 = vld [vmem:[%s288 + $0x48] sm:$0xff]
        %v335 = vld [vmem:[%s288 + $0x50] sm:$0xff]
        %v336 = vld [vmem:[%s288 + $0x58] sm:$0xff]
        %v337 = vld [vmem:[%s288 + $0x60] sm:$0xff]
        %v338 = vld [vmem:[%s288 + $0x68] sm:$0xff]
        %v339 = vld [vmem:[%s288 + $0x70] sm:$0xff]
        %v340 = vld [vmem:[%s288 + $0x78] sm:$0xff]
        %v341 = vld [vmem:[%s288 + $0x80] sm:$0xff]
        %v342 = vld [vmem:[%s288 + $0x88] sm:$0xff]
        %v343 = vld [vmem:[%s288 + $0x90] sm:$0xff]
        %v344 = vld [vmem:[%s288 + $0x98] sm:$0xff]
        %v345 = vld [vmem:[%s288 + $0xa0] sm:$0xff]
        %v346 = vld [vmem:[%s288 + $0xa8] sm:$0xff]
        %v347 = vld [vmem:[%s288 + $0xb0] sm:$0xff]
        %v348 = vld [vmem:[%s288 + $0xb8] sm:$0xff]
        %v349 = vld [vmem:[%s288 + $0xc0] sm:$0xff]
        %v350 = vld [vmem:[%s288 + $0xc8] sm:$0xff]
        %v351 = vld [vmem:[%s288 + $0xd0] sm:$0xff]
        %v352 = vld [vmem:[%s288 + $0xd8] sm:$0xff]
        %v353 = vld [vmem:[%s288 + $0xe0] sm:$0xff]
        %v354 = vld [vmem:[%s288 + $0xe8] sm:$0xff]
        %v355 = vld [vmem:[%s288 + $0xf0] sm:$0xff]
        %v356 = vld [vmem:[%s288 + $0xf8] sm:$0xff]
        %v357 = vadd.f32 %v325, %v326
        %358 = vadd.xlane.f32.xlu0 %v357
        %v359 = vpop.xlane.xlu0 %358
        %v360 = vadd.f32 %v327, %v328
        %361 = vadd.xlane.f32.xlu0 %v360
        %v362 = vpop.xlane.xlu0 %361
        %v363 = vadd.f32 %v329, %v330
        %364 = vadd.xlane.f32.xlu0 %v363
        %v365 = vpop.xlane.xlu0 %364
        %v366 = vadd.f32 %v331, %v332
        %367 = vadd.xlane.f32.xlu0 %v366
        %v368 = vpop.xlane.xlu0 %367
        %v369 = vadd.f32 %v333, %v334
        %370 = vadd.xlane.f32.xlu0 %v369
        %v371 = vpop.xlane.xlu0 %370
        %v372 = vadd.f32 %v335, %v336
        %373 = vadd.xlane.f32.xlu0 %v372
        %v374 = vpop.xlane.xlu0 %373
        %v375 = vadd.f32 %v337, %v338
        %376 = vadd.xlane.f32.xlu0 %v375
        %v377 = vpop.xlane.xlu0 %376
        %v378 = vadd.f32 %v339, %v340
        %379 = vadd.xlane.f32.xlu0 %v378
        %v380 = vpop.xlane.xlu0 %379
        %v381 = vadd.f32 %v341, %v342
        %382 = vadd.xlane.f32.xlu0 %v381
        %v383 = vpop.xlane.xlu0 %382
        %v384 = vadd.f32 %v343, %v344
        %385 = vadd.xlane.f32.xlu0 %v384
        %v386 = vpop.xlane.xlu0 %385
        %v387 = vadd.f32 %v345, %v346
        %388 = vadd.xlane.f32.xlu0 %v387
        %v389 = vpop.xlane.xlu0 %388
        %v390 = vadd.f32 %v347, %v348
        %391 = vadd.xlane.f32.xlu0 %v390
        %v392 = vpop.xlane.xlu0 %391
        %v393 = vadd.f32 %v349, %v350
        %394 = vadd.xlane.f32.xlu0 %v393
        %v395 = vpop.xlane.xlu0 %394
        %v396 = vadd.f32 %v351, %v352
        %397 = vadd.xlane.f32.xlu0 %v396
        %v398 = vpop.xlane.xlu0 %397
        %v399 = vadd.f32 %v353, %v354
        %400 = vadd.xlane.f32.xlu0 %v399
        %v401 = vpop.xlane.xlu0 %400
        %v402 = vadd.f32 %v355, %v356
        %403 = vadd.xlane.f32.xlu0 %v402
        %v404 = vpop.xlane.xlu0 %403
        %v405 = vsel %vm321, 1, 0
        %v406 = vsel %vm322, 1, 0
        %vm407 = vcmp.eq.s32.totalorder %v405, 1
        %vm408 = vcmp.eq.s32.totalorder %v406, 1
        %v409 = vsel %vm407, %v325, 0.0
        %v410 = vsel %vm408, %v326, 0.0
        %v411 = vsel %vm407, %v327, 0.0
        %v412 = vsel %vm408, %v328, 0.0
        %v413 = vsel %vm407, %v329, 0.0
        %v414 = vsel %vm408, %v330, 0.0
        %v415 = vsel %vm407, %v331, 0.0
        %v416 = vsel %vm408, %v332, 0.0
        %v417 = vsel %vm407, %v333, 0.0
        %v418 = vsel %vm408, %v334, 0.0
        %v419 = vsel %vm407, %v335, 0.0
        %v420 = vsel %vm408, %v336, 0.0
        %v421 = vsel %vm407, %v337, 0.0
        %v422 = vsel %vm408, %v338, 0.0
        %v423 = vsel %vm407, %v339, 0.0
        %v424 = vsel %vm408, %v340, 0.0
        %v425 = vsel %vm407, %v341, 0.0
        %v426 = vsel %vm408, %v342, 0.0
        %v427 = vsel %vm407, %v343, 0.0
        %v428 = vsel %vm408, %v344, 0.0
        %v429 = vsel %vm407, %v345, 0.0
        %v430 = vsel %vm408, %v346, 0.0
        %v431 = vsel %vm407, %v347, 0.0
        %v432 = vsel %vm408, %v348, 0.0
        %v433 = vsel %vm407, %v349, 0.0
        %v434 = vsel %vm408, %v350, 0.0
        %v435 = vsel %vm407, %v351, 0.0
        %v436 = vsel %vm408, %v352, 0.0
        %v437 = vsel %vm407, %v353, 0.0
        %v438 = vsel %vm408, %v354, 0.0
        %v439 = vsel %vm407, %v355, 0.0
        %v440 = vsel %vm408, %v356, 0.0
        %v441 = vadd.f32 %v409, %v410
        %442 = vadd.xlane.f32.xlu0 %v441
        %v443 = vpop.xlane.xlu0 %442
        %v444 = vadd.f32 %v411, %v412
        %445 = vadd.xlane.f32.xlu0 %v444
        %v446 = vpop.xlane.xlu0 %445
        %v447 = vadd.f32 %v413, %v414
        %448 = vadd.xlane.f32.xlu0 %v447
        %v449 = vpop.xlane.xlu0 %448
        %v450 = vadd.f32 %v415, %v416
        %451 = vadd.xlane.f32.xlu0 %v450
        %v452 = vpop.xlane.xlu0 %451
        %v453 = vadd.f32 %v417, %v418
        %454 = vadd.xlane.f32.xlu0 %v453
        %v455 = vpop.xlane.xlu0 %454
        %v456 = vadd.f32 %v419, %v420
        %457 = vadd.xlane.f32.xlu0 %v456
        %v458 = vpop.xlane.xlu0 %457
        %v459 = vadd.f32 %v421, %v422
        %460 = vadd.xlane.f32.xlu0 %v459
        %v461 = vpop.xlane.xlu0 %460
        %v462 = vadd.f32 %v423, %v424
        %463 = vadd.xlane.f32.xlu0 %v462
        %v464 = vpop.xlane.xlu0 %463
        %v465 = vadd.f32 %v425, %v426
        %466 = vadd.xlane.f32.xlu0 %v465
        %v467 = vpop.xlane.xlu0 %466
        %v468 = vadd.f32 %v427, %v428
        %469 = vadd.xlane.f32.xlu0 %v468
        %v470 = vpop.xlane.xlu0 %469
        %v471 = vadd.f32 %v429, %v430
        %472 = vadd.xlane.f32.xlu0 %v471
        %v473 = vpop.xlane.xlu0 %472
        %v474 = vadd.f32 %v431, %v432
        %475 = vadd.xlane.f32.xlu0 %v474
        %v476 = vpop.xlane.xlu0 %475
        %v477 = vadd.f32 %v433, %v434
        %478 = vadd.xlane.f32.xlu0 %v477
        %v479 = vpop.xlane.xlu0 %478
        %v480 = vadd.f32 %v435, %v436
        %481 = vadd.xlane.f32.xlu0 %v480
        %v482 = vpop.xlane.xlu0 %481
        %v483 = vadd.f32 %v437, %v438
        %484 = vadd.xlane.f32.xlu0 %v483
        %v485 = vpop.xlane.xlu0 %484
        %v486 = vadd.f32 %v439, %v440
        %487 = vadd.xlane.f32.xlu0 %v486
        %v488 = vpop.xlane.xlu0 %487
        %v489 = vsel %vm323, 1, 0
        %v490 = vsel %vm324, 1, 0
        %vm491 = vcmp.eq.s32.totalorder %v489, 1
        %vm492 = vcmp.eq.s32.totalorder %v490, 1
        %v493 = vsel %vm491, %v325, 0.0
        %v494 = vsel %vm492, %v326, 0.0
        %v495 = vsel %vm491, %v327, 0.0
        %v496 = vsel %vm492, %v328, 0.0
        %v497 = vsel %vm491, %v329, 0.0
        %v498 = vsel %vm492, %v330, 0.0
        %v499 = vsel %vm491, %v331, 0.0
        %v500 = vsel %vm492, %v332, 0.0
        %v501 = vsel %vm491, %v333, 0.0
        %v502 = vsel %vm492, %v334, 0.0
        %v503 = vsel %vm491, %v335, 0.0
        %v504 = vsel %vm492, %v336, 0.0
        %v505 = vsel %vm491, %v337, 0.0
        %v506 = vsel %vm492, %v338, 0.0
        %v507 = vsel %vm491, %v339, 0.0
        %v508 = vsel %vm492, %v340, 0.0
        %v509 = vsel %vm491, %v341, 0.0
        %v510 = vsel %vm492, %v342, 0.0
        %v511 = vsel %vm491, %v343, 0.0
        %v512 = vsel %vm492, %v344, 0.0
        %v513 = vsel %vm491, %v345, 0.0
        %v514 = vsel %vm492, %v346, 0.0
        %v515 = vsel %vm491, %v347, 0.0
        %v516 = vsel %vm492, %v348, 0.0
        %v517 = vsel %vm491, %v349, 0.0
        %v518 = vsel %vm492, %v350, 0.0
        %v519 = vsel %vm491, %v351, 0.0
        %v520 = vsel %vm492, %v352, 0.0
        %v521 = vsel %vm491, %v353, 0.0
        %v522 = vsel %vm492, %v354, 0.0
        %v523 = vsel %vm491, %v355, 0.0
        %v524 = vsel %vm492, %v356, 0.0
        %v525 = vadd.f32 %v493, %v494
        %526 = vadd.xlane.f32.xlu0 %v525
        %v527 = vpop.xlane.xlu0 %526
        %v528 = vadd.f32 %v495, %v496
        %529 = vadd.xlane.f32.xlu0 %v528
        %v530 = vpop.xlane.xlu0 %529
        %v531 = vadd.f32 %v497, %v498
        %532 = vadd.xlane.f32.xlu0 %v531
        %v533 = vpop.xlane.xlu0 %532
        %v534 = vadd.f32 %v499, %v500
        %535 = vadd.xlane.f32.xlu0 %v534
        %v536 = vpop.xlane.xlu0 %535
        %v537 = vadd.f32 %v501, %v502
        %538 = vadd.xlane.f32.xlu0 %v537
        %v539 = vpop.xlane.xlu0 %538
        %v540 = vadd.f32 %v503, %v504
        %541 = vadd.xlane.f32.xlu0 %v540
        %v542 = vpop.xlane.xlu0 %541
        %v543 = vadd.f32 %v505, %v506
        %544 = vadd.xlane.f32.xlu0 %v543
        %v545 = vpop.xlane.xlu0 %544
        %v546 = vadd.f32 %v507, %v508
        %547 = vadd.xlane.f32.xlu0 %v546
        %v548 = vpop.xlane.xlu0 %547
        %v549 = vadd.f32 %v509, %v510
        %550 = vadd.xlane.f32.xlu0 %v549
        %v551 = vpop.xlane.xlu0 %550
        %v552 = vadd.f32 %v511, %v512
        %553 = vadd.xlane.f32.xlu0 %v552
        %v554 = vpop.xlane.xlu0 %553
        %v555 = vadd.f32 %v513, %v514
        %556 = vadd.xlane.f32.xlu0 %v555
        %v557 = vpop.xlane.xlu0 %556
        %v558 = vadd.f32 %v515, %v516
        %559 = vadd.xlane.f32.xlu0 %v558
        %v560 = vpop.xlane.xlu0 %559
        %v561 = vadd.f32 %v517, %v518
        %562 = vadd.xlane.f32.xlu0 %v561
        %v563 = vpop.xlane.xlu0 %562
        %v564 = vadd.f32 %v519, %v520
        %565 = vadd.xlane.f32.xlu0 %v564
        %v566 = vpop.xlane.xlu0 %565
        %v567 = vadd.f32 %v521, %v522
        %568 = vadd.xlane.f32.xlu0 %v567
        %v569 = vpop.xlane.xlu0 %568
        %v570 = vadd.f32 %v523, %v524
        %571 = vadd.xlane.f32.xlu0 %v570
        %v572 = vpop.xlane.xlu0 %571
        %vm573 = vcmask 130048
        %v574 = vsel %vm573, %v325, 0.0
        %575 = vadd.xlane.f32.xlu0 %v574
        %v576 = vpop.xlane.xlu0 %575
        %v577 = vsel %vm573, %v327, 0.0
        %578 = vadd.xlane.f32.xlu0 %v577
        %v579 = vpop.xlane.xlu0 %578
        %v580 = vsel %vm573, %v329, 0.0
        %581 = vadd.xlane.f32.xlu0 %v580
        %v582 = vpop.xlane.xlu0 %581
        %v583 = vsel %vm573, %v331, 0.0
        %584 = vadd.xlane.f32.xlu0 %v583
        %v585 = vpop.xlane.xlu0 %584
        %v586 = vsel %vm573, %v333, 0.0
        %587 = vadd.xlane.f32.xlu0 %v586
        %v588 = vpop.xlane.xlu0 %587
        %v589 = vsel %vm573, %v335, 0.0
        %590 = vadd.xlane.f32.xlu0 %v589
        %v591 = vpop.xlane.xlu0 %590
        %v592 = vsel %vm573, %v337, 0.0
        %593 = vadd.xlane.f32.xlu0 %v592
        %v594 = vpop.xlane.xlu0 %593
        %v595 = vsel %vm573, %v339, 0.0
        %596 = vadd.xlane.f32.xlu0 %v595
        %v597 = vpop.xlane.xlu0 %596
        %v598 = vsel %vm573, %v341, 0.0
        %599 = vadd.xlane.f32.xlu0 %v598
        %v600 = vpop.xlane.xlu0 %599
        %v601 = vsel %vm573, %v343, 0.0
        %602 = vadd.xlane.f32.xlu0 %v601
        %v603 = vpop.xlane.xlu0 %602
        %v604 = vsel %vm573, %v345, 0.0
        %605 = vadd.xlane.f32.xlu0 %v604
        %v606 = vpop.xlane.xlu0 %605
        %v607 = vsel %vm573, %v347, 0.0
        %608 = vadd.xlane.f32.xlu0 %v607
        %v609 = vpop.xlane.xlu0 %608
        %v610 = vsel %vm573, %v349, 0.0
        %611 = vadd.xlane.f32.xlu0 %v610
        %v612 = vpop.xlane.xlu0 %611
        %v613 = vsel %vm573, %v351, 0.0
        %614 = vadd.xlane.f32.xlu0 %v613
        %v615 = vpop.xlane.xlu0 %614
        %v616 = vsel %vm573, %v353, 0.0
        %617 = vadd.xlane.f32.xlu0 %v616
        %v618 = vpop.xlane.xlu0 %617
        %v619 = vsel %vm573, %v355, 0.0
        %620 = vadd.xlane.f32.xlu0 %v619
        %v621 = vpop.xlane.xlu0 %620
        %638 = vrot.lane.b32.xlu0 %v326, 16
        %v639 = vpop.permute.xlu0 %638
        %640 = vrot.lane.b32.xlu0 %v328, 16
        %v641 = vpop.permute.xlu0 %640
        %642 = vrot.lane.b32.xlu0 %v330, 16
        %v643 = vpop.permute.xlu0 %642
        %644 = vrot.lane.b32.xlu0 %v332, 16
        %v645 = vpop.permute.xlu0 %644
        %646 = vrot.lane.b32.xlu0 %v334, 16
        %v647 = vpop.permute.xlu0 %646
        %648 = vrot.lane.b32.xlu0 %v336, 16
        %v649 = vpop.permute.xlu0 %648
        %650 = vrot.lane.b32.xlu0 %v338, 16
        %v651 = vpop.permute.xlu0 %650
        %652 = vrot.lane.b32.xlu0 %v340, 16
        %v653 = vpop.permute.xlu0 %652
        %654 = vrot.lane.b32.xlu0 %v342, 16
        %v655 = vpop.permute.xlu0 %654
        %656 = vrot.lane.b32.xlu0 %v344, 16
        %v657 = vpop.permute.xlu0 %656
        %658 = vrot.lane.b32.xlu0 %v346, 16
        %v659 = vpop.permute.xlu0 %658
        %660 = vrot.lane.b32.xlu0 %v348, 16
        %v661 = vpop.permute.xlu0 %660
        %662 = vrot.lane.b32.xlu0 %v350, 16
        %v663 = vpop.permute.xlu0 %662
        %664 = vrot.lane.b32.xlu0 %v352, 16
        %v665 = vpop.permute.xlu0 %664
        %666 = vrot.lane.b32.xlu0 %v354, 16
        %v667 = vpop.permute.xlu0 %666
        %668 = vrot.lane.b32.xlu0 %v356, 16
        %v669 = vpop.permute.xlu0 %668
        %v686 = vsel %vm573, %v639, 0.0
        %687 = vadd.xlane.f32.xlu0 %v686
        %v688 = vpop.xlane.xlu0 %687
        %v689 = vsel %vm573, %v641, 0.0
        %690 = vadd.xlane.f32.xlu0 %v689
        %v691 = vpop.xlane.xlu0 %690
        %v692 = vsel %vm573, %v643, 0.0
        %693 = vadd.xlane.f32.xlu0 %v692
        %v694 = vpop.xlane.xlu0 %693
        %v695 = vsel %vm573, %v645, 0.0
        %696 = vadd.xlane.f32.xlu0 %v695
        %v697 = vpop.xlane.xlu0 %696
        %v698 = vsel %vm573, %v647, 0.0
        %699 = vadd.xlane.f32.xlu0 %v698
        %v700 = vpop.xlane.xlu0 %699
        %v701 = vsel %vm573, %v649, 0.0
        %702 = vadd.xlane.f32.xlu0 %v701
        %v703 = vpop.xlane.xlu0 %702
        %v704 = vsel %vm573, %v651, 0.0
        %705 = vadd.xlane.f32.xlu0 %v704
        %v706 = vpop.xlane.xlu0 %705
        %v707 = vsel %vm573, %v653, 0.0
        %708 = vadd.xlane.f32.xlu0 %v707
        %v709 = vpop.xlane.xlu0 %708
        %v710 = vsel %vm573, %v655, 0.0
        %711 = vadd.xlane.f32.xlu0 %v710
        %v712 = vpop.xlane.xlu0 %711
        %v713 = vsel %vm573, %v657, 0.0
        %714 = vadd.xlane.f32.xlu0 %v713
        %v715 = vpop.xlane.xlu0 %714
        %v716 = vsel %vm573, %v659, 0.0
        %717 = vadd.xlane.f32.xlu0 %v716
        %v718 = vpop.xlane.xlu0 %717
        %v719 = vsel %vm573, %v661, 0.0
        %720 = vadd.xlane.f32.xlu0 %v719
        %v721 = vpop.xlane.xlu0 %720
        %v722 = vsel %vm573, %v663, 0.0
        %723 = vadd.xlane.f32.xlu0 %v722
        %v724 = vpop.xlane.xlu0 %723
        %v725 = vsel %vm573, %v665, 0.0
        %726 = vadd.xlane.f32.xlu0 %v725
        %v727 = vpop.xlane.xlu0 %726
        %v728 = vsel %vm573, %v667, 0.0
        %729 = vadd.xlane.f32.xlu0 %v728
        %v730 = vpop.xlane.xlu0 %729
        %v731 = vsel %vm573, %v669, 0.0
        %732 = vadd.xlane.f32.xlu0 %v731
        %v733 = vpop.xlane.xlu0 %732
        %v734 = vsub.f32 %v359, %v688
        %v735 = vsub.f32 %v362, %v691
        %v736 = vsub.f32 %v365, %v694
        %v737 = vsub.f32 %v368, %v697
        %v738 = vsub.f32 %v371, %v700
        %v739 = vsub.f32 %v374, %v703
        %v740 = vsub.f32 %v377, %v706
        %v741 = vsub.f32 %v380, %v709
        %v742 = vsub.f32 %v383, %v712
        %v743 = vsub.f32 %v386, %v715
        %v744 = vsub.f32 %v389, %v718
        %v745 = vsub.f32 %v392, %v721
        %v746 = vsub.f32 %v395, %v724
        %v747 = vsub.f32 %v398, %v727
        %v748 = vsub.f32 %v401, %v730
        %v749 = vsub.f32 %v404, %v733
        %v750 = vsub.f32 %v734, %v527
        %v751 = vsub.f32 %v735, %v530
        %v752 = vsub.f32 %v736, %v533
        %v753 = vsub.f32 %v737, %v536
        %v754 = vsub.f32 %v738, %v539
        %v755 = vsub.f32 %v739, %v542
        %v756 = vsub.f32 %v740, %v545
        %v757 = vsub.f32 %v741, %v548
        %v758 = vsub.f32 %v742, %v551
        %v759 = vsub.f32 %v743, %v554
        %v760 = vsub.f32 %v744, %v557
        %v761 = vsub.f32 %v745, %v560
        %v762 = vsub.f32 %v746, %v563
        %v763 = vsub.f32 %v747, %v566
        %v764 = vsub.f32 %v748, %v569
        %v765 = vsub.f32 %v749, %v572
        %v766 = vadd.f32 %v750, %v326
        %v767 = vadd.f32 %v751, %v328
        %v768 = vadd.f32 %v752, %v330
        %v769 = vadd.f32 %v753, %v332
        %v770 = vadd.f32 %v754, %v334
        %v771 = vadd.f32 %v755, %v336
        %v772 = vadd.f32 %v756, %v338
        %v773 = vadd.f32 %v757, %v340
        %v774 = vadd.f32 %v758, %v342
        %v775 = vadd.f32 %v759, %v344
        %v776 = vadd.f32 %v760, %v346
        %v777 = vadd.f32 %v761, %v348
        %v778 = vadd.f32 %v762, %v350
        %v779 = vadd.f32 %v763, %v352
        %v780 = vadd.f32 %v764, %v354
        %v781 = vadd.f32 %v765, %v356
        %v782 = vsub.f32 %v734, %v443
        %v783 = vsub.f32 %v735, %v446
        %v784 = vsub.f32 %v736, %v449
        %v785 = vsub.f32 %v737, %v452
        %v786 = vsub.f32 %v738, %v455
        %v787 = vsub.f32 %v739, %v458
        %v788 = vsub.f32 %v740, %v461
        %v789 = vsub.f32 %v741, %v464
        %v790 = vsub.f32 %v742, %v467
        %v791 = vsub.f32 %v743, %v470
        %v792 = vsub.f32 %v744, %v473
        %v793 = vsub.f32 %v745, %v476
        %v794 = vsub.f32 %v746, %v479
        %v795 = vsub.f32 %v747, %v482
        %v796 = vsub.f32 %v748, %v485
        %v797 = vsub.f32 %v749, %v488
        %v798 = vadd.f32 %v782, %v326
        %v799 = vadd.f32 %v783, %v328
        %v800 = vadd.f32 %v784, %v330
        %v801 = vadd.f32 %v785, %v332
        %v802 = vadd.f32 %v786, %v334
        %v803 = vadd.f32 %v787, %v336
        %v804 = vadd.f32 %v788, %v338
        %v805 = vadd.f32 %v789, %v340
        %v806 = vadd.f32 %v790, %v342
        %v807 = vadd.f32 %v791, %v344
        %v808 = vadd.f32 %v792, %v346
        %v809 = vadd.f32 %v793, %v348
        %v810 = vadd.f32 %v794, %v350
        %v811 = vadd.f32 %v795, %v352
        %v812 = vadd.f32 %v796, %v354
        %v813 = vadd.f32 %v797, %v356
        %v814 = vsub.f32 %v359, %v527
        %v815 = vsub.f32 %v362, %v530
        %v816 = vsub.f32 %v365, %v533
        %v817 = vsub.f32 %v368, %v536
        %v818 = vsub.f32 %v371, %v539
        %v819 = vsub.f32 %v374, %v542
        %v820 = vsub.f32 %v377, %v545
        %v821 = vsub.f32 %v380, %v548
        %v822 = vsub.f32 %v383, %v551
        %v823 = vsub.f32 %v386, %v554
        %v824 = vsub.f32 %v389, %v557
        %v825 = vsub.f32 %v392, %v560
        %v826 = vsub.f32 %v395, %v563
        %v827 = vsub.f32 %v398, %v566
        %v828 = vsub.f32 %v401, %v569
        %v829 = vsub.f32 %v404, %v572
        %v830 = vsub.f32 %v359, %v443
        %v831 = vsub.f32 %v362, %v446
        %v832 = vsub.f32 %v365, %v449
        %v833 = vsub.f32 %v368, %v452
        %v834 = vsub.f32 %v371, %v455
        %v835 = vsub.f32 %v374, %v458
        %v836 = vsub.f32 %v377, %v461
        %v837 = vsub.f32 %v380, %v464
        %v838 = vsub.f32 %v383, %v467
        %v839 = vsub.f32 %v386, %v470
        %v840 = vsub.f32 %v389, %v473
        %v841 = vsub.f32 %v392, %v476
        %v842 = vsub.f32 %v395, %v479
        %v843 = vsub.f32 %v398, %v482
        %v844 = vsub.f32 %v401, %v485
        %v845 = vsub.f32 %v404, %v488
        %v846 = vsub.f32 %v359, %v576
        %v847 = vsub.f32 %v362, %v579
        %v848 = vsub.f32 %v365, %v582
        %v849 = vsub.f32 %v368, %v585
        %v850 = vsub.f32 %v371, %v588
        %v851 = vsub.f32 %v374, %v591
        %v852 = vsub.f32 %v377, %v594
        %v853 = vsub.f32 %v380, %v597
        %v854 = vsub.f32 %v383, %v600
        %v855 = vsub.f32 %v386, %v603
        %v856 = vsub.f32 %v389, %v606
        %v857 = vsub.f32 %v392, %v609
        %v858 = vsub.f32 %v395, %v612
        %v859 = vsub.f32 %v398, %v615
        %v860 = vsub.f32 %v401, %v618
        %v861 = vsub.f32 %v404, %v621
        %v862 = vsub.f32 %v846, %v527
        %v863 = vsub.f32 %v847, %v530
        %v864 = vsub.f32 %v848, %v533
        %v865 = vsub.f32 %v849, %v536
        %v866 = vsub.f32 %v850, %v539
        %v867 = vsub.f32 %v851, %v542
        %v868 = vsub.f32 %v852, %v545
        %v869 = vsub.f32 %v853, %v548
        %v870 = vsub.f32 %v854, %v551
        %v871 = vsub.f32 %v855, %v554
        %v872 = vsub.f32 %v856, %v557
        %v873 = vsub.f32 %v857, %v560
        %v874 = vsub.f32 %v858, %v563
        %v875 = vsub.f32 %v859, %v566
        %v876 = vsub.f32 %v860, %v569
        %v877 = vsub.f32 %v861, %v572
        %v878 = vadd.f32 %v862, %v325
        %v879 = vadd.f32 %v863, %v327
        %v880 = vadd.f32 %v864, %v329
        %v881 = vadd.f32 %v865, %v331
        %v882 = vadd.f32 %v866, %v333
        %v883 = vadd.f32 %v867, %v335
        %v884 = vadd.f32 %v868, %v337
        %v885 = vadd.f32 %v869, %v339
        %v886 = vadd.f32 %v870, %v341
        %v887 = vadd.f32 %v871, %v343
        %v888 = vadd.f32 %v872, %v345
        %v889 = vadd.f32 %v873, %v347
        %v890 = vadd.f32 %v874, %v349
        %v891 = vadd.f32 %v875, %v351
        %v892 = vadd.f32 %v876, %v353
        %v893 = vadd.f32 %v877, %v355
        %v894 = vsub.f32 %v846, %v443
        %v895 = vsub.f32 %v847, %v446
        %v896 = vsub.f32 %v848, %v449
        %v897 = vsub.f32 %v849, %v452
        %v898 = vsub.f32 %v850, %v455
        %v899 = vsub.f32 %v851, %v458
        %v900 = vsub.f32 %v852, %v461
        %v901 = vsub.f32 %v853, %v464
        %v902 = vsub.f32 %v854, %v467
        %v903 = vsub.f32 %v855, %v470
        %v904 = vsub.f32 %v856, %v473
        %v905 = vsub.f32 %v857, %v476
        %v906 = vsub.f32 %v858, %v479
        %v907 = vsub.f32 %v859, %v482
        %v908 = vsub.f32 %v860, %v485
        %v909 = vsub.f32 %v861, %v488
        %v910 = vadd.f32 %v894, %v325
        %v911 = vadd.f32 %v895, %v327
        %v912 = vadd.f32 %v896, %v329
        %v913 = vadd.f32 %v897, %v331
        %v914 = vadd.f32 %v898, %v333
        %v915 = vadd.f32 %v899, %v335
        %v916 = vadd.f32 %v900, %v337
        %v917 = vadd.f32 %v901, %v339
        %v918 = vadd.f32 %v902, %v341
        %v919 = vadd.f32 %v903, %v343
        %v920 = vadd.f32 %v904, %v345
        %v921 = vadd.f32 %v905, %v347
        %v922 = vadd.f32 %v906, %v349
        %v923 = vadd.f32 %v907, %v351
        %v924 = vadd.f32 %v908, %v353
        %v925 = vadd.f32 %v909, %v355
        %942 = vrot.lane.b32.xlu0 %v798, 15
        %v943 = vpop.permute.xlu0 %942
        %944 = vrot.lane.b32.xlu0 %v799, 15
        %v945 = vpop.permute.xlu0 %944
        %946 = vrot.lane.b32.xlu0 %v800, 15
        %v947 = vpop.permute.xlu0 %946
        %948 = vrot.lane.b32.xlu0 %v801, 15
        %v949 = vpop.permute.xlu0 %948
        %950 = vrot.lane.b32.xlu0 %v802, 15
        %v951 = vpop.permute.xlu0 %950
        %952 = vrot.lane.b32.xlu0 %v803, 15
        %v953 = vpop.permute.xlu0 %952
        %954 = vrot.lane.b32.xlu0 %v804, 15
        %v955 = vpop.permute.xlu0 %954
        %956 = vrot.lane.b32.xlu0 %v805, 15
        %v957 = vpop.permute.xlu0 %956
        %958 = vrot.lane.b32.xlu0 %v806, 15
        %v959 = vpop.permute.xlu0 %958
        %960 = vrot.lane.b32.xlu0 %v807, 15
        %v961 = vpop.permute.xlu0 %960
        %962 = vrot.lane.b32.xlu0 %v808, 15
        %v963 = vpop.permute.xlu0 %962
        %964 = vrot.lane.b32.xlu0 %v809, 15
        %v965 = vpop.permute.xlu0 %964
        %966 = vrot.lane.b32.xlu0 %v810, 15
        %v967 = vpop.permute.xlu0 %966
        %968 = vrot.lane.b32.xlu0 %v811, 15
        %v969 = vpop.permute.xlu0 %968
        %970 = vrot.lane.b32.xlu0 %v812, 15
        %v971 = vpop.permute.xlu0 %970
        %972 = vrot.lane.b32.xlu0 %v813, 15
        %v973 = vpop.permute.xlu0 %972
        %990 = vrot.lane.b32.xlu0 %v878, 112
        %v991 = vpop.permute.xlu0 %990
        %992 = vrot.lane.b32.xlu0 %v879, 112
        %v993 = vpop.permute.xlu0 %992
        %994 = vrot.lane.b32.xlu0 %v880, 112
        %v995 = vpop.permute.xlu0 %994
        %996 = vrot.lane.b32.xlu0 %v881, 112
        %v997 = vpop.permute.xlu0 %996
        %998 = vrot.lane.b32.xlu0 %v882, 112
        %v999 = vpop.permute.xlu0 %998
        %1000 = vrot.lane.b32.xlu0 %v883, 112
        %v1001 = vpop.permute.xlu0 %1000
        %1002 = vrot.lane.b32.xlu0 %v884, 112
        %v1003 = vpop.permute.xlu0 %1002
        %1004 = vrot.lane.b32.xlu0 %v885, 112
        %v1005 = vpop.permute.xlu0 %1004
        %1006 = vrot.lane.b32.xlu0 %v886, 112
        %v1007 = vpop.permute.xlu0 %1006
        %1008 = vrot.lane.b32.xlu0 %v887, 112
        %v1009 = vpop.permute.xlu0 %1008
        %1010 = vrot.lane.b32.xlu0 %v888, 112
        %v1011 = vpop.permute.xlu0 %1010
        %1012 = vrot.lane.b32.xlu0 %v889, 112
        %v1013 = vpop.permute.xlu0 %1012
        %1014 = vrot.lane.b32.xlu0 %v890, 112
        %v1015 = vpop.permute.xlu0 %1014
        %1016 = vrot.lane.b32.xlu0 %v891, 112
        %v1017 = vpop.permute.xlu0 %1016
        %1018 = vrot.lane.b32.xlu0 %v892, 112
        %v1019 = vpop.permute.xlu0 %1018
        %1020 = vrot.lane.b32.xlu0 %v893, 112
        %v1021 = vpop.permute.xlu0 %1020
        %1038 = vrot.lane.b32.xlu0 %v910, 127
        %v1039 = vpop.permute.xlu0 %1038
        %1040 = vrot.lane.b32.xlu0 %v911, 127
        %v1041 = vpop.permute.xlu0 %1040
        %1042 = vrot.lane.b32.xlu0 %v912, 127
        %v1043 = vpop.permute.xlu0 %1042
        %1044 = vrot.lane.b32.xlu0 %v913, 127
        %v1045 = vpop.permute.xlu0 %1044
        %1046 = vrot.lane.b32.xlu0 %v914, 127
        %v1047 = vpop.permute.xlu0 %1046
        %1048 = vrot.lane.b32.xlu0 %v915, 127
        %v1049 = vpop.permute.xlu0 %1048
        %1050 = vrot.lane.b32.xlu0 %v916, 127
        %v1051 = vpop.permute.xlu0 %1050
        %1052 = vrot.lane.b32.xlu0 %v917, 127
        %v1053 = vpop.permute.xlu0 %1052
        %1054 = vrot.lane.b32.xlu0 %v918, 127
        %v1055 = vpop.permute.xlu0 %1054
        %1056 = vrot.lane.b32.xlu0 %v919, 127
        %v1057 = vpop.permute.xlu0 %1056
        %1058 = vrot.lane.b32.xlu0 %v920, 127
        %v1059 = vpop.permute.xlu0 %1058
        %1060 = vrot.lane.b32.xlu0 %v921, 127
        %v1061 = vpop.permute.xlu0 %1060
        %1062 = vrot.lane.b32.xlu0 %v922, 127
        %v1063 = vpop.permute.xlu0 %1062
        %1064 = vrot.lane.b32.xlu0 %v923, 127
        %v1065 = vpop.permute.xlu0 %1064
        %1066 = vrot.lane.b32.xlu0 %v924, 127
        %v1067 = vpop.permute.xlu0 %1066
        %1068 = vrot.lane.b32.xlu0 %v925, 127
        %v1069 = vpop.permute.xlu0 %1068
        %1071 = vset.pattern.permute.xlu0 127
        %1072 = vperm.xlu0 %1071, %v766
        %v1073 = vpop.permute.xlu0 %1072
        %1076 = vset.pattern.permute.xlu0 127
        %1077 = vperm.xlu0 %1076, %v767
        %v1078 = vpop.permute.xlu0 %1077
        %1081 = vset.pattern.permute.xlu0 127
        %1082 = vperm.xlu0 %1081, %v768
        %v1083 = vpop.permute.xlu0 %1082
        %1086 = vset.pattern.permute.xlu0 127
        %1087 = vperm.xlu0 %1086, %v769
        %v1088 = vpop.permute.xlu0 %1087
        %1091 = vset.pattern.permute.xlu0 127
        %1092 = vperm.xlu0 %1091, %v770
        %v1093 = vpop.permute.xlu0 %1092
        %1096 = vset.pattern.permute.xlu0 127
        %1097 = vperm.xlu0 %1096, %v771
        %v1098 = vpop.permute.xlu0 %1097
        %1101 = vset.pattern.permute.xlu0 127
        %1102 = vperm.xlu0 %1101, %v772
        %v1103 = vpop.permute.xlu0 %1102
        %1106 = vset.pattern.permute.xlu0 127
        %1107 = vperm.xlu0 %1106, %v773
        %v1108 = vpop.permute.xlu0 %1107
        %1111 = vset.pattern.permute.xlu0 127
        %1112 = vperm.xlu0 %1111, %v774
        %v1113 = vpop.permute.xlu0 %1112
        %1116 = vset.pattern.permute.xlu0 127
        %1117 = vperm.xlu0 %1116, %v775
        %v1118 = vpop.permute.xlu0 %1117
        %1121 = vset.pattern.permute.xlu0 127
        %1122 = vperm.xlu0 %1121, %v776
        %v1123 = vpop.permute.xlu0 %1122
        %1126 = vset.pattern.permute.xlu0 127
        %1127 = vperm.xlu0 %1126, %v777
        %v1128 = vpop.permute.xlu0 %1127
        %1131 = vset.pattern.permute.xlu0 127
        %1132 = vperm.xlu0 %1131, %v778
        %v1133 = vpop.permute.xlu0 %1132
        %1136 = vset.pattern.permute.xlu0 127
        %1137 = vperm.xlu0 %1136, %v779
        %v1138 = vpop.permute.xlu0 %1137
        %1141 = vset.pattern.permute.xlu0 127
        %1142 = vperm.xlu0 %1141, %v780
        %v1143 = vpop.permute.xlu0 %1142
        %1146 = vset.pattern.permute.xlu0 127
        %1147 = vperm.xlu0 %1146, %v781
        %v1148 = vpop.permute.xlu0 %1147
        %1151 = vset.pattern.permute.xlu0 127
        %1152 = vperm.xlu0 %1151, %v734
        %v1153 = vpop.permute.xlu0 %1152
        %1156 = vset.pattern.permute.xlu0 127
        %1157 = vperm.xlu0 %1156, %v735
        %v1158 = vpop.permute.xlu0 %1157
        %1161 = vset.pattern.permute.xlu0 127
        %1162 = vperm.xlu0 %1161, %v736
        %v1163 = vpop.permute.xlu0 %1162
        %1166 = vset.pattern.permute.xlu0 127
        %1167 = vperm.xlu0 %1166, %v737
        %v1168 = vpop.permute.xlu0 %1167
        %1171 = vset.pattern.permute.xlu0 127
        %1172 = vperm.xlu0 %1171, %v738
        %v1173 = vpop.permute.xlu0 %1172
        %1176 = vset.pattern.permute.xlu0 127
        %1177 = vperm.xlu0 %1176, %v739
        %v1178 = vpop.permute.xlu0 %1177
        %1181 = vset.pattern.permute.xlu0 127
        %1182 = vperm.xlu0 %1181, %v740
        %v1183 = vpop.permute.xlu0 %1182
        %1186 = vset.pattern.permute.xlu0 127
        %1187 = vperm.xlu0 %1186, %v741
        %v1188 = vpop.permute.xlu0 %1187
        %1191 = vset.pattern.permute.xlu0 127
        %1192 = vperm.xlu0 %1191, %v742
        %v1193 = vpop.permute.xlu0 %1192
        %1196 = vset.pattern.permute.xlu0 127
        %1197 = vperm.xlu0 %1196, %v743
        %v1198 = vpop.permute.xlu0 %1197
        %1201 = vset.pattern.permute.xlu0 127
        %1202 = vperm.xlu0 %1201, %v744
        %v1203 = vpop.permute.xlu0 %1202
        %1206 = vset.pattern.permute.xlu0 127
        %1207 = vperm.xlu0 %1206, %v745
        %v1208 = vpop.permute.xlu0 %1207
        %1211 = vset.pattern.permute.xlu0 127
        %1212 = vperm.xlu0 %1211, %v746
        %v1213 = vpop.permute.xlu0 %1212
        %1216 = vset.pattern.permute.xlu0 127
        %1217 = vperm.xlu0 %1216, %v747
        %v1218 = vpop.permute.xlu0 %1217
        %1221 = vset.pattern.permute.xlu0 127
        %1222 = vperm.xlu0 %1221, %v748
        %v1223 = vpop.permute.xlu0 %1222
        %1226 = vset.pattern.permute.xlu0 127
        %1227 = vperm.xlu0 %1226, %v749
        %v1228 = vpop.permute.xlu0 %1227
        %1230 = vset.pattern.permute.xlu0 127
        %1231 = vperm.xlu0 %1230, %v943
        %v1232 = vpop.permute.xlu0 %1231
        %1234 = vset.pattern.permute.xlu0 127
        %1235 = vperm.xlu0 %1234, %v945
        %v1236 = vpop.permute.xlu0 %1235
        %1238 = vset.pattern.permute.xlu0 127
        %1239 = vperm.xlu0 %1238, %v947
        %v1240 = vpop.permute.xlu0 %1239
        %1242 = vset.pattern.permute.xlu0 127
        %1243 = vperm.xlu0 %1242, %v949
        %v1244 = vpop.permute.xlu0 %1243
        %1246 = vset.pattern.permute.xlu0 127
        %1247 = vperm.xlu0 %1246, %v951
        %v1248 = vpop.permute.xlu0 %1247
        %1250 = vset.pattern.permute.xlu0 127
        %1251 = vperm.xlu0 %1250, %v953
        %v1252 = vpop.permute.xlu0 %1251
        %1254 = vset.pattern.permute.xlu0 127
        %1255 = vperm.xlu0 %1254, %v955
        %v1256 = vpop.permute.xlu0 %1255
        %1258 = vset.pattern.permute.xlu0 127
        %1259 = vperm.xlu0 %1258, %v957
        %v1260 = vpop.permute.xlu0 %1259
        %1262 = vset.pattern.permute.xlu0 127
        %1263 = vperm.xlu0 %1262, %v959
        %v1264 = vpop.permute.xlu0 %1263
        %1266 = vset.pattern.permute.xlu0 127
        %1267 = vperm.xlu0 %1266, %v961
        %v1268 = vpop.permute.xlu0 %1267
        %1270 = vset.pattern.permute.xlu0 127
        %1271 = vperm.xlu0 %1270, %v963
        %v1272 = vpop.permute.xlu0 %1271
        %1274 = vset.pattern.permute.xlu0 127
        %1275 = vperm.xlu0 %1274, %v965
        %v1276 = vpop.permute.xlu0 %1275
        %1278 = vset.pattern.permute.xlu0 127
        %1279 = vperm.xlu0 %1278, %v967
        %v1280 = vpop.permute.xlu0 %1279
        %1282 = vset.pattern.permute.xlu0 127
        %1283 = vperm.xlu0 %1282, %v969
        %v1284 = vpop.permute.xlu0 %1283
        %1286 = vset.pattern.permute.xlu0 127
        %1287 = vperm.xlu0 %1286, %v971
        %v1288 = vpop.permute.xlu0 %1287
        %1290 = vset.pattern.permute.xlu0 127
        %1291 = vperm.xlu0 %1290, %v973
        %v1292 = vpop.permute.xlu0 %1291
        %1295 = vset.pattern.permute.xlu0 127
        %1296 = vperm.xlu0 %1295, %v814
        %v1297 = vpop.permute.xlu0 %1296
        %1300 = vset.pattern.permute.xlu0 127
        %1301 = vperm.xlu0 %1300, %v815
        %v1302 = vpop.permute.xlu0 %1301
        %1305 = vset.pattern.permute.xlu0 127
        %1306 = vperm.xlu0 %1305, %v816
        %v1307 = vpop.permute.xlu0 %1306
        %1310 = vset.pattern.permute.xlu0 127
        %1311 = vperm.xlu0 %1310, %v817
        %v1312 = vpop.permute.xlu0 %1311
        %1315 = vset.pattern.permute.xlu0 127
        %1316 = vperm.xlu0 %1315, %v818
        %v1317 = vpop.permute.xlu0 %1316
        %1320 = vset.pattern.permute.xlu0 127
        %1321 = vperm.xlu0 %1320, %v819
        %v1322 = vpop.permute.xlu0 %1321
        %1325 = vset.pattern.permute.xlu0 127
        %1326 = vperm.xlu0 %1325, %v820
        %v1327 = vpop.permute.xlu0 %1326
        %1330 = vset.pattern.permute.xlu0 127
        %1331 = vperm.xlu0 %1330, %v821
        %v1332 = vpop.permute.xlu0 %1331
        %1335 = vset.pattern.permute.xlu0 127
        %1336 = vperm.xlu0 %1335, %v822
        %v1337 = vpop.permute.xlu0 %1336
        %1340 = vset.pattern.permute.xlu0 127
        %1341 = vperm.xlu0 %1340, %v823
        %v1342 = vpop.permute.xlu0 %1341
        %1345 = vset.pattern.permute.xlu0 127
        %1346 = vperm.xlu0 %1345, %v824
        %v1347 = vpop.permute.xlu0 %1346
        %1350 = vset.pattern.permute.xlu0 127
        %1351 = vperm.xlu0 %1350, %v825
        %v1352 = vpop.permute.xlu0 %1351
        %1355 = vset.pattern.permute.xlu0 127
        %1356 = vperm.xlu0 %1355, %v826
        %v1357 = vpop.permute.xlu0 %1356
        %1360 = vset.pattern.permute.xlu0 127
        %1361 = vperm.xlu0 %1360, %v827
        %v1362 = vpop.permute.xlu0 %1361
        %1365 = vset.pattern.permute.xlu0 127
        %1366 = vperm.xlu0 %1365, %v828
        %v1367 = vpop.permute.xlu0 %1366
        %1370 = vset.pattern.permute.xlu0 127
        %1371 = vperm.xlu0 %1370, %v829
        %v1372 = vpop.permute.xlu0 %1371
        %1375 = vset.pattern.permute.xlu0 127
        %1376 = vperm.xlu0 %1375, %v359
        %v1377 = vpop.permute.xlu0 %1376
        %1380 = vset.pattern.permute.xlu0 127
        %1381 = vperm.xlu0 %1380, %v362
        %v1382 = vpop.permute.xlu0 %1381
        %1385 = vset.pattern.permute.xlu0 127
        %1386 = vperm.xlu0 %1385, %v365
        %v1387 = vpop.permute.xlu0 %1386
        %1390 = vset.pattern.permute.xlu0 127
        %1391 = vperm.xlu0 %1390, %v368
        %v1392 = vpop.permute.xlu0 %1391
        %1395 = vset.pattern.permute.xlu0 127
        %1396 = vperm.xlu0 %1395, %v371
        %v1397 = vpop.permute.xlu0 %1396
        %1400 = vset.pattern.permute.xlu0 127
        %1401 = vperm.xlu0 %1400, %v374
        %v1402 = vpop.permute.xlu0 %1401
        %1405 = vset.pattern.permute.xlu0 127
        %1406 = vperm.xlu0 %1405, %v377
        %v1407 = vpop.permute.xlu0 %1406
        %1410 = vset.pattern.permute.xlu0 127
        %1411 = vperm.xlu0 %1410, %v380
        %v1412 = vpop.permute.xlu0 %1411
        %1415 = vset.pattern.permute.xlu0 127
        %1416 = vperm.xlu0 %1415, %v383
        %v1417 = vpop.permute.xlu0 %1416
        %1420 = vset.pattern.permute.xlu0 127
        %1421 = vperm.xlu0 %1420, %v386
        %v1422 = vpop.permute.xlu0 %1421
        %1425 = vset.pattern.permute.xlu0 127
        %1426 = vperm.xlu0 %1425, %v389
        %v1427 = vpop.permute.xlu0 %1426
        %1430 = vset.pattern.permute.xlu0 127
        %1431 = vperm.xlu0 %1430, %v392
        %v1432 = vpop.permute.xlu0 %1431
        %1435 = vset.pattern.permute.xlu0 127
        %1436 = vperm.xlu0 %1435, %v395
        %v1437 = vpop.permute.xlu0 %1436
        %1440 = vset.pattern.permute.xlu0 127
        %1441 = vperm.xlu0 %1440, %v398
        %v1442 = vpop.permute.xlu0 %1441
        %1445 = vset.pattern.permute.xlu0 127
        %1446 = vperm.xlu0 %1445, %v401
        %v1447 = vpop.permute.xlu0 %1446
        %1450 = vset.pattern.permute.xlu0 127
        %1451 = vperm.xlu0 %1450, %v404
        %v1452 = vpop.permute.xlu0 %1451
        %1455 = vset.pattern.permute.xlu0 127
        %1456 = vperm.xlu0 %1455, %v830
        %v1457 = vpop.permute.xlu0 %1456
        %1460 = vset.pattern.permute.xlu0 127
        %1461 = vperm.xlu0 %1460, %v831
        %v1462 = vpop.permute.xlu0 %1461
        %1465 = vset.pattern.permute.xlu0 127
        %1466 = vperm.xlu0 %1465, %v832
        %v1467 = vpop.permute.xlu0 %1466
        %1470 = vset.pattern.permute.xlu0 127
        %1471 = vperm.xlu0 %1470, %v833
        %v1472 = vpop.permute.xlu0 %1471
        %1475 = vset.pattern.permute.xlu0 127
        %1476 = vperm.xlu0 %1475, %v834
        %v1477 = vpop.permute.xlu0 %1476
        %1480 = vset.pattern.permute.xlu0 127
        %1481 = vperm.xlu0 %1480, %v835
        %v1482 = vpop.permute.xlu0 %1481
        %1485 = vset.pattern.permute.xlu0 127
        %1486 = vperm.xlu0 %1485, %v836
        %v1487 = vpop.permute.xlu0 %1486
        %1490 = vset.pattern.permute.xlu0 127
        %1491 = vperm.xlu0 %1490, %v837
        %v1492 = vpop.permute.xlu0 %1491
        %1495 = vset.pattern.permute.xlu0 127
        %1496 = vperm.xlu0 %1495, %v838
        %v1497 = vpop.permute.xlu0 %1496
        %1500 = vset.pattern.permute.xlu0 127
        %1501 = vperm.xlu0 %1500, %v839
        %v1502 = vpop.permute.xlu0 %1501
        %1505 = vset.pattern.permute.xlu0 127
        %1506 = vperm.xlu0 %1505, %v840
        %v1507 = vpop.permute.xlu0 %1506
        %1510 = vset.pattern.permute.xlu0 127
        %1511 = vperm.xlu0 %1510, %v841
        %v1512 = vpop.permute.xlu0 %1511
        %1515 = vset.pattern.permute.xlu0 127
        %1516 = vperm.xlu0 %1515, %v842
        %v1517 = vpop.permute.xlu0 %1516
        %1520 = vset.pattern.permute.xlu0 127
        %1521 = vperm.xlu0 %1520, %v843
        %v1522 = vpop.permute.xlu0 %1521
        %1525 = vset.pattern.permute.xlu0 127
        %1526 = vperm.xlu0 %1525, %v844
        %v1527 = vpop.permute.xlu0 %1526
        %1530 = vset.pattern.permute.xlu0 127
        %1531 = vperm.xlu0 %1530, %v845
        %v1532 = vpop.permute.xlu0 %1531
        %1534 = vset.pattern.permute.xlu0 127
        %1535 = vperm.xlu0 %1534, %v991
        %v1536 = vpop.permute.xlu0 %1535
        %1538 = vset.pattern.permute.xlu0 127
        %1539 = vperm.xlu0 %1538, %v993
        %v1540 = vpop.permute.xlu0 %1539
        %1542 = vset.pattern.permute.xlu0 127
        %1543 = vperm.xlu0 %1542, %v995
        %v1544 = vpop.permute.xlu0 %1543
        %1546 = vset.pattern.permute.xlu0 127
        %1547 = vperm.xlu0 %1546, %v997
        %v1548 = vpop.permute.xlu0 %1547
        %1550 = vset.pattern.permute.xlu0 127
        %1551 = vperm.xlu0 %1550, %v999
        %v1552 = vpop.permute.xlu0 %1551
        %1554 = vset.pattern.permute.xlu0 127
        %1555 = vperm.xlu0 %1554, %v1001
        %v1556 = vpop.permute.xlu0 %1555
        %1558 = vset.pattern.permute.xlu0 127
        %1559 = vperm.xlu0 %1558, %v1003
        %v1560 = vpop.permute.xlu0 %1559
        %1562 = vset.pattern.permute.xlu0 127
        %1563 = vperm.xlu0 %1562, %v1005
        %v1564 = vpop.permute.xlu0 %1563
        %1566 = vset.pattern.permute.xlu0 127
        %1567 = vperm.xlu0 %1566, %v1007
        %v1568 = vpop.permute.xlu0 %1567
        %1570 = vset.pattern.permute.xlu0 127
        %1571 = vperm.xlu0 %1570, %v1009
        %v1572 = vpop.permute.xlu0 %1571
        %1574 = vset.pattern.permute.xlu0 127
        %1575 = vperm.xlu0 %1574, %v1011
        %v1576 = vpop.permute.xlu0 %1575
        %1578 = vset.pattern.permute.xlu0 127
        %1579 = vperm.xlu0 %1578, %v1013
        %v1580 = vpop.permute.xlu0 %1579
        %1582 = vset.pattern.permute.xlu0 127
        %1583 = vperm.xlu0 %1582, %v1015
        %v1584 = vpop.permute.xlu0 %1583
        %1586 = vset.pattern.permute.xlu0 127
        %1587 = vperm.xlu0 %1586, %v1017
        %v1588 = vpop.permute.xlu0 %1587
        %1590 = vset.pattern.permute.xlu0 127
        %1591 = vperm.xlu0 %1590, %v1019
        %v1592 = vpop.permute.xlu0 %1591
        %1594 = vset.pattern.permute.xlu0 127
        %1595 = vperm.xlu0 %1594, %v1021
        %v1596 = vpop.permute.xlu0 %1595
        %1599 = vset.pattern.permute.xlu0 127
        %1600 = vperm.xlu0 %1599, %v846
        %v1601 = vpop.permute.xlu0 %1600
        %1604 = vset.pattern.permute.xlu0 127
        %1605 = vperm.xlu0 %1604, %v847
        %v1606 = vpop.permute.xlu0 %1605
        %1609 = vset.pattern.permute.xlu0 127
        %1610 = vperm.xlu0 %1609, %v848
        %v1611 = vpop.permute.xlu0 %1610
        %1614 = vset.pattern.permute.xlu0 127
        %1615 = vperm.xlu0 %1614, %v849
        %v1616 = vpop.permute.xlu0 %1615
        %1619 = vset.pattern.permute.xlu0 127
        %1620 = vperm.xlu0 %1619, %v850
        %v1621 = vpop.permute.xlu0 %1620
        %1624 = vset.pattern.permute.xlu0 127
        %1625 = vperm.xlu0 %1624, %v851
        %v1626 = vpop.permute.xlu0 %1625
        %1629 = vset.pattern.permute.xlu0 127
        %1630 = vperm.xlu0 %1629, %v852
        %v1631 = vpop.permute.xlu0 %1630
        %1634 = vset.pattern.permute.xlu0 127
        %1635 = vperm.xlu0 %1634, %v853
        %v1636 = vpop.permute.xlu0 %1635
        %1639 = vset.pattern.permute.xlu0 127
        %1640 = vperm.xlu0 %1639, %v854
        %v1641 = vpop.permute.xlu0 %1640
        %1644 = vset.pattern.permute.xlu0 127
        %1645 = vperm.xlu0 %1644, %v855
        %v1646 = vpop.permute.xlu0 %1645
        %1649 = vset.pattern.permute.xlu0 127
        %1650 = vperm.xlu0 %1649, %v856
        %v1651 = vpop.permute.xlu0 %1650
        %1654 = vset.pattern.permute.xlu0 127
        %1655 = vperm.xlu0 %1654, %v857
        %v1656 = vpop.permute.xlu0 %1655
        %1659 = vset.pattern.permute.xlu0 127
        %1660 = vperm.xlu0 %1659, %v858
        %v1661 = vpop.permute.xlu0 %1660
        %1664 = vset.pattern.permute.xlu0 127
        %1665 = vperm.xlu0 %1664, %v859
        %v1666 = vpop.permute.xlu0 %1665
        %1669 = vset.pattern.permute.xlu0 127
        %1670 = vperm.xlu0 %1669, %v860
        %v1671 = vpop.permute.xlu0 %1670
        %1674 = vset.pattern.permute.xlu0 127
        %1675 = vperm.xlu0 %1674, %v861
        %v1676 = vpop.permute.xlu0 %1675
        %1678 = vset.pattern.permute.xlu0 127
        %1679 = vperm.xlu0 %1678, %v1039
        %v1680 = vpop.permute.xlu0 %1679
        %1682 = vset.pattern.permute.xlu0 127
        %1683 = vperm.xlu0 %1682, %v1041
        %v1684 = vpop.permute.xlu0 %1683
        %1686 = vset.pattern.permute.xlu0 127
        %1687 = vperm.xlu0 %1686, %v1043
        %v1688 = vpop.permute.xlu0 %1687
        %1690 = vset.pattern.permute.xlu0 127
        %1691 = vperm.xlu0 %1690, %v1045
        %v1692 = vpop.permute.xlu0 %1691
        %1694 = vset.pattern.permute.xlu0 127
        %1695 = vperm.xlu0 %1694, %v1047
        %v1696 = vpop.permute.xlu0 %1695
        %1698 = vset.pattern.permute.xlu0 127
        %1699 = vperm.xlu0 %1698, %v1049
        %v1700 = vpop.permute.xlu0 %1699
        %1702 = vset.pattern.permute.xlu0 127
        %1703 = vperm.xlu0 %1702, %v1051
        %v1704 = vpop.permute.xlu0 %1703
        %1706 = vset.pattern.permute.xlu0 127
        %1707 = vperm.xlu0 %1706, %v1053
        %v1708 = vpop.permute.xlu0 %1707
        %1710 = vset.pattern.permute.xlu0 127
        %1711 = vperm.xlu0 %1710, %v1055
        %v1712 = vpop.permute.xlu0 %1711
        %1714 = vset.pattern.permute.xlu0 127
        %1715 = vperm.xlu0 %1714, %v1057
        %v1716 = vpop.permute.xlu0 %1715
        %1718 = vset.pattern.permute.xlu0 127
        %1719 = vperm.xlu0 %1718, %v1059
        %v1720 = vpop.permute.xlu0 %1719
        %1722 = vset.pattern.permute.xlu0 127
        %1723 = vperm.xlu0 %1722, %v1061
        %v1724 = vpop.permute.xlu0 %1723
        %1726 = vset.pattern.permute.xlu0 127
        %1727 = vperm.xlu0 %1726, %v1063
        %v1728 = vpop.permute.xlu0 %1727
        %1730 = vset.pattern.permute.xlu0 127
        %1731 = vperm.xlu0 %1730, %v1065
        %v1732 = vpop.permute.xlu0 %1731
        %1734 = vset.pattern.permute.xlu0 127
        %1735 = vperm.xlu0 %1734, %v1067
        %v1736 = vpop.permute.xlu0 %1735
        %1738 = vset.pattern.permute.xlu0 127
        %1739 = vperm.xlu0 %1738, %v1069
        %v1740 = vpop.permute.xlu0 %1739
        %v1742 = vld [vmem:[%s1] sm:$0xff]
        %v1743 = vld [vmem:[%s1 + $0x8] sm:$0xff]
        %v1744 = vld [vmem:[%s1 + $0x10] sm:$0xff]
        %v1745 = vld [vmem:[%s1 + $0x18] sm:$0xff]
        %v1746 = vld [vmem:[%s1 + $0x20] sm:$0xff]
        %v1747 = vld [vmem:[%s1 + $0x28] sm:$0xff]
        %v1748 = vld [vmem:[%s1 + $0x30] sm:$0xff]
        %v1749 = vld [vmem:[%s1 + $0x38] sm:$0xff]
        %v1750 = vld [vmem:[%s1 + $0x40] sm:$0xff]
        %v1751 = vld [vmem:[%s1 + $0x48] sm:$0xff]
        %v1752 = vld [vmem:[%s1 + $0x50] sm:$0xff]
        %v1753 = vld [vmem:[%s1 + $0x58] sm:$0xff]
        %v1754 = vld [vmem:[%s1 + $0x60] sm:$0xff]
        %v1755 = vld [vmem:[%s1 + $0x68] sm:$0xff]
        %v1756 = vld [vmem:[%s1 + $0x70] sm:$0xff]
        %v1757 = vld [vmem:[%s1 + $0x78] sm:$0xff]
        %v1758 = vld [vmem:[%s1 + $0x80] sm:$0xff]
        %v1759 = vld [vmem:[%s1 + $0x88] sm:$0xff]
        %v1760 = vld [vmem:[%s1 + $0x90] sm:$0xff]
        %v1761 = vld [vmem:[%s1 + $0x98] sm:$0xff]
        %v1762 = vld [vmem:[%s1 + $0xa0] sm:$0xff]
        %v1763 = vld [vmem:[%s1 + $0xa8] sm:$0xff]
        %v1764 = vld [vmem:[%s1 + $0xb0] sm:$0xff]
        %v1765 = vld [vmem:[%s1 + $0xb8] sm:$0xff]
        %v1766 = vld [vmem:[%s1 + $0xc0] sm:$0xff]
        %v1767 = vld [vmem:[%s1 + $0xc8] sm:$0xff]
        %v1768 = vld [vmem:[%s1 + $0xd0] sm:$0xff]
        %v1769 = vld [vmem:[%s1 + $0xd8] sm:$0xff]
        %v1770 = vld [vmem:[%s1 + $0xe0] sm:$0xff]
        %v1771 = vld [vmem:[%s1 + $0xe8] sm:$0xff]
        %v1772 = vld [vmem:[%s1 + $0xf0] sm:$0xff]
        %v1773 = vld [vmem:[%s1 + $0xf8] sm:$0xff]
        %v1774 = vld [vmem:[%s1 + $0x100] sm:$0xff]
        %v1775 = vld [vmem:[%s1 + $0x108] sm:$0xff]
        %v1776 = vld [vmem:[%s1 + $0x110] sm:$0xff]
        %v1777 = vld [vmem:[%s1 + $0x118] sm:$0xff]
        %v1778 = vld [vmem:[%s1 + $0x120] sm:$0xff]
        %v1779 = vld [vmem:[%s1 + $0x128] sm:$0xff]
        %v1780 = vld [vmem:[%s1 + $0x130] sm:$0xff]
        %v1781 = vld [vmem:[%s1 + $0x138] sm:$0xff]
        %v1782 = vld [vmem:[%s1 + $0x140] sm:$0xff]
        %v1783 = vld [vmem:[%s1 + $0x148] sm:$0xff]
        %v1784 = vld [vmem:[%s1 + $0x150] sm:$0xff]
        %v1785 = vld [vmem:[%s1 + $0x158] sm:$0xff]
        %v1786 = vld [vmem:[%s1 + $0x160] sm:$0xff]
        %v1787 = vld [vmem:[%s1 + $0x168] sm:$0xff]
        %v1788 = vld [vmem:[%s1 + $0x170] sm:$0xff]
        %v1789 = vld [vmem:[%s1 + $0x178] sm:$0xff]
        %v1790 = vld [vmem:[%s1 + $0x180] sm:$0xff]
        %v1791 = vld [vmem:[%s1 + $0x188] sm:$0xff]
        %v1792 = vld [vmem:[%s1 + $0x190] sm:$0xff]
        %v1793 = vld [vmem:[%s1 + $0x198] sm:$0xff]
        %v1794 = vld [vmem:[%s1 + $0x1a0] sm:$0xff]
        %v1795 = vld [vmem:[%s1 + $0x1a8] sm:$0xff]
        %v1796 = vld [vmem:[%s1 + $0x1b0] sm:$0xff]
        %v1797 = vld [vmem:[%s1 + $0x1b8] sm:$0xff]
        %v1798 = vld [vmem:[%s1 + $0x1c0] sm:$0xff]
        %v1799 = vld [vmem:[%s1 + $0x1c8] sm:$0xff]
        %v1800 = vld [vmem:[%s1 + $0x1d0] sm:$0xff]
        %v1801 = vld [vmem:[%s1 + $0x1d8] sm:$0xff]
        %v1802 = vld [vmem:[%s1 + $0x1e0] sm:$0xff]
        %v1803 = vld [vmem:[%s1 + $0x1e8] sm:$0xff]
        %v1804 = vld [vmem:[%s1 + $0x1f0] sm:$0xff]
        %v1805 = vld [vmem:[%s1 + $0x1f8] sm:$0xff]
        %v1806 = vld [vmem:[%s1 + $0x200] sm:$0xff]
        %v1807 = vld [vmem:[%s1 + $0x208] sm:$0xff]
        %v1808 = vld [vmem:[%s1 + $0x210] sm:$0xff]
        %v1809 = vld [vmem:[%s1 + $0x218] sm:$0xff]
        %v1810 = vld [vmem:[%s1 + $0x220] sm:$0xff]
        %v1811 = vld [vmem:[%s1 + $0x228] sm:$0xff]
        %v1812 = vld [vmem:[%s1 + $0x230] sm:$0xff]
        %v1813 = vld [vmem:[%s1 + $0x238] sm:$0xff]
        %v1814 = vld [vmem:[%s1 + $0x240] sm:$0xff]
        %v1815 = vld [vmem:[%s1 + $0x248] sm:$0xff]
        %v1816 = vld [vmem:[%s1 + $0x250] sm:$0xff]
        %v1817 = vld [vmem:[%s1 + $0x258] sm:$0xff]
        %v1818 = vld [vmem:[%s1 + $0x260] sm:$0xff]
        %v1819 = vld [vmem:[%s1 + $0x268] sm:$0xff]
        %v1820 = vld [vmem:[%s1 + $0x270] sm:$0xff]
        %v1821 = vld [vmem:[%s1 + $0x278] sm:$0xff]
        %v1822 = vld [vmem:[%s1 + $0x280] sm:$0xff]
        %v1823 = vld [vmem:[%s1 + $0x288] sm:$0xff]
        %v1824 = vld [vmem:[%s1 + $0x290] sm:$0xff]
        %v1825 = vld [vmem:[%s1 + $0x298] sm:$0xff]
        %v1826 = vld [vmem:[%s1 + $0x2a0] sm:$0xff]
        %v1827 = vld [vmem:[%s1 + $0x2a8] sm:$0xff]
        %v1828 = vld [vmem:[%s1 + $0x2b0] sm:$0xff]
        %v1829 = vld [vmem:[%s1 + $0x2b8] sm:$0xff]
        %v1830 = vld [vmem:[%s1 + $0x2c0] sm:$0xff]
        %v1831 = vld [vmem:[%s1 + $0x2c8] sm:$0xff]
        %v1832 = vld [vmem:[%s1 + $0x2d0] sm:$0xff]
        %v1833 = vld [vmem:[%s1 + $0x2d8] sm:$0xff]
        %v1834 = vld [vmem:[%s1 + $0x2e0] sm:$0xff]
        %v1835 = vld [vmem:[%s1 + $0x2e8] sm:$0xff]
        %v1836 = vld [vmem:[%s1 + $0x2f0] sm:$0xff]
        %v1837 = vld [vmem:[%s1 + $0x2f8] sm:$0xff]
        %v1838 = vld [vmem:[%s1 + $0x300] sm:$0xff]
        %v1839 = vld [vmem:[%s1 + $0x308] sm:$0xff]
        %v1840 = vld [vmem:[%s1 + $0x310] sm:$0xff]
        %v1841 = vld [vmem:[%s1 + $0x318] sm:$0xff]
        %v1842 = vld [vmem:[%s1 + $0x320] sm:$0xff]
        %v1843 = vld [vmem:[%s1 + $0x328] sm:$0xff]
        %v1844 = vld [vmem:[%s1 + $0x330] sm:$0xff]
        %v1845 = vld [vmem:[%s1 + $0x338] sm:$0xff]
        %v1846 = vld [vmem:[%s1 + $0x340] sm:$0xff]
        %v1847 = vld [vmem:[%s1 + $0x348] sm:$0xff]
        %v1848 = vld [vmem:[%s1 + $0x350] sm:$0xff]
        %v1849 = vld [vmem:[%s1 + $0x358] sm:$0xff]
        %v1850 = vld [vmem:[%s1 + $0x360] sm:$0xff]
        %v1851 = vld [vmem:[%s1 + $0x368] sm:$0xff]
        %v1852 = vld [vmem:[%s1 + $0x370] sm:$0xff]
        %v1853 = vld [vmem:[%s1 + $0x378] sm:$0xff]
        %v1854 = vld [vmem:[%s1 + $0x380] sm:$0xff]
        %v1855 = vld [vmem:[%s1 + $0x388] sm:$0xff]
        %v1856 = vld [vmem:[%s1 + $0x390] sm:$0xff]
        %v1857 = vld [vmem:[%s1 + $0x398] sm:$0xff]
        %v1858 = vld [vmem:[%s1 + $0x3a0] sm:$0xff]
        %v1859 = vld [vmem:[%s1 + $0x3a8] sm:$0xff]
        %v1860 = vld [vmem:[%s1 + $0x3b0] sm:$0xff]
        %v1861 = vld [vmem:[%s1 + $0x3b8] sm:$0xff]
        %v1862 = vld [vmem:[%s1 + $0x3c0] sm:$0xff]
        %v1863 = vld [vmem:[%s1 + $0x3c8] sm:$0xff]
        %v1864 = vld [vmem:[%s1 + $0x3d0] sm:$0xff]
        %v1865 = vld [vmem:[%s1 + $0x3d8] sm:$0xff]
        %v1866 = vld [vmem:[%s1 + $0x3e0] sm:$0xff]
        %v1867 = vld [vmem:[%s1 + $0x3e8] sm:$0xff]
        %v1868 = vld [vmem:[%s1 + $0x3f0] sm:$0xff]
        %v1869 = vld [vmem:[%s1 + $0x3f8] sm:$0xff]
        %v1870 = vld [vmem:[%s1 + $0x400] sm:$0xff]
        %v1871 = vld [vmem:[%s1 + $0x408] sm:$0xff]
        %v1872 = vld [vmem:[%s1 + $0x410] sm:$0xff]
        %v1873 = vld [vmem:[%s1 + $0x418] sm:$0xff]
        %v1874 = vld [vmem:[%s1 + $0x420] sm:$0xff]
        %v1875 = vld [vmem:[%s1 + $0x428] sm:$0xff]
        %v1876 = vld [vmem:[%s1 + $0x430] sm:$0xff]
        %v1877 = vld [vmem:[%s1 + $0x438] sm:$0xff]
        %v1878 = vld [vmem:[%s1 + $0x440] sm:$0xff]
        %v1879 = vld [vmem:[%s1 + $0x448] sm:$0xff]
        %v1880 = vld [vmem:[%s1 + $0x450] sm:$0xff]
        %v1881 = vld [vmem:[%s1 + $0x458] sm:$0xff]
        %v1882 = vld [vmem:[%s1 + $0x460] sm:$0xff]
        %v1883 = vld [vmem:[%s1 + $0x468] sm:$0xff]
        %v1884 = vld [vmem:[%s1 + $0x470] sm:$0xff]
        %v1885 = vld [vmem:[%s1 + $0x478] sm:$0xff]
        %1886 = vmatprep.subr.mxu0 0.0
        %1887 = vmatpush1.msra.mxu0 %v1073
        %1888 = vmatprep.subr.mxu0 0.0
        %1889 = vmatpush1.msra.mxu0 %v1078
        %1890 = vmatprep.subr.mxu0 0.0
        %1891 = vmatpush1.msra.mxu0 %v1083
        %1892 = vmatprep.subr.mxu0 0.0
        %1893 = vmatpush1.msra.mxu0 %v1088
        %1894 = vmatprep.subr.mxu0 0.0
        %1895 = vmatpush1.msra.mxu0 %v1093
        %1896 = vmatprep.subr.mxu0 0.0
        %1897 = vmatpush1.msra.mxu0 %v1098
        %1898 = vmatprep.subr.mxu0 0.0
        %1899 = vmatpush1.msra.mxu0 %v1103
        %1900 = vmatprep.subr.mxu0 0.0
        %1901 = vmatpush1.msra.mxu0 %v1108
        %1902 = vmatprep.subr.mxu0 0.0
        %1903 = vmatpush1.msra.mxu0 %v1113
        %1904 = vmatprep.subr.mxu0 0.0
        %1905 = vmatpush1.msra.mxu0 %v1118
        %1906 = vmatprep.subr.mxu0 0.0
        %1907 = vmatpush1.msra.mxu0 %v1123
        %1908 = vmatprep.subr.mxu0 0.0
        %1909 = vmatpush1.msra.mxu0 %v1128
        %1910 = vmatprep.subr.mxu0 0.0
        %1911 = vmatpush1.msra.mxu0 %v1133
        %1912 = vmatprep.subr.mxu0 0.0
        %1913 = vmatpush1.msra.mxu0 %v1138
        %1914 = vmatprep.subr.mxu0 0.0
        %1915 = vmatpush1.msra.mxu0 %v1143
        %1916 = vmatprep.subr.mxu0 0.0
        %1917 = vmatpush1.msra.mxu0 %v1148
        %1918 = vmatprep.subr.mxu0 0.0
        %1919 = vmatpush1.msra.mxu0 %v1153
        %1920 = vmatprep.subr.mxu0 0.0
        %1921 = vmatpush1.msra.mxu0 %v1158
        %1922 = vmatprep.subr.mxu0 0.0
        %1923 = vmatpush1.msra.mxu0 %v1163
        %1924 = vmatprep.subr.mxu0 0.0
        %1925 = vmatpush1.msra.mxu0 %v1168
        %1926 = vmatprep.subr.mxu0 0.0
        %1927 = vmatpush1.msra.mxu0 %v1173
        %1928 = vmatprep.subr.mxu0 0.0
        %1929 = vmatpush1.msra.mxu0 %v1178
        %1930 = vmatprep.subr.mxu0 0.0
        %1931 = vmatpush1.msra.mxu0 %v1183
        %1932 = vmatprep.subr.mxu0 0.0
        %1933 = vmatpush1.msra.mxu0 %v1188
        %1934 = vmatprep.subr.mxu0 0.0
        %1935 = vmatpush1.msra.mxu0 %v1193
        %1936 = vmatprep.subr.mxu0 0.0
        %1937 = vmatpush1.msra.mxu0 %v1198
        %1938 = vmatprep.subr.mxu0 0.0
        %1939 = vmatpush1.msra.mxu0 %v1203
        %1940 = vmatprep.subr.mxu0 0.0
        %1941 = vmatpush1.msra.mxu0 %v1208
        %1942 = vmatprep.subr.mxu0 0.0
        %1943 = vmatpush1.msra.mxu0 %v1213
        %1944 = vmatprep.subr.mxu0 0.0
        %1945 = vmatpush1.msra.mxu0 %v1218
        %1946 = vmatprep.subr.mxu0 0.0
        %1947 = vmatpush1.msra.mxu0 %v1223
        %1948 = vmatprep.subr.mxu0 0.0
        %1949 = vmatpush1.msra.mxu0 %v1228
        %1950 = vmatprep.mubr.f32.mxu0 %v1743
        %1951 = vmatmul.mubr.f32.gmra.mrb[0].mxu0 %v1742
        %v1952 = vpop.f32.mrb[0].mxu0
        %v1953 = vadd.f32 0.0, %v1952
        %v1954 = vpop.f32.mrb[0].mxu0
        %1955 = vmatprep.mubr.f32.mxu0 %v1752
        %1956 = vmatmul.mubr.f32.gmra.mrb[0].mxu0 %v1751
        %v1957 = vpop.f32.mrb[0].mxu0
        %v1958 = vadd.f32 0.0, %v1957
        %v1959 = vpop.f32.mrb[0].mxu0
        %1960 = vmatprep.mubr.f32.mxu0 %v1761
        %1961 = vmatmul.mubr.f32.gmra.mrb[0].mxu0 %v1760
        %v1962 = vpop.f32.mrb[0].mxu0
        %v1963 = vadd.f32 0.0, %v1962
        %v1964 = vpop.f32.mrb[0].mxu0
        %1965 = vmatprep.mubr.f32.mxu0 %v1770
        %1966 = vmatmul.mubr.f32.gmra.mrb[0].mxu0 %v1769
        %v1967 = vpop.f32.mrb[0].mxu0
        %v1968 = vadd.f32 0.0, %v1967
        %v1969 = vpop.f32.mrb[0].mxu0
        %1970 = vmatprep.mubr.f32.mxu0 %v1779
        %1971 = vmatmul.mubr.f32.gmra.mrb[0].mxu0 %v1778
        %v1972 = vpop.f32.mrb[0].mxu0
        %v1973 = vadd.f32 0.0, %v1972
        %v1974 = vpop.f32.mrb[0].mxu0
        %1975 = vmatprep.mubr.f32.mxu0 %v1788
        %1976 = vmatmul.mubr.f32.gmra.mrb[0].mxu0 %v1787
        %v1977 = vpop.f32.mrb[0].mxu0
        %v1978 = vadd.f32 0.0, %v1977
        %v1979 = vpop.f32.mrb[0].mxu0
        %1980 = vmatprep.mubr.f32.mxu0 %v1797
        %1981 = vmatmul.mubr.f32.gmra.mrb[0].mxu0 %v1796
        %v1982 = vpop.f32.mrb[0].mxu0
        %v1983 = vadd.f32 0.0, %v1982
        %v1984 = vpop.f32.mrb[0].mxu0
        %1985 = vmatprep.mubr.f32.mxu0 %v1806
        %1986 = vmatmul.mubr.f32.gmra.mrb[0].mxu0 %v1805
        %v1987 = vpop.f32.mrb[0].mxu0
        %v1988 = vadd.f32 0.0, %v1987
        %v1989 = vpop.f32.mrb[0].mxu0
        %1990 = vmatprep.mubr.f32.mxu0 %v1815
        %1991 = vmatmul.mubr.f32.gmra.mrb[0].mxu0 %v1814
        %v1992 = vpop.f32.mrb[0].mxu0
        %v1993 = vadd.f32 0.0, %v1992
        %v1994 = vpop.f32.mrb[0].mxu0
        %1995 = vmatprep.mubr.f32.mxu0 %v1824
        %1996 = vmatmul.mubr.f32.gmra.mrb[0].mxu0 %v1823
        %v1997 = vpop.f32.mrb[0].mxu0
        %v1998 = vadd.f32 0.0, %v1997
        %v1999 = vpop.f32.mrb[0].mxu0
        %2000 = vmatprep.mubr.f32.mxu0 %v1833
        %2001 = vmatmul.mubr.f32.gmra.mrb[0].mxu0 %v1832
        %v2002 = vpop.f32.mrb[0].mxu0
        %v2003 = vadd.f32 0.0, %v2002
        %v2004 = vpop.f32.mrb[0].mxu0
        %2005 = vmatprep.mubr.f32.mxu0 %v1842
        %2006 = vmatmul.mubr.f32.gmra.mrb[0].mxu0 %v1841
        %v2007 = vpop.f32.mrb[0].mxu0
        %v2008 = vadd.f32 0.0, %v2007
        %v2009 = vpop.f32.mrb[0].mxu0
        %2010 = vmatprep.mubr.f32.mxu0 %v1851
        %2011 = vmatmul.mubr.f32.gmra.mrb[0].mxu0 %v1850
        %v2012 = vpop.f32.mrb[0].mxu0
        %v2013 = vadd.f32 0.0, %v2012
        %v2014 = vpop.f32.mrb[0].mxu0
        %2015 = vmatprep.mubr.f32.mxu0 %v1860
        %2016 = vmatmul.mubr.f32.gmra.mrb[0].mxu0 %v1859
        %v2017 = vpop.f32.mrb[0].mxu0
        %v2018 = vadd.f32 0.0, %v2017
        %v2019 = vpop.f32.mrb[0].mxu0
        %2020 = vmatprep.mubr.f32.mxu0 %v1869
        %2021 = vmatmul.mubr.f32.gmra.mrb[0].mxu0 %v1868
        %v2022 = vpop.f32.mrb[0].mxu0
        %v2023 = vadd.f32 0.0, %v2022
        %v2024 = vpop.f32.mrb[0].mxu0
        %2025 = vmatprep.mubr.f32.mxu0 %v1878
        %2026 = vmatmul.mubr.f32.gmra.mrb[0].mxu0 %v1877
        %v2027 = vpop.f32.mrb[0].mxu0
        %v2028 = vadd.f32 0.0, %v2027
        %v2029 = vpop.f32.mrb[0].mxu0
        %2030 = vdwg.mxu0
        %2031 = vmatprep.subr.mxu0 0.0
        %2032 = vmatpush1.msra.mxu0 %v1232
        %2033 = vmatprep.subr.mxu0 0.0
        %2034 = vmatpush1.msra.mxu0 %v1236
        %2035 = vmatprep.subr.mxu0 0.0
        %2036 = vmatpush1.msra.mxu0 %v1240
        %2037 = vmatprep.subr.mxu0 0.0
        %2038 = vmatpush1.msra.mxu0 %v1244
        %2039 = vmatprep.subr.mxu0 0.0
        %2040 = vmatpush1.msra.mxu0 %v1248
        %2041 = vmatprep.subr.mxu0 0.0
        %2042 = vmatpush1.msra.mxu0 %v1252
        %2043 = vmatprep.subr.mxu0 0.0
        %2044 = vmatpush1.msra.mxu0 %v1256
        %2045 = vmatprep.subr.mxu0 0.0
        %2046 = vmatpush1.msra.mxu0 %v1260
        %2047 = vmatprep.subr.mxu0 0.0
        %2048 = vmatpush1.msra.mxu0 %v1264
        %2049 = vmatprep.subr.mxu0 0.0
        %2050 = vmatpush1.msra.mxu0 %v1268
        %2051 = vmatprep.subr.mxu0 0.0
        %2052 = vmatpush1.msra.mxu0 %v1272
        %2053 = vmatprep.subr.mxu0 0.0
        %2054 = vmatpush1.msra.mxu0 %v1276
        %2055 = vmatprep.subr.mxu0 0.0
        %2056 = vmatpush1.msra.mxu0 %v1280
        %2057 = vmatprep.subr.mxu0 0.0
        %2058 = vmatpush1.msra.mxu0 %v1284
        %2059 = vmatprep.subr.mxu0 0.0
        %2060 = vmatpush1.msra.mxu0 %v1288
        %2061 = vmatprep.subr.mxu0 0.0
        %2062 = vmatpush1.msra.mxu0 %v1292
        %2063 = vmatprep.subr.mxu0 0.0
        %2064 = vmatpush1.msra.mxu0 %v1297
        %2065 = vmatprep.subr.mxu0 0.0
        %2066 = vmatpush1.msra.mxu0 %v1302
        %2067 = vmatprep.subr.mxu0 0.0
        %2068 = vmatpush1.msra.mxu0 %v1307
        %2069 = vmatprep.subr.mxu0 0.0
        %2070 = vmatpush1.msra.mxu0 %v1312
        %2071 = vmatprep.subr.mxu0 0.0
        %2072 = vmatpush1.msra.mxu0 %v1317
        %2073 = vmatprep.subr.mxu0 0.0
        %2074 = vmatpush1.msra.mxu0 %v1322
        %2075 = vmatprep.subr.mxu0 0.0
        %2076 = vmatpush1.msra.mxu0 %v1327
        %2077 = vmatprep.subr.mxu0 0.0
        %2078 = vmatpush1.msra.mxu0 %v1332
        %2079 = vmatprep.subr.mxu0 0.0
        %2080 = vmatpush1.msra.mxu0 %v1337
        %2081 = vmatprep.subr.mxu0 0.0
        %2082 = vmatpush1.msra.mxu0 %v1342
        %2083 = vmatprep.subr.mxu0 0.0
        %2084 = vmatpush1.msra.mxu0 %v1347
        %2085 = vmatprep.subr.mxu0 0.0
        %2086 = vmatpush1.msra.mxu0 %v1352
        %2087 = vmatprep.subr.mxu0 0.0
        %2088 = vmatpush1.msra.mxu0 %v1357
        %2089 = vmatprep.subr.mxu0 0.0
        %2090 = vmatpush1.msra.mxu0 %v1362
        %2091 = vmatprep.subr.mxu0 0.0
        %2092 = vmatpush1.msra.mxu0 %v1367
        %2093 = vmatprep.subr.mxu0 0.0
        %2094 = vmatpush1.msra.mxu0 %v1372
        %2095 = vmatprep.mubr.f32.mxu0 %v1745
        %2096 = vmatmul.mubr.f32.gmra.mrb[0].mxu0 %v1744
        %v2097 = vpop.f32.mrb[0].mxu0
        %v2098 = vadd.f32 %v1953, %v2097
        %v2099 = vpop.f32.mrb[0].mxu0
        %2100 = vmatprep.mubr.f32.mxu0 %v1754
        %2101 = vmatmul.mubr.f32.gmra.mrb[0].mxu0 %v1753
        %v2102 = vpop.f32.mrb[0].mxu0
        %v2103 = vadd.f32 %v1958, %v2102
        %v2104 = vpop.f32.mrb[0].mxu0
        %2105 = vmatprep.mubr.f32.mxu0 %v1763
        %2106 = vmatmul.mubr.f32.gmra.mrb[0].mxu0 %v1762
        %v2107 = vpop.f32.mrb[0].mxu0
        %v2108 = vadd.f32 %v1963, %v2107
        %v2109 = vpop.f32.mrb[0].mxu0
        %2110 = vmatprep.mubr.f32.mxu0 %v1772
        %2111 = vmatmul.mubr.f32.gmra.mrb[0].mxu0 %v1771
        %v2112 = vpop.f32.mrb[0].mxu0
        %v2113 = vadd.f32 %v1968, %v2112
        %v2114 = vpop.f32.mrb[0].mxu0
        %2115 = vmatprep.mubr.f32.mxu0 %v1781
        %2116 = vmatmul.mubr.f32.gmra.mrb[0].mxu0 %v1780
        %v2117 = vpop.f32.mrb[0].mxu0
        %v2118 = vadd.f32 %v1973, %v2117
        %v2119 = vpop.f32.mrb[0].mxu0
        %2120 = vmatprep.mubr.f32.mxu0 %v1790
        %2121 = vmatmul.mubr.f32.gmra.mrb[0].mxu0 %v1789
        %v2122 = vpop.f32.mrb[0].mxu0
        %v2123 = vadd.f32 %v1978, %v2122
        %v2124 = vpop.f32.mrb[0].mxu0
        %2125 = vmatprep.mubr.f32.mxu0 %v1799
        %2126 = vmatmul.mubr.f32.gmra.mrb[0].mxu0 %v1798
        %v2127 = vpop.f32.mrb[0].mxu0
        %v2128 = vadd.f32 %v1983, %v2127
        %v2129 = vpop.f32.mrb[0].mxu0
        %2130 = vmatprep.mubr.f32.mxu0 %v1808
        %2131 = vmatmul.mubr.f32.gmra.mrb[0].mxu0 %v1807
        %v2132 = vpop.f32.mrb[0].mxu0
        %v2133 = vadd.f32 %v1988, %v2132
        %v2134 = vpop.f32.mrb[0].mxu0
        %2135 = vmatprep.mubr.f32.mxu0 %v1817
        %2136 = vmatmul.mubr.f32.gmra.mrb[0].mxu0 %v1816
        %v2137 = vpop.f32.mrb[0].mxu0
        %v2138 = vadd.f32 %v1993, %v2137
        %v2139 = vpop.f32.mrb[0].mxu0
        %2140 = vmatprep.mubr.f32.mxu0 %v1826
        %2141 = vmatmul.mubr.f32.gmra.mrb[0].mxu0 %v1825
        %v2142 = vpop.f32.mrb[0].mxu0
        %v2143 = vadd.f32 %v1998, %v2142
        %v2144 = vpop.f32.mrb[0].mxu0
        %2145 = vmatprep.mubr.f32.mxu0 %v1835
        %2146 = vmatmul.mubr.f32.gmra.mrb[0].mxu0 %v1834
        %v2147 = vpop.f32.mrb[0].mxu0
        %v2148 = vadd.f32 %v2003, %v2147
        %v2149 = vpop.f32.mrb[0].mxu0
        %2150 = vmatprep.mubr.f32.mxu0 %v1844
        %2151 = vmatmul.mubr.f32.gmra.mrb[0].mxu0 %v1843
        %v2152 = vpop.f32.mrb[0].mxu0
        %v2153 = vadd.f32 %v2008, %v2152
        %v2154 = vpop.f32.mrb[0].mxu0
        %2155 = vmatprep.mubr.f32.mxu0 %v1853
        %2156 = vmatmul.mubr.f32.gmra.mrb[0].mxu0 %v1852
        %v2157 = vpop.f32.mrb[0].mxu0
        %v2158 = vadd.f32 %v2013, %v2157
        %v2159 = vpop.f32.mrb[0].mxu0
        %2160 = vmatprep.mubr.f32.mxu0 %v1862
        %2161 = vmatmul.mubr.f32.gmra.mrb[0].mxu0 %v1861
        %v2162 = vpop.f32.mrb[0].mxu0
        %v2163 = vadd.f32 %v2018, %v2162
        %v2164 = vpop.f32.mrb[0].mxu0
        %2165 = vmatprep.mubr.f32.mxu0 %v1871
        %2166 = vmatmul.mubr.f32.gmra.mrb[0].mxu0 %v1870
        %v2167 = vpop.f32.mrb[0].mxu0
        %v2168 = vadd.f32 %v2023, %v2167
        %v2169 = vpop.f32.mrb[0].mxu0
        %2170 = vmatprep.mubr.f32.mxu0 %v1880
        %2171 = vmatmul.mubr.f32.gmra.mrb[0].mxu0 %v1879
        %v2172 = vpop.f32.mrb[0].mxu0
        %v2173 = vadd.f32 %v2028, %v2172
        %v2174 = vpop.f32.mrb[0].mxu0
        %2175 = vdwg.mxu0
        %2176 = vmatprep.subr.mxu0 0.0
        %2177 = vmatpush1.msra.mxu0 %v1377
        %2178 = vmatprep.subr.mxu0 0.0
        %2179 = vmatpush1.msra.mxu0 %v1382
        %2180 = vmatprep.subr.mxu0 0.0
        %2181 = vmatpush1.msra.mxu0 %v1387
        %2182 = vmatprep.subr.mxu0 0.0
        %2183 = vmatpush1.msra.mxu0 %v1392
        %2184 = vmatprep.subr.mxu0 0.0
        %2185 = vmatpush1.msra.mxu0 %v1397
        %2186 = vmatprep.subr.mxu0 0.0
        %2187 = vmatpush1.msra.mxu0 %v1402
        %2188 = vmatprep.subr.mxu0 0.0
        %2189 = vmatpush1.msra.mxu0 %v1407
        %2190 = vmatprep.subr.mxu0 0.0
        %2191 = vmatpush1.msra.mxu0 %v1412
        %2192 = vmatprep.subr.mxu0 0.0
        %2193 = vmatpush1.msra.mxu0 %v1417
        %2194 = vmatprep.subr.mxu0 0.0
        %2195 = vmatpush1.msra.mxu0 %v1422
        %2196 = vmatprep.subr.mxu0 0.0
        %2197 = vmatpush1.msra.mxu0 %v1427
        %2198 = vmatprep.subr.mxu0 0.0
        %2199 = vmatpush1.msra.mxu0 %v1432
        %2200 = vmatprep.subr.mxu0 0.0
        %2201 = vmatpush1.msra.mxu0 %v1437
        %2202 = vmatprep.subr.mxu0 0.0
        %2203 = vmatpush1.msra.mxu0 %v1442
        %2204 = vmatprep.subr.mxu0 0.0
        %2205 = vmatpush1.msra.mxu0 %v1447
        %2206 = vmatprep.subr.mxu0 0.0
        %2207 = vmatpush1.msra.mxu0 %v1452
        %2208 = vmatprep.subr.mxu0 0.0
        %2209 = vmatpush1.msra.mxu0 %v1457
        %2210 = vmatprep.subr.mxu0 0.0
        %2211 = vmatpush1.msra.mxu0 %v1462
        %2212 = vmatprep.subr.mxu0 0.0
        %2213 = vmatpush1.msra.mxu0 %v1467
        %2214 = vmatprep.subr.mxu0 0.0
        %2215 = vmatpush1.msra.mxu0 %v1472
        %2216 = vmatprep.subr.mxu0 0.0
        %2217 = vmatpush1.msra.mxu0 %v1477
        %2218 = vmatprep.subr.mxu0 0.0
        %2219 = vmatpush1.msra.mxu0 %v1482
        %2220 = vmatprep.subr.mxu0 0.0
        %2221 = vmatpush1.msra.mxu0 %v1487
        %2222 = vmatprep.subr.mxu0 0.0
        %2223 = vmatpush1.msra.mxu0 %v1492
        %2224 = vmatprep.subr.mxu0 0.0
        %2225 = vmatpush1.msra.mxu0 %v1497
        %2226 = vmatprep.subr.mxu0 0.0
        %2227 = vmatpush1.msra.mxu0 %v1502
        %2228 = vmatprep.subr.mxu0 0.0
        %2229 = vmatpush1.msra.mxu0 %v1507
        %2230 = vmatprep.subr.mxu0 0.0
        %2231 = vmatpush1.msra.mxu0 %v1512
        %2232 = vmatprep.subr.mxu0 0.0
        %2233 = vmatpush1.msra.mxu0 %v1517
        %2234 = vmatprep.subr.mxu0 0.0
        %2235 = vmatpush1.msra.mxu0 %v1522
        %2236 = vmatprep.subr.mxu0 0.0
        %2237 = vmatpush1.msra.mxu0 %v1527
        %2238 = vmatprep.subr.mxu0 0.0
        %2239 = vmatpush1.msra.mxu0 %v1532
        %2240 = vmatprep.mubr.f32.mxu0 %v1747
        %2241 = vmatmul.mubr.f32.gmra.mrb[0].mxu0 %v1746
        %v2242 = vpop.f32.mrb[0].mxu0
        %v2243 = vadd.f32 %v2098, %v2242
        %v2244 = vpop.f32.mrb[0].mxu0
        %2245 = vmatprep.mubr.f32.mxu0 %v1756
        %2246 = vmatmul.mubr.f32.gmra.mrb[0].mxu0 %v1755
        %v2247 = vpop.f32.mrb[0].mxu0
        %v2248 = vadd.f32 %v2103, %v2247
        %v2249 = vpop.f32.mrb[0].mxu0
        %2250 = vmatprep.mubr.f32.mxu0 %v1765
        %2251 = vmatmul.mubr.f32.gmra.mrb[0].mxu0 %v1764
        %v2252 = vpop.f32.mrb[0].mxu0
        %v2253 = vadd.f32 %v2108, %v2252
        %v2254 = vpop.f32.mrb[0].mxu0
        %2255 = vmatprep.mubr.f32.mxu0 %v1774
        %2256 = vmatmul.mubr.f32.gmra.mrb[0].mxu0 %v1773
        %v2257 = vpop.f32.mrb[0].mxu0
        %v2258 = vadd.f32 %v2113, %v2257
        %v2259 = vpop.f32.mrb[0].mxu0
        %2260 = vmatprep.mubr.f32.mxu0 %v1783
        %2261 = vmatmul.mubr.f32.gmra.mrb[0].mxu0 %v1782
        %v2262 = vpop.f32.mrb[0].mxu0
        %v2263 = vadd.f32 %v2118, %v2262
        %v2264 = vpop.f32.mrb[0].mxu0
        %2265 = vmatprep.mubr.f32.mxu0 %v1792
        %2266 = vmatmul.mubr.f32.gmra.mrb[0].mxu0 %v1791
        %v2267 = vpop.f32.mrb[0].mxu0
        %v2268 = vadd.f32 %v2123, %v2267
        %v2269 = vpop.f32.mrb[0].mxu0
        %2270 = vmatprep.mubr.f32.mxu0 %v1801
        %2271 = vmatmul.mubr.f32.gmra.mrb[0].mxu0 %v1800
        %v2272 = vpop.f32.mrb[0].mxu0
        %v2273 = vadd.f32 %v2128, %v2272
        %v2274 = vpop.f32.mrb[0].mxu0
        %2275 = vmatprep.mubr.f32.mxu0 %v1810
        %2276 = vmatmul.mubr.f32.gmra.mrb[0].mxu0 %v1809
        %v2277 = vpop.f32.mrb[0].mxu0
        %v2278 = vadd.f32 %v2133, %v2277
        %v2279 = vpop.f32.mrb[0].mxu0
        %2280 = vmatprep.mubr.f32.mxu0 %v1819
        %2281 = vmatmul.mubr.f32.gmra.mrb[0].mxu0 %v1818
        %v2282 = vpop.f32.mrb[0].mxu0
        %v2283 = vadd.f32 %v2138, %v2282
        %v2284 = vpop.f32.mrb[0].mxu0
        %2285 = vmatprep.mubr.f32.mxu0 %v1828
        %2286 = vmatmul.mubr.f32.gmra.mrb[0].mxu0 %v1827
        %v2287 = vpop.f32.mrb[0].mxu0
        %v2288 = vadd.f32 %v2143, %v2287
        %v2289 = vpop.f32.mrb[0].mxu0
        %2290 = vmatprep.mubr.f32.mxu0 %v1837
        %2291 = vmatmul.mubr.f32.gmra.mrb[0].mxu0 %v1836
        %v2292 = vpop.f32.mrb[0].mxu0
        %v2293 = vadd.f32 %v2148, %v2292
        %v2294 = vpop.f32.mrb[0].mxu0
        %2295 = vmatprep.mubr.f32.mxu0 %v1846
        %2296 = vmatmul.mubr.f32.gmra.mrb[0].mxu0 %v1845
        %v2297 = vpop.f32.mrb[0].mxu0
        %v2298 = vadd.f32 %v2153, %v2297
        %v2299 = vpop.f32.mrb[0].mxu0
        %2300 = vmatprep.mubr.f32.mxu0 %v1855
        %2301 = vmatmul.mubr.f32.gmra.mrb[0].mxu0 %v1854
        %v2302 = vpop.f32.mrb[0].mxu0
        %v2303 = vadd.f32 %v2158, %v2302
        %v2304 = vpop.f32.mrb[0].mxu0
        %2305 = vmatprep.mubr.f32.mxu0 %v1864
        %2306 = vmatmul.mubr.f32.gmra.mrb[0].mxu0 %v1863
        %v2307 = vpop.f32.mrb[0].mxu0
        %v2308 = vadd.f32 %v2163, %v2307
        %v2309 = vpop.f32.mrb[0].mxu0
        %2310 = vmatprep.mubr.f32.mxu0 %v1873
        %2311 = vmatmul.mubr.f32.gmra.mrb[0].mxu0 %v1872
        %v2312 = vpop.f32.mrb[0].mxu0
        %v2313 = vadd.f32 %v2168, %v2312
        %v2314 = vpop.f32.mrb[0].mxu0
        %2315 = vmatprep.mubr.f32.mxu0 %v1882
        %2316 = vmatmul.mubr.f32.gmra.mrb[0].mxu0 %v1881
        %v2317 = vpop.f32.mrb[0].mxu0
        %v2318 = vadd.f32 %v2173, %v2317
        %v2319 = vpop.f32.mrb[0].mxu0
        %2320 = vdwg.mxu0
        %2321 = vmatprep.subr.mxu0 0.0
        %2322 = vmatpush1.msra.mxu0 %v1536
        %2323 = vmatprep.subr.mxu0 0.0
        %2324 = vmatpush1.msra.mxu0 %v1540
        %2325 = vmatprep.subr.mxu0 0.0
        %2326 = vmatpush1.msra.mxu0 %v1544
        %2327 = vmatprep.subr.mxu0 0.0
        %2328 = vmatpush1.msra.mxu0 %v1548
        %2329 = vmatprep.subr.mxu0 0.0
        %2330 = vmatpush1.msra.mxu0 %v1552
        %2331 = vmatprep.subr.mxu0 0.0
        %2332 = vmatpush1.msra.mxu0 %v1556
        %2333 = vmatprep.subr.mxu0 0.0
        %2334 = vmatpush1.msra.mxu0 %v1560
        %2335 = vmatprep.subr.mxu0 0.0
        %2336 = vmatpush1.msra.mxu0 %v1564
        %2337 = vmatprep.subr.mxu0 0.0
        %2338 = vmatpush1.msra.mxu0 %v1568
        %2339 = vmatprep.subr.mxu0 0.0
        %2340 = vmatpush1.msra.mxu0 %v1572
        %2341 = vmatprep.subr.mxu0 0.0
        %2342 = vmatpush1.msra.mxu0 %v1576
        %2343 = vmatprep.subr.mxu0 0.0
        %2344 = vmatpush1.msra.mxu0 %v1580
        %2345 = vmatprep.subr.mxu0 0.0
        %2346 = vmatpush1.msra.mxu0 %v1584
        %2347 = vmatprep.subr.mxu0 0.0
        %2348 = vmatpush1.msra.mxu0 %v1588
        %2349 = vmatprep.subr.mxu0 0.0
        %2350 = vmatpush1.msra.mxu0 %v1592
        %2351 = vmatprep.subr.mxu0 0.0
        %2352 = vmatpush1.msra.mxu0 %v1596
        %2353 = vmatprep.subr.mxu0 0.0
        %2354 = vmatpush1.msra.mxu0 %v1601
        %2355 = vmatprep.subr.mxu0 0.0
        %2356 = vmatpush1.msra.mxu0 %v1606
        %2357 = vmatprep.subr.mxu0 0.0
        %2358 = vmatpush1.msra.mxu0 %v1611
        %2359 = vmatprep.subr.mxu0 0.0
        %2360 = vmatpush1.msra.mxu0 %v1616
        %2361 = vmatprep.subr.mxu0 0.0
        %2362 = vmatpush1.msra.mxu0 %v1621
        %2363 = vmatprep.subr.mxu0 0.0
        %2364 = vmatpush1.msra.mxu0 %v1626
        %2365 = vmatprep.subr.mxu0 0.0
        %2366 = vmatpush1.msra.mxu0 %v1631
        %2367 = vmatprep.subr.mxu0 0.0
        %2368 = vmatpush1.msra.mxu0 %v1636
        %2369 = vmatprep.subr.mxu0 0.0
        %2370 = vmatpush1.msra.mxu0 %v1641
        %2371 = vmatprep.subr.mxu0 0.0
        %2372 = vmatpush1.msra.mxu0 %v1646
        %2373 = vmatprep.subr.mxu0 0.0
        %2374 = vmatpush1.msra.mxu0 %v1651
        %2375 = vmatprep.subr.mxu0 0.0
        %2376 = vmatpush1.msra.mxu0 %v1656
        %2377 = vmatprep.subr.mxu0 0.0
        %2378 = vmatpush1.msra.mxu0 %v1661
        %2379 = vmatprep.subr.mxu0 0.0
        %2380 = vmatpush1.msra.mxu0 %v1666
        %2381 = vmatprep.subr.mxu0 0.0
        %2382 = vmatpush1.msra.mxu0 %v1671
        %2383 = vmatprep.subr.mxu0 0.0
        %2384 = vmatpush1.msra.mxu0 %v1676
        %2385 = vmatprep.mubr.f32.mxu0 %v1749
        %2386 = vmatmul.mubr.f32.gmra.mrb[0].mxu0 %v1748
        %v2387 = vpop.f32.mrb[0].mxu0
        %v2388 = vadd.f32 %v2243, %v2387
        %v2389 = vpop.f32.mrb[0].mxu0
        %2390 = vmatprep.mubr.f32.mxu0 %v1758
        %2391 = vmatmul.mubr.f32.gmra.mrb[0].mxu0 %v1757
        %v2392 = vpop.f32.mrb[0].mxu0
        %v2393 = vadd.f32 %v2248, %v2392
        %v2394 = vpop.f32.mrb[0].mxu0
        %2395 = vmatprep.mubr.f32.mxu0 %v1767
        %2396 = vmatmul.mubr.f32.gmra.mrb[0].mxu0 %v1766
        %v2397 = vpop.f32.mrb[0].mxu0
        %v2398 = vadd.f32 %v2253, %v2397
        %v2399 = vpop.f32.mrb[0].mxu0
        %2400 = vmatprep.mubr.f32.mxu0 %v1776
        %2401 = vmatmul.mubr.f32.gmra.mrb[0].mxu0 %v1775
        %v2402 = vpop.f32.mrb[0].mxu0
        %v2403 = vadd.f32 %v2258, %v2402
        %v2404 = vpop.f32.mrb[0].mxu0
        %2405 = vmatprep.mubr.f32.mxu0 %v1785
        %2406 = vmatmul.mubr.f32.gmra.mrb[0].mxu0 %v1784
        %v2407 = vpop.f32.mrb[0].mxu0
        %v2408 = vadd.f32 %v2263, %v2407
        %v2409 = vpop.f32.mrb[0].mxu0
        %2410 = vmatprep.mubr.f32.mxu0 %v1794
        %2411 = vmatmul.mubr.f32.gmra.mrb[0].mxu0 %v1793
        %v2412 = vpop.f32.mrb[0].mxu0
        %v2413 = vadd.f32 %v2268, %v2412
        %v2414 = vpop.f32.mrb[0].mxu0
        %2415 = vmatprep.mubr.f32.mxu0 %v1803
        %2416 = vmatmul.mubr.f32.gmra.mrb[0].mxu0 %v1802
        %v2417 = vpop.f32.mrb[0].mxu0
        %v2418 = vadd.f32 %v2273, %v2417
        %v2419 = vpop.f32.mrb[0].mxu0
        %2420 = vmatprep.mubr.f32.mxu0 %v1812
        %2421 = vmatmul.mubr.f32.gmra.mrb[0].mxu0 %v1811
        %v2422 = vpop.f32.mrb[0].mxu0
        %v2423 = vadd.f32 %v2278, %v2422
        %v2424 = vpop.f32.mrb[0].mxu0
        %2425 = vmatprep.mubr.f32.mxu0 %v1821
        %2426 = vmatmul.mubr.f32.gmra.mrb[0].mxu0 %v1820
        %v2427 = vpop.f32.mrb[0].mxu0
        %v2428 = vadd.f32 %v2283, %v2427
        %v2429 = vpop.f32.mrb[0].mxu0
        %2430 = vmatprep.mubr.f32.mxu0 %v1830
        %2431 = vmatmul.mubr.f32.gmra.mrb[0].mxu0 %v1829
        %v2432 = vpop.f32.mrb[0].mxu0
        %v2433 = vadd.f32 %v2288, %v2432
        %v2434 = vpop.f32.mrb[0].mxu0
        %2435 = vmatprep.mubr.f32.mxu0 %v1839
        %2436 = vmatmul.mubr.f32.gmra.mrb[0].mxu0 %v1838
        %v2437 = vpop.f32.mrb[0].mxu0
        %v2438 = vadd.f32 %v2293, %v2437
        %v2439 = vpop.f32.mrb[0].mxu0
        %2440 = vmatprep.mubr.f32.mxu0 %v1848
        %2441 = vmatmul.mubr.f32.gmra.mrb[0].mxu0 %v1847
        %v2442 = vpop.f32.mrb[0].mxu0
        %v2443 = vadd.f32 %v2298, %v2442
        %v2444 = vpop.f32.mrb[0].mxu0
        %2445 = vmatprep.mubr.f32.mxu0 %v1857
        %2446 = vmatmul.mubr.f32.gmra.mrb[0].mxu0 %v1856
        %v2447 = vpop.f32.mrb[0].mxu0
        %v2448 = vadd.f32 %v2303, %v2447
        %v2449 = vpop.f32.mrb[0].mxu0
        %2450 = vmatprep.mubr.f32.mxu0 %v1866
        %2451 = vmatmul.mubr.f32.gmra.mrb[0].mxu0 %v1865
        %v2452 = vpop.f32.mrb[0].mxu0
        %v2453 = vadd.f32 %v2308, %v2452
        %v2454 = vpop.f32.mrb[0].mxu0
        %2455 = vmatprep.mubr.f32.mxu0 %v1875
        %2456 = vmatmul.mubr.f32.gmra.mrb[0].mxu0 %v1874
        %v2457 = vpop.f32.mrb[0].mxu0
        %v2458 = vadd.f32 %v2313, %v2457
        %v2459 = vpop.f32.mrb[0].mxu0
        %2460 = vmatprep.mubr.f32.mxu0 %v1884
        %2461 = vmatmul.mubr.f32.gmra.mrb[0].mxu0 %v1883
        %v2462 = vpop.f32.mrb[0].mxu0
        %v2463 = vadd.f32 %v2318, %v2462
        %v2464 = vpop.f32.mrb[0].mxu0
        %2465 = vdwg.mxu0
        %2466 = vmatprep.subr.mxu0 0.0
        %2467 = vmatpush1.msra.mxu0 %v1680
        %2468 = vmatprep.subr.mxu0 0.0
        %2469 = vmatpush1.msra.mxu0 %v1684
        %2470 = vmatprep.subr.mxu0 0.0
        %2471 = vmatpush1.msra.mxu0 %v1688
        %2472 = vmatprep.subr.mxu0 0.0
        %2473 = vmatpush1.msra.mxu0 %v1692
        %2474 = vmatprep.subr.mxu0 0.0
        %2475 = vmatpush1.msra.mxu0 %v1696
        %2476 = vmatprep.subr.mxu0 0.0
        %2477 = vmatpush1.msra.mxu0 %v1700
        %2478 = vmatprep.subr.mxu0 0.0
        %2479 = vmatpush1.msra.mxu0 %v1704
        %2480 = vmatprep.subr.mxu0 0.0
        %2481 = vmatpush1.msra.mxu0 %v1708
        %2482 = vmatprep.subr.mxu0 0.0
        %2483 = vmatpush1.msra.mxu0 %v1712
        %2484 = vmatprep.subr.mxu0 0.0
        %2485 = vmatpush1.msra.mxu0 %v1716
        %2486 = vmatprep.subr.mxu0 0.0
        %2487 = vmatpush1.msra.mxu0 %v1720
        %2488 = vmatprep.subr.mxu0 0.0
        %2489 = vmatpush1.msra.mxu0 %v1724
        %2490 = vmatprep.subr.mxu0 0.0
        %2491 = vmatpush1.msra.mxu0 %v1728
        %2492 = vmatprep.subr.mxu0 0.0
        %2493 = vmatpush1.msra.mxu0 %v1732
        %2494 = vmatprep.subr.mxu0 0.0
        %2495 = vmatpush1.msra.mxu0 %v1736
        %2496 = vmatprep.subr.mxu0 0.0
        %2497 = vmatpush1.msra.mxu0 %v1740
        %2498 = vmatprep.subr.mxu0 0.0
        %2499 = vmatpush1.msra.mxu0 0.0
        %2500 = vmatprep.subr.mxu0 0.0
        %2501 = vmatpush1.msra.mxu0 0.0
        %2502 = vmatprep.subr.mxu0 0.0
        %2503 = vmatpush1.msra.mxu0 0.0
        %2504 = vmatprep.subr.mxu0 0.0
        %2505 = vmatpush1.msra.mxu0 0.0
        %2506 = vmatprep.subr.mxu0 0.0
        %2507 = vmatpush1.msra.mxu0 0.0
        %2508 = vmatprep.subr.mxu0 0.0
        %2509 = vmatpush1.msra.mxu0 0.0
        %2510 = vmatprep.subr.mxu0 0.0
        %2511 = vmatpush1.msra.mxu0 0.0
        %2512 = vmatprep.subr.mxu0 0.0
        %2513 = vmatpush1.msra.mxu0 0.0
        %2514 = vmatprep.subr.mxu0 0.0
        %2515 = vmatpush1.msra.mxu0 0.0
        %2516 = vmatprep.subr.mxu0 0.0
        %2517 = vmatpush1.msra.mxu0 0.0
        %2518 = vmatprep.subr.mxu0 0.0
        %2519 = vmatpush1.msra.mxu0 0.0
        %2520 = vmatprep.subr.mxu0 0.0
        %2521 = vmatpush1.msra.mxu0 0.0
        %2522 = vmatprep.subr.mxu0 0.0
        %2523 = vmatpush1.msra.mxu0 0.0
        %2524 = vmatprep.subr.mxu0 0.0
        %2525 = vmatpush1.msra.mxu0 0.0
        %2526 = vmatprep.subr.mxu0 0.0
        %2527 = vmatpush1.msra.mxu0 0.0
        %2528 = vmatprep.subr.mxu0 0.0
        %2529 = vmatpush1.msra.mxu0 0.0
        %2530 = vmatprep.mubr.f32.mxu0 0.0
        %2531 = vmatmul.mubr.f32.gmra.mrb[0].mxu0 %v1750
        %v2532 = vpop.f32.mrb[0].mxu0
        %v2533 = vadd.f32 %v2388, %v2532
        %v2534 = vpop.f32.mrb[0].mxu0
        %2535 = vmatprep.mubr.f32.mxu0 0.0
        %2536 = vmatmul.mubr.f32.gmra.mrb[0].mxu0 %v1759
        %v2537 = vpop.f32.mrb[0].mxu0
        %v2538 = vadd.f32 %v2393, %v2537
        %v2539 = vpop.f32.mrb[0].mxu0
        %2540 = vmatprep.mubr.f32.mxu0 0.0
        %2541 = vmatmul.mubr.f32.gmra.mrb[0].mxu0 %v1768
        %v2542 = vpop.f32.mrb[0].mxu0
        %v2543 = vadd.f32 %v2398, %v2542
        %v2544 = vpop.f32.mrb[0].mxu0
        %2545 = vmatprep.mubr.f32.mxu0 0.0
        %2546 = vmatmul.mubr.f32.gmra.mrb[0].mxu0 %v1777
        %v2547 = vpop.f32.mrb[0].mxu0
        %v2548 = vadd.f32 %v2403, %v2547
        %v2549 = vpop.f32.mrb[0].mxu0
        %2550 = vmatprep.mubr.f32.mxu0 0.0
        %2551 = vmatmul.mubr.f32.gmra.mrb[0].mxu0 %v1786
        %v2552 = vpop.f32.mrb[0].mxu0
        %v2553 = vadd.f32 %v2408, %v2552
        %v2554 = vpop.f32.mrb[0].mxu0
        %2555 = vmatprep.mubr.f32.mxu0 0.0
        %2556 = vmatmul.mubr.f32.gmra.mrb[0].mxu0 %v1795
        %v2557 = vpop.f32.mrb[0].mxu0
        %v2558 = vadd.f32 %v2413, %v2557
        %v2559 = vpop.f32.mrb[0].mxu0
        %2560 = vmatprep.mubr.f32.mxu0 0.0
        %2561 = vmatmul.mubr.f32.gmra.mrb[0].mxu0 %v1804
        %v2562 = vpop.f32.mrb[0].mxu0
        %v2563 = vadd.f32 %v2418, %v2562
        %v2564 = vpop.f32.mrb[0].mxu0
        %2565 = vmatprep.mubr.f32.mxu0 0.0
        %2566 = vmatmul.mubr.f32.gmra.mrb[0].mxu0 %v1813
        %v2567 = vpop.f32.mrb[0].mxu0
        %v2568 = vadd.f32 %v2423, %v2567
        %v2569 = vpop.f32.mrb[0].mxu0
        %2570 = vmatprep.mubr.f32.mxu0 0.0
        %2571 = vmatmul.mubr.f32.gmra.mrb[0].mxu0 %v1822
        %v2572 = vpop.f32.mrb[0].mxu0
        %v2573 = vadd.f32 %v2428, %v2572
        %v2574 = vpop.f32.mrb[0].mxu0
        %2575 = vmatprep.mubr.f32.mxu0 0.0
        %2576 = vmatmul.mubr.f32.gmra.mrb[0].mxu0 %v1831
        %v2577 = vpop.f32.mrb[0].mxu0
        %v2578 = vadd.f32 %v2433, %v2577
        %v2579 = vpop.f32.mrb[0].mxu0
        %2580 = vmatprep.mubr.f32.mxu0 0.0
        %2581 = vmatmul.mubr.f32.gmra.mrb[0].mxu0 %v1840
        %v2582 = vpop.f32.mrb[0].mxu0
        %v2583 = vadd.f32 %v2438, %v2582
        %v2584 = vpop.f32.mrb[0].mxu0
        %2585 = vmatprep.mubr.f32.mxu0 0.0
        %2586 = vmatmul.mubr.f32.gmra.mrb[0].mxu0 %v1849
        %v2587 = vpop.f32.mrb[0].mxu0
        %v2588 = vadd.f32 %v2443, %v2587
        %v2589 = vpop.f32.mrb[0].mxu0
        %2590 = vmatprep.mubr.f32.mxu0 0.0
        %2591 = vmatmul.mubr.f32.gmra.mrb[0].mxu0 %v1858
        %v2592 = vpop.f32.mrb[0].mxu0
        %v2593 = vadd.f32 %v2448, %v2592
        %v2594 = vpop.f32.mrb[0].mxu0
        %2595 = vmatprep.mubr.f32.mxu0 0.0
        %2596 = vmatmul.mubr.f32.gmra.mrb[0].mxu0 %v1867
        %v2597 = vpop.f32.mrb[0].mxu0
        %v2598 = vadd.f32 %v2453, %v2597
        %v2599 = vpop.f32.mrb[0].mxu0
        %2600 = vmatprep.mubr.f32.mxu0 0.0
        %2601 = vmatmul.mubr.f32.gmra.mrb[0].mxu0 %v1876
        %v2602 = vpop.f32.mrb[0].mxu0
        %v2603 = vadd.f32 %v2458, %v2602
        %v2604 = vpop.f32.mrb[0].mxu0
        %2605 = vmatprep.mubr.f32.mxu0 0.0
        %2606 = vmatmul.mubr.f32.gmra.mrb[0].mxu0 %v1885
        %v2607 = vpop.f32.mrb[0].mxu0
        %v2608 = vadd.f32 %v2463, %v2607
        %v2609 = vpop.f32.mrb[0].mxu0
        %2610 = vdwg.mxu0
        %v2611 = vmul.f32 %v2533, 0.00390625
        %v2612 = vmul.f32 %v2538, 0.00390625
        %v2613 = vmul.f32 %v2543, 0.00390625
        %v2614 = vmul.f32 %v2548, 0.00390625
        %v2615 = vmul.f32 %v2553, 0.00390625
        %v2616 = vmul.f32 %v2558, 0.00390625
        %v2617 = vmul.f32 %v2563, 0.00390625
        %v2618 = vmul.f32 %v2568, 0.00390625
        %v2619 = vmul.f32 %v2573, 0.00390625
        %v2620 = vmul.f32 %v2578, 0.00390625
        %v2621 = vmul.f32 %v2583, 0.00390625
        %v2622 = vmul.f32 %v2588, 0.00390625
        %v2623 = vmul.f32 %v2593, 0.00390625
        %v2624 = vmul.f32 %v2598, 0.00390625
        %v2625 = vmul.f32 %v2603, 0.00390625
        %v2626 = vmul.f32 %v2608, 0.00390625
        %v2627 = vld [vmem:[%s2] sm:$0xff]
        %v2628 = vld [vmem:[%s2 + $0x8] sm:$0xff]
        %v2629 = vld [vmem:[%s2 + $0x10] sm:$0xff]
        %v2630 = vld [vmem:[%s2 + $0x18] sm:$0xff]
        %v2631 = vld [vmem:[%s2 + $0x20] sm:$0xff]
        %v2632 = vld [vmem:[%s2 + $0x28] sm:$0xff]
        %v2633 = vld [vmem:[%s2 + $0x30] sm:$0xff]
        %v2634 = vld [vmem:[%s2 + $0x38] sm:$0xff]
        %v2635 = vld [vmem:[%s2 + $0x40] sm:$0xff]
        %v2636 = vld [vmem:[%s2 + $0x48] sm:$0xff]
        %v2637 = vld [vmem:[%s2 + $0x50] sm:$0xff]
        %v2638 = vld [vmem:[%s2 + $0x58] sm:$0xff]
        %v2639 = vld [vmem:[%s2 + $0x60] sm:$0xff]
        %v2640 = vld [vmem:[%s2 + $0x68] sm:$0xff]
        %v2641 = vld [vmem:[%s2 + $0x70] sm:$0xff]
        %v2642 = vld [vmem:[%s2 + $0x78] sm:$0xff]
        %2644 = vset.pattern.permute.xlu0 0
        %2645 = vperm.xlu0 %2644, %v2627
        %v2646 = vpop.permute.xlu0 %2645
        %2649 = vset.pattern.permute.xlu0 0
        %2650 = vperm.xlu0 %2649, %v2628
        %v2651 = vpop.permute.xlu0 %2650
        %2654 = vset.pattern.permute.xlu0 0
        %2655 = vperm.xlu0 %2654, %v2629
        %v2656 = vpop.permute.xlu0 %2655
        %2659 = vset.pattern.permute.xlu0 0
        %2660 = vperm.xlu0 %2659, %v2630
        %v2661 = vpop.permute.xlu0 %2660
        %2664 = vset.pattern.permute.xlu0 0
        %2665 = vperm.xlu0 %2664, %v2631
        %v2666 = vpop.permute.xlu0 %2665
        %2669 = vset.pattern.permute.xlu0 0
        %2670 = vperm.xlu0 %2669, %v2632
        %v2671 = vpop.permute.xlu0 %2670
        %2674 = vset.pattern.permute.xlu0 0
        %2675 = vperm.xlu0 %2674, %v2633
        %v2676 = vpop.permute.xlu0 %2675
        %2679 = vset.pattern.permute.xlu0 0
        %2680 = vperm.xlu0 %2679, %v2634
        %v2681 = vpop.permute.xlu0 %2680
        %2684 = vset.pattern.permute.xlu0 0
        %2685 = vperm.xlu0 %2684, %v2635
        %v2686 = vpop.permute.xlu0 %2685
        %2689 = vset.pattern.permute.xlu0 0
        %2690 = vperm.xlu0 %2689, %v2636
        %v2691 = vpop.permute.xlu0 %2690
        %2694 = vset.pattern.permute.xlu0 0
        %2695 = vperm.xlu0 %2694, %v2637
        %v2696 = vpop.permute.xlu0 %2695
        %2699 = vset.pattern.permute.xlu0 0
        %2700 = vperm.xlu0 %2699, %v2638
        %v2701 = vpop.permute.xlu0 %2700
        %2704 = vset.pattern.permute.xlu0 0
        %2705 = vperm.xlu0 %2704, %v2639
        %v2706 = vpop.permute.xlu0 %2705
        %2709 = vset.pattern.permute.xlu0 0
        %2710 = vperm.xlu0 %2709, %v2640
        %v2711 = vpop.permute.xlu0 %2710
        %2714 = vset.pattern.permute.xlu0 0
        %2715 = vperm.xlu0 %2714, %v2641
        %v2716 = vpop.permute.xlu0 %2715
        %2719 = vset.pattern.permute.xlu0 0
        %2720 = vperm.xlu0 %2719, %v2642
        %v2721 = vpop.permute.xlu0 %2720
        %v2723 = vadd.f32 %v2611, %v2646
        %v2724 = vadd.f32 %v2612, %v2651
        %v2725 = vadd.f32 %v2613, %v2656
        %v2726 = vadd.f32 %v2614, %v2661
        %v2727 = vadd.f32 %v2615, %v2666
        %v2728 = vadd.f32 %v2616, %v2671
        %v2729 = vadd.f32 %v2617, %v2676
        %v2730 = vadd.f32 %v2618, %v2681
        %v2731 = vadd.f32 %v2619, %v2686
        %v2732 = vadd.f32 %v2620, %v2691
        %v2733 = vadd.f32 %v2621, %v2696
        %v2734 = vadd.f32 %v2622, %v2701
        %v2735 = vadd.f32 %v2623, %v2706
        %v2736 = vadd.f32 %v2624, %v2711
        %v2737 = vadd.f32 %v2625, %v2716
        %v2738 = vadd.f32 %v2626, %v2721
        %v2739 = vld [vmem:[%s3] sm:$0xff]
        %v2740 = vld [vmem:[%s3 + $0x8] sm:$0xff]
        %v2741 = vld [vmem:[%s3 + $0x10] sm:$0xff]
        %v2742 = vld [vmem:[%s3 + $0x18] sm:$0xff]
        %v2743 = vld [vmem:[%s3 + $0x20] sm:$0xff]
        %v2744 = vld [vmem:[%s3 + $0x28] sm:$0xff]
        %v2745 = vld [vmem:[%s3 + $0x30] sm:$0xff]
        %v2746 = vld [vmem:[%s3 + $0x38] sm:$0xff]
        %v2747 = vld [vmem:[%s3 + $0x40] sm:$0xff]
        %v2748 = vld [vmem:[%s3 + $0x48] sm:$0xff]
        %v2749 = vld [vmem:[%s3 + $0x50] sm:$0xff]
        %v2750 = vld [vmem:[%s3 + $0x58] sm:$0xff]
        %v2751 = vld [vmem:[%s3 + $0x60] sm:$0xff]
        %v2752 = vld [vmem:[%s3 + $0x68] sm:$0xff]
        %v2753 = vld [vmem:[%s3 + $0x70] sm:$0xff]
        %v2754 = vld [vmem:[%s3 + $0x78] sm:$0xff]
        %v2755 = vld [vmem:[%s3 + $0x80] sm:$0xff]
        %v2756 = vld [vmem:[%s3 + $0x88] sm:$0xff]
        %v2757 = vld [vmem:[%s3 + $0x90] sm:$0xff]
        %v2758 = vld [vmem:[%s3 + $0x98] sm:$0xff]
        %v2759 = vld [vmem:[%s3 + $0xa0] sm:$0xff]
        %v2760 = vld [vmem:[%s3 + $0xa8] sm:$0xff]
        %v2761 = vld [vmem:[%s3 + $0xb0] sm:$0xff]
        %v2762 = vld [vmem:[%s3 + $0xb8] sm:$0xff]
        %v2763 = vld [vmem:[%s3 + $0xc0] sm:$0xff]
        %v2764 = vld [vmem:[%s3 + $0xc8] sm:$0xff]
        %v2765 = vld [vmem:[%s3 + $0xd0] sm:$0xff]
        %v2766 = vld [vmem:[%s3 + $0xd8] sm:$0xff]
        %v2767 = vld [vmem:[%s3 + $0xe0] sm:$0xff]
        %v2768 = vld [vmem:[%s3 + $0xe8] sm:$0xff]
        %v2769 = vld [vmem:[%s3 + $0xf0] sm:$0xff]
        %v2770 = vld [vmem:[%s3 + $0xf8] sm:$0xff]
        %v2771 = vld [vmem:[%s4] sm:$0xff]
        %v2772 = vld [vmem:[%s4 + $0x8] sm:$0xff]
        %v2773 = vld [vmem:[%s4 + $0x10] sm:$0xff]
        %v2774 = vld [vmem:[%s4 + $0x18] sm:$0xff]
        %v2775 = vld [vmem:[%s4 + $0x20] sm:$0xff]
        %v2776 = vld [vmem:[%s4 + $0x28] sm:$0xff]
        %v2777 = vld [vmem:[%s4 + $0x30] sm:$0xff]
        %v2778 = vld [vmem:[%s4 + $0x38] sm:$0xff]
        %v2779 = vld [vmem:[%s4 + $0x40] sm:$0xff]
        %v2780 = vld [vmem:[%s4 + $0x48] sm:$0xff]
        %v2781 = vld [vmem:[%s4 + $0x50] sm:$0xff]
        %v2782 = vld [vmem:[%s4 + $0x58] sm:$0xff]
        %v2783 = vld [vmem:[%s4 + $0x60] sm:$0xff]
        %v2784 = vld [vmem:[%s4 + $0x68] sm:$0xff]
        %v2785 = vld [vmem:[%s4 + $0x70] sm:$0xff]
        %v2786 = vld [vmem:[%s4 + $0x78] sm:$0xff]
        %v2787 = vld [vmem:[%s4 + $0x80] sm:$0xff]
        %v2788 = vld [vmem:[%s4 + $0x88] sm:$0xff]
        %v2789 = vld [vmem:[%s4 + $0x90] sm:$0xff]
        %v2790 = vld [vmem:[%s4 + $0x98] sm:$0xff]
        %v2791 = vld [vmem:[%s4 + $0xa0] sm:$0xff]
        %v2792 = vld [vmem:[%s4 + $0xa8] sm:$0xff]
        %v2793 = vld [vmem:[%s4 + $0xb0] sm:$0xff]
        %v2794 = vld [vmem:[%s4 + $0xb8] sm:$0xff]
        %v2795 = vld [vmem:[%s4 + $0xc0] sm:$0xff]
        %v2796 = vld [vmem:[%s4 + $0xc8] sm:$0xff]
        %v2797 = vld [vmem:[%s4 + $0xd0] sm:$0xff]
        %v2798 = vld [vmem:[%s4 + $0xd8] sm:$0xff]
        %v2799 = vld [vmem:[%s4 + $0xe0] sm:$0xff]
        %v2800 = vld [vmem:[%s4 + $0xe8] sm:$0xff]
        %v2801 = vld [vmem:[%s4 + $0xf0] sm:$0xff]
        %v2802 = vld [vmem:[%s4 + $0xf8] sm:$0xff]
        %2804 = vset.pattern.permute.xlu0 0
        %2805 = vperm.xlu0 %2804, %v2771
        %v2806 = vpop.permute.xlu0 %2805
        %2809 = vset.pattern.permute.xlu0 0
        %2810 = vperm.xlu0 %2809, %v2772
        %v2811 = vpop.permute.xlu0 %2810
        %2814 = vset.pattern.permute.xlu0 0
        %2815 = vperm.xlu0 %2814, %v2773
        %v2816 = vpop.permute.xlu0 %2815
        %2819 = vset.pattern.permute.xlu0 0
        %2820 = vperm.xlu0 %2819, %v2774
        %v2821 = vpop.permute.xlu0 %2820
        %2824 = vset.pattern.permute.xlu0 0
        %2825 = vperm.xlu0 %2824, %v2775
        %v2826 = vpop.permute.xlu0 %2825
        %2829 = vset.pattern.permute.xlu0 0
        %2830 = vperm.xlu0 %2829, %v2776
        %v2831 = vpop.permute.xlu0 %2830
        %2834 = vset.pattern.permute.xlu0 0
        %2835 = vperm.xlu0 %2834, %v2777
        %v2836 = vpop.permute.xlu0 %2835
        %2839 = vset.pattern.permute.xlu0 0
        %2840 = vperm.xlu0 %2839, %v2778
        %v2841 = vpop.permute.xlu0 %2840
        %2844 = vset.pattern.permute.xlu0 0
        %2845 = vperm.xlu0 %2844, %v2779
        %v2846 = vpop.permute.xlu0 %2845
        %2849 = vset.pattern.permute.xlu0 0
        %2850 = vperm.xlu0 %2849, %v2780
        %v2851 = vpop.permute.xlu0 %2850
        %2854 = vset.pattern.permute.xlu0 0
        %2855 = vperm.xlu0 %2854, %v2781
        %v2856 = vpop.permute.xlu0 %2855
        %2859 = vset.pattern.permute.xlu0 0
        %2860 = vperm.xlu0 %2859, %v2782
        %v2861 = vpop.permute.xlu0 %2860
        %2864 = vset.pattern.permute.xlu0 0
        %2865 = vperm.xlu0 %2864, %v2783
        %v2866 = vpop.permute.xlu0 %2865
        %2869 = vset.pattern.permute.xlu0 0
        %2870 = vperm.xlu0 %2869, %v2784
        %v2871 = vpop.permute.xlu0 %2870
        %2874 = vset.pattern.permute.xlu0 0
        %2875 = vperm.xlu0 %2874, %v2785
        %v2876 = vpop.permute.xlu0 %2875
        %2879 = vset.pattern.permute.xlu0 0
        %2880 = vperm.xlu0 %2879, %v2786
        %v2881 = vpop.permute.xlu0 %2880
        %2884 = vset.pattern.permute.xlu0 0
        %2885 = vperm.xlu0 %2884, %v2787
        %v2886 = vpop.permute.xlu0 %2885
        %2889 = vset.pattern.permute.xlu0 0
        %2890 = vperm.xlu0 %2889, %v2788
        %v2891 = vpop.permute.xlu0 %2890
        %2894 = vset.pattern.permute.xlu0 0
        %2895 = vperm.xlu0 %2894, %v2789
        %v2896 = vpop.permute.xlu0 %2895
        %2899 = vset.pattern.permute.xlu0 0
        %2900 = vperm.xlu0 %2899, %v2790
        %v2901 = vpop.permute.xlu0 %2900
        %2904 = vset.pattern.permute.xlu0 0
        %2905 = vperm.xlu0 %2904, %v2791
        %v2906 = vpop.permute.xlu0 %2905
        %2909 = vset.pattern.permute.xlu0 0
        %2910 = vperm.xlu0 %2909, %v2792
        %v2911 = vpop.permute.xlu0 %2910
        %2914 = vset.pattern.permute.xlu0 0
        %2915 = vperm.xlu0 %2914, %v2793
        %v2916 = vpop.permute.xlu0 %2915
        %2919 = vset.pattern.permute.xlu0 0
        %2920 = vperm.xlu0 %2919, %v2794
        %v2921 = vpop.permute.xlu0 %2920
        %2924 = vset.pattern.permute.xlu0 0
        %2925 = vperm.xlu0 %2924, %v2795
        %v2926 = vpop.permute.xlu0 %2925
        %2929 = vset.pattern.permute.xlu0 0
        %2930 = vperm.xlu0 %2929, %v2796
        %v2931 = vpop.permute.xlu0 %2930
        %2934 = vset.pattern.permute.xlu0 0
        %2935 = vperm.xlu0 %2934, %v2797
        %v2936 = vpop.permute.xlu0 %2935
        %2939 = vset.pattern.permute.xlu0 0
        %2940 = vperm.xlu0 %2939, %v2798
        %v2941 = vpop.permute.xlu0 %2940
        %2944 = vset.pattern.permute.xlu0 0
        %2945 = vperm.xlu0 %2944, %v2799
        %v2946 = vpop.permute.xlu0 %2945
        %2949 = vset.pattern.permute.xlu0 0
        %2950 = vperm.xlu0 %2949, %v2800
        %v2951 = vpop.permute.xlu0 %2950
        %2954 = vset.pattern.permute.xlu0 0
        %2955 = vperm.xlu0 %2954, %v2801
        %v2956 = vpop.permute.xlu0 %2955
        %2959 = vset.pattern.permute.xlu0 0
        %2960 = vperm.xlu0 %2959, %v2802
        %v2961 = vpop.permute.xlu0 %2960
        %2963 = vmatprep.subr.mxu0 0.0
        %2964 = vmatpush1.msra.mxu0 %v2723
        %2965 = vmatprep.subr.mxu0 0.0
        %2966 = vmatpush1.msra.mxu0 %v2724
        %2967 = vmatprep.subr.mxu0 0.0
        %2968 = vmatpush1.msra.mxu0 %v2725
        %2969 = vmatprep.subr.mxu0 0.0
        %2970 = vmatpush1.msra.mxu0 %v2726
        %2971 = vmatprep.subr.mxu0 0.0
        %2972 = vmatpush1.msra.mxu0 %v2727
        %2973 = vmatprep.subr.mxu0 0.0
        %2974 = vmatpush1.msra.mxu0 %v2728
        %2975 = vmatprep.subr.mxu0 0.0
        %2976 = vmatpush1.msra.mxu0 %v2729
        %2977 = vmatprep.subr.mxu0 0.0
        %2978 = vmatpush1.msra.mxu0 %v2730
        %2979 = vmatprep.subr.mxu0 0.0
        %2980 = vmatpush1.msra.mxu0 %v2731
        %2981 = vmatprep.subr.mxu0 0.0
        %2982 = vmatpush1.msra.mxu0 %v2732
        %2983 = vmatprep.subr.mxu0 0.0
        %2984 = vmatpush1.msra.mxu0 %v2733
        %2985 = vmatprep.subr.mxu0 0.0
        %2986 = vmatpush1.msra.mxu0 %v2734
        %2987 = vmatprep.subr.mxu0 0.0
        %2988 = vmatpush1.msra.mxu0 %v2735
        %2989 = vmatprep.subr.mxu0 0.0
        %2990 = vmatpush1.msra.mxu0 %v2736
        %2991 = vmatprep.subr.mxu0 0.0
        %2992 = vmatpush1.msra.mxu0 %v2737
        %2993 = vmatprep.subr.mxu0 0.0
        %2994 = vmatpush1.msra.mxu0 %v2738
        %2995 = vmatprep.subr.mxu0 0.0
        %2996 = vmatpush1.msra.mxu0 0.0
        %2997 = vmatprep.subr.mxu0 0.0
        %2998 = vmatpush1.msra.mxu0 0.0
        %2999 = vmatprep.subr.mxu0 0.0
        %3000 = vmatpush1.msra.mxu0 0.0
        %3001 = vmatprep.subr.mxu0 0.0
        %3002 = vmatpush1.msra.mxu0 0.0
        %3003 = vmatprep.subr.mxu0 0.0
        %3004 = vmatpush1.msra.mxu0 0.0
        %3005 = vmatprep.subr.mxu0 0.0
        %3006 = vmatpush1.msra.mxu0 0.0
        %3007 = vmatprep.subr.mxu0 0.0
        %3008 = vmatpush1.msra.mxu0 0.0
        %3009 = vmatprep.subr.mxu0 0.0
        %3010 = vmatpush1.msra.mxu0 0.0
        %3011 = vmatprep.subr.mxu0 0.0
        %3012 = vmatpush1.msra.mxu0 0.0
        %3013 = vmatprep.subr.mxu0 0.0
        %3014 = vmatpush1.msra.mxu0 0.0
        %3015 = vmatprep.subr.mxu0 0.0
        %3016 = vmatpush1.msra.mxu0 0.0
        %3017 = vmatprep.subr.mxu0 0.0
        %3018 = vmatpush1.msra.mxu0 0.0
        %3019 = vmatprep.subr.mxu0 0.0
        %3020 = vmatpush1.msra.mxu0 0.0
        %3021 = vmatprep.subr.mxu0 0.0
        %3022 = vmatpush1.msra.mxu0 0.0
        %3023 = vmatprep.subr.mxu0 0.0
        %3024 = vmatpush1.msra.mxu0 0.0
        %3025 = vmatprep.subr.mxu0 0.0
        %3026 = vmatpush1.msra.mxu0 0.0
        %3027 = vmatprep.mubr.f32.mxu0 0.0
        %3028 = vmatmul.mubr.f32.gmra.mrb[0].mxu0 %v2739
        %v3029 = vpop.f32.mrb[0].mxu0
        %v3030 = vadd.f32 %v2806, %v3029
        %v3031 = vpop.f32.mrb[0].mxu0
        %3032 = vmatprep.mubr.f32.mxu0 0.0
        %3033 = vmatmul.mubr.f32.gmra.mrb[0].mxu0 %v2740
        %v3034 = vpop.f32.mrb[0].mxu0
        %v3035 = vadd.f32 %v2811, %v3034
        %v3036 = vpop.f32.mrb[0].mxu0
        %3037 = vmatprep.mubr.f32.mxu0 0.0
        %3038 = vmatmul.mubr.f32.gmra.mrb[0].mxu0 %v2741
        %v3039 = vpop.f32.mrb[0].mxu0
        %v3040 = vadd.f32 %v2816, %v3039
        %v3041 = vpop.f32.mrb[0].mxu0
        %3042 = vmatprep.mubr.f32.mxu0 0.0
        %3043 = vmatmul.mubr.f32.gmra.mrb[0].mxu0 %v2742
        %v3044 = vpop.f32.mrb[0].mxu0
        %v3045 = vadd.f32 %v2821, %v3044
        %v3046 = vpop.f32.mrb[0].mxu0
        %3047 = vmatprep.mubr.f32.mxu0 0.0
        %3048 = vmatmul.mubr.f32.gmra.mrb[0].mxu0 %v2743
        %v3049 = vpop.f32.mrb[0].mxu0
        %v3050 = vadd.f32 %v2826, %v3049
        %v3051 = vpop.f32.mrb[0].mxu0
        %3052 = vmatprep.mubr.f32.mxu0 0.0
        %3053 = vmatmul.mubr.f32.gmra.mrb[0].mxu0 %v2744
        %v3054 = vpop.f32.mrb[0].mxu0
        %v3055 = vadd.f32 %v2831, %v3054
        %v3056 = vpop.f32.mrb[0].mxu0
        %3057 = vmatprep.mubr.f32.mxu0 0.0
        %3058 = vmatmul.mubr.f32.gmra.mrb[0].mxu0 %v2745
        %v3059 = vpop.f32.mrb[0].mxu0
        %v3060 = vadd.f32 %v2836, %v3059
        %v3061 = vpop.f32.mrb[0].mxu0
        %3062 = vmatprep.mubr.f32.mxu0 0.0
        %3063 = vmatmul.mubr.f32.gmra.mrb[0].mxu0 %v2746
        %v3064 = vpop.f32.mrb[0].mxu0
        %v3065 = vadd.f32 %v2841, %v3064
        %v3066 = vpop.f32.mrb[0].mxu0
        %3067 = vmatprep.mubr.f32.mxu0 0.0
        %3068 = vmatmul.mubr.f32.gmra.mrb[0].mxu0 %v2747
        %v3069 = vpop.f32.mrb[0].mxu0
        %v3070 = vadd.f32 %v2846, %v3069
        %v3071 = vpop.f32.mrb[0].mxu0
        %3072 = vmatprep.mubr.f32.mxu0 0.0
        %3073 = vmatmul.mubr.f32.gmra.mrb[0].mxu0 %v2748
        %v3074 = vpop.f32.mrb[0].mxu0
        %v3075 = vadd.f32 %v2851, %v3074
        %v3076 = vpop.f32.mrb[0].mxu0
        %3077 = vmatprep.mubr.f32.mxu0 0.0
        %3078 = vmatmul.mubr.f32.gmra.mrb[0].mxu0 %v2749
        %v3079 = vpop.f32.mrb[0].mxu0
        %v3080 = vadd.f32 %v2856, %v3079
        %v3081 = vpop.f32.mrb[0].mxu0
        %3082 = vmatprep.mubr.f32.mxu0 0.0
        %3083 = vmatmul.mubr.f32.gmra.mrb[0].mxu0 %v2750
        %v3084 = vpop.f32.mrb[0].mxu0
        %v3085 = vadd.f32 %v2861, %v3084
        %v3086 = vpop.f32.mrb[0].mxu0
        %3087 = vmatprep.mubr.f32.mxu0 0.0
        %3088 = vmatmul.mubr.f32.gmra.mrb[0].mxu0 %v2751
        %v3089 = vpop.f32.mrb[0].mxu0
        %v3090 = vadd.f32 %v2866, %v3089
        %v3091 = vpop.f32.mrb[0].mxu0
        %3092 = vmatprep.mubr.f32.mxu0 0.0
        %3093 = vmatmul.mubr.f32.gmra.mrb[0].mxu0 %v2752
        %v3094 = vpop.f32.mrb[0].mxu0
        %v3095 = vadd.f32 %v2871, %v3094
        %v3096 = vpop.f32.mrb[0].mxu0
        %3097 = vmatprep.mubr.f32.mxu0 0.0
        %3098 = vmatmul.mubr.f32.gmra.mrb[0].mxu0 %v2753
        %v3099 = vpop.f32.mrb[0].mxu0
        %v3100 = vadd.f32 %v2876, %v3099
        %v3101 = vpop.f32.mrb[0].mxu0
        %3102 = vmatprep.mubr.f32.mxu0 0.0
        %3103 = vmatmul.mubr.f32.gmra.mrb[0].mxu0 %v2754
        %v3104 = vpop.f32.mrb[0].mxu0
        %v3105 = vadd.f32 %v2881, %v3104
        %v3106 = vpop.f32.mrb[0].mxu0
        %3107 = vmatprep.mubr.f32.mxu0 0.0
        %3108 = vmatmul.mubr.f32.gmra.mrb[0].mxu0 %v2755
        %v3109 = vpop.f32.mrb[0].mxu0
        %v3110 = vadd.f32 %v2886, %v3109
        %v3111 = vpop.f32.mrb[0].mxu0
        %3112 = vmatprep.mubr.f32.mxu0 0.0
        %3113 = vmatmul.mubr.f32.gmra.mrb[0].mxu0 %v2756
        %v3114 = vpop.f32.mrb[0].mxu0
        %v3115 = vadd.f32 %v2891, %v3114
        %v3116 = vpop.f32.mrb[0].mxu0
        %3117 = vmatprep.mubr.f32.mxu0 0.0
        %3118 = vmatmul.mubr.f32.gmra.mrb[0].mxu0 %v2757
        %v3119 = vpop.f32.mrb[0].mxu0
        %v3120 = vadd.f32 %v2896, %v3119
        %v3121 = vpop.f32.mrb[0].mxu0
        %3122 = vmatprep.mubr.f32.mxu0 0.0
        %3123 = vmatmul.mubr.f32.gmra.mrb[0].mxu0 %v2758
        %v3124 = vpop.f32.mrb[0].mxu0
        %v3125 = vadd.f32 %v2901, %v3124
        %v3126 = vpop.f32.mrb[0].mxu0
        %3127 = vmatprep.mubr.f32.mxu0 0.0
        %3128 = vmatmul.mubr.f32.gmra.mrb[0].mxu0 %v2759
        %v3129 = vpop.f32.mrb[0].mxu0
        %v3130 = vadd.f32 %v2906, %v3129
        %v3131 = vpop.f32.mrb[0].mxu0
        %3132 = vmatprep.mubr.f32.mxu0 0.0
        %3133 = vmatmul.mubr.f32.gmra.mrb[0].mxu0 %v2760
        %v3134 = vpop.f32.mrb[0].mxu0
        %v3135 = vadd.f32 %v2911, %v3134
        %v3136 = vpop.f32.mrb[0].mxu0
        %3137 = vmatprep.mubr.f32.mxu0 0.0
        %3138 = vmatmul.mubr.f32.gmra.mrb[0].mxu0 %v2761
        %v3139 = vpop.f32.mrb[0].mxu0
        %v3140 = vadd.f32 %v2916, %v3139
        %v3141 = vpop.f32.mrb[0].mxu0
        %3142 = vmatprep.mubr.f32.mxu0 0.0
        %3143 = vmatmul.mubr.f32.gmra.mrb[0].mxu0 %v2762
        %v3144 = vpop.f32.mrb[0].mxu0
        %v3145 = vadd.f32 %v2921, %v3144
        %v3146 = vpop.f32.mrb[0].mxu0
        %3147 = vmatprep.mubr.f32.mxu0 0.0
        %3148 = vmatmul.mubr.f32.gmra.mrb[0].mxu0 %v2763
        %v3149 = vpop.f32.mrb[0].mxu0
        %v3150 = vadd.f32 %v2926, %v3149
        %v3151 = vpop.f32.mrb[0].mxu0
        %3152 = vmatprep.mubr.f32.mxu0 0.0
        %3153 = vmatmul.mubr.f32.gmra.mrb[0].mxu0 %v2764
        %v3154 = vpop.f32.mrb[0].mxu0
        %v3155 = vadd.f32 %v2931, %v3154
        %v3156 = vpop.f32.mrb[0].mxu0
        %3157 = vmatprep.mubr.f32.mxu0 0.0
        %3158 = vmatmul.mubr.f32.gmra.mrb[0].mxu0 %v2765
        %v3159 = vpop.f32.mrb[0].mxu0
        %v3160 = vadd.f32 %v2936, %v3159
        %v3161 = vpop.f32.mrb[0].mxu0
        %3162 = vmatprep.mubr.f32.mxu0 0.0
        %3163 = vmatmul.mubr.f32.gmra.mrb[0].mxu0 %v2766
        %v3164 = vpop.f32.mrb[0].mxu0
        %v3165 = vadd.f32 %v2941, %v3164
        %v3166 = vpop.f32.mrb[0].mxu0
        %3167 = vmatprep.mubr.f32.mxu0 0.0
        %3168 = vmatmul.mubr.f32.gmra.mrb[0].mxu0 %v2767
        %v3169 = vpop.f32.mrb[0].mxu0
        %v3170 = vadd.f32 %v2946, %v3169
        %v3171 = vpop.f32.mrb[0].mxu0
        %3172 = vmatprep.mubr.f32.mxu0 0.0
        %3173 = vmatmul.mubr.f32.gmra.mrb[0].mxu0 %v2768
        %v3174 = vpop.f32.mrb[0].mxu0
        %v3175 = vadd.f32 %v2951, %v3174
        %v3176 = vpop.f32.mrb[0].mxu0
        %3177 = vmatprep.mubr.f32.mxu0 0.0
        %3178 = vmatmul.mubr.f32.gmra.mrb[0].mxu0 %v2769
        %v3179 = vpop.f32.mrb[0].mxu0
        %v3180 = vadd.f32 %v2956, %v3179
        %v3181 = vpop.f32.mrb[0].mxu0
        %3182 = vmatprep.mubr.f32.mxu0 0.0
        %3183 = vmatmul.mubr.f32.gmra.mrb[0].mxu0 %v2770
        %v3184 = vpop.f32.mrb[0].mxu0
        %v3185 = vadd.f32 %v2961, %v3184
        %v3186 = vpop.f32.mrb[0].mxu0
        %3187 = vdwg.mxu0
        %v3188 = vld [vmem:[#allocation2] sm:$0xff]
        %v3189 = vld [vmem:[#allocation2 + $0x8] sm:$0xff]
        %v3190 = vld [vmem:[#allocation2 + $0x10] sm:$0xff]
        %v3191 = vld [vmem:[#allocation2 + $0x18] sm:$0xff]
        %v3192 = vld [vmem:[#allocation2 + $0x20] sm:$0xff]
        %v3193 = vld [vmem:[#allocation2 + $0x28] sm:$0xff]
        %v3194 = vld [vmem:[#allocation2 + $0x30] sm:$0xff]
        %v3195 = vld [vmem:[#allocation2 + $0x38] sm:$0xff]
        %v3196 = vld [vmem:[#allocation2 + $0x40] sm:$0xff]
        %v3197 = vld [vmem:[#allocation2 + $0x48] sm:$0xff]
        %v3198 = vld [vmem:[#allocation2 + $0x50] sm:$0xff]
        %v3199 = vld [vmem:[#allocation2 + $0x58] sm:$0xff]
        %v3200 = vld [vmem:[#allocation2 + $0x60] sm:$0xff]
        %v3201 = vld [vmem:[#allocation2 + $0x68] sm:$0xff]
        %v3202 = vld [vmem:[#allocation2 + $0x70] sm:$0xff]
        %v3203 = vld [vmem:[#allocation2 + $0x78] sm:$0xff]
        %v3204 = vld [vmem:[#allocation2 + $0x80] sm:$0xff]
        %v3205 = vld [vmem:[#allocation2 + $0x88] sm:$0xff]
        %v3206 = vld [vmem:[#allocation2 + $0x90] sm:$0xff]
        %v3207 = vld [vmem:[#allocation2 + $0x98] sm:$0xff]
        %v3208 = vld [vmem:[#allocation2 + $0xa0] sm:$0xff]
        %v3209 = vld [vmem:[#allocation2 + $0xa8] sm:$0xff]
        %v3210 = vld [vmem:[#allocation2 + $0xb0] sm:$0xff]
        %v3211 = vld [vmem:[#allocation2 + $0xb8] sm:$0xff]
        %v3212 = vld [vmem:[#allocation2 + $0xc0] sm:$0xff]
        %v3213 = vld [vmem:[#allocation2 + $0xc8] sm:$0xff]
        %v3214 = vld [vmem:[#allocation2 + $0xd0] sm:$0xff]
        %v3215 = vld [vmem:[#allocation2 + $0xd8] sm:$0xff]
        %v3216 = vld [vmem:[#allocation2 + $0xe0] sm:$0xff]
        %v3217 = vld [vmem:[#allocation2 + $0xe8] sm:$0xff]
        %v3218 = vld [vmem:[#allocation2 + $0xf0] sm:$0xff]
        %v3219 = vld [vmem:[#allocation2 + $0xf8] sm:$0xff]
        %v3220 = vld [vmem:[%s6] sm:$0xff]
        %v3221 = vld [vmem:[%s6 + $0x8] sm:$0xff]
        %v3222 = vld [vmem:[%s6 + $0x10] sm:$0xff]
        %v3223 = vld [vmem:[%s6 + $0x18] sm:$0xff]
        %v3224 = vld [vmem:[%s6 + $0x20] sm:$0xff]
        %v3225 = vld [vmem:[%s6 + $0x28] sm:$0xff]
        %v3226 = vld [vmem:[%s6 + $0x30] sm:$0xff]
        %v3227 = vld [vmem:[%s6 + $0x38] sm:$0xff]
        %v3228 = vld [vmem:[%s6 + $0x40] sm:$0xff]
        %v3229 = vld [vmem:[%s6 + $0x48] sm:$0xff]
        %v3230 = vld [vmem:[%s6 + $0x50] sm:$0xff]
        %v3231 = vld [vmem:[%s6 + $0x58] sm:$0xff]
        %v3232 = vld [vmem:[%s6 + $0x60] sm:$0xff]
        %v3233 = vld [vmem:[%s6 + $0x68] sm:$0xff]
        %v3234 = vld [vmem:[%s6 + $0x70] sm:$0xff]
        %v3235 = vld [vmem:[%s6 + $0x78] sm:$0xff]
        %3237 = vset.pattern.permute.xlu0 0
        %3238 = vperm.xlu0 %3237, %v3220
        %v3239 = vpop.permute.xlu0 %3238
        %3242 = vset.pattern.permute.xlu0 0
        %3243 = vperm.xlu0 %3242, %v3221
        %v3244 = vpop.permute.xlu0 %3243
        %3247 = vset.pattern.permute.xlu0 0
        %3248 = vperm.xlu0 %3247, %v3222
        %v3249 = vpop.permute.xlu0 %3248
        %3252 = vset.pattern.permute.xlu0 0
        %3253 = vperm.xlu0 %3252, %v3223
        %v3254 = vpop.permute.xlu0 %3253
        %3257 = vset.pattern.permute.xlu0 0
        %3258 = vperm.xlu0 %3257, %v3224
        %v3259 = vpop.permute.xlu0 %3258
        %3262 = vset.pattern.permute.xlu0 0
        %3263 = vperm.xlu0 %3262, %v3225
        %v3264 = vpop.permute.xlu0 %3263
        %3267 = vset.pattern.permute.xlu0 0
        %3268 = vperm.xlu0 %3267, %v3226
        %v3269 = vpop.permute.xlu0 %3268
        %3272 = vset.pattern.permute.xlu0 0
        %3273 = vperm.xlu0 %3272, %v3227
        %v3274 = vpop.permute.xlu0 %3273
        %3277 = vset.pattern.permute.xlu0 0
        %3278 = vperm.xlu0 %3277, %v3228
        %v3279 = vpop.permute.xlu0 %3278
        %3282 = vset.pattern.permute.xlu0 0
        %3283 = vperm.xlu0 %3282, %v3229
        %v3284 = vpop.permute.xlu0 %3283
        %3287 = vset.pattern.permute.xlu0 0
        %3288 = vperm.xlu0 %3287, %v3230
        %v3289 = vpop.permute.xlu0 %3288
        %3292 = vset.pattern.permute.xlu0 0
        %3293 = vperm.xlu0 %3292, %v3231
        %v3294 = vpop.permute.xlu0 %3293
        %3297 = vset.pattern.permute.xlu0 0
        %3298 = vperm.xlu0 %3297, %v3232
        %v3299 = vpop.permute.xlu0 %3298
        %3302 = vset.pattern.permute.xlu0 0
        %3303 = vperm.xlu0 %3302, %v3233
        %v3304 = vpop.permute.xlu0 %3303
        %3307 = vset.pattern.permute.xlu0 0
        %3308 = vperm.xlu0 %3307, %v3234
        %v3309 = vpop.permute.xlu0 %3308
        %3312 = vset.pattern.permute.xlu0 0
        %3313 = vperm.xlu0 %3312, %v3235
        %v3314 = vpop.permute.xlu0 %3313
        %3316 = vmatprep.subr.mxu0 0.0
        %3317 = vmatpush1.msra.mxu0 %v3030
        %3318 = vmatprep.subr.mxu0 0.0
        %3319 = vmatpush1.msra.mxu0 %v3035
        %3320 = vmatprep.subr.mxu0 0.0
        %3321 = vmatpush1.msra.mxu0 %v3040
        %3322 = vmatprep.subr.mxu0 0.0
        %3323 = vmatpush1.msra.mxu0 %v3045
        %3324 = vmatprep.subr.mxu0 0.0
        %3325 = vmatpush1.msra.mxu0 %v3050
        %3326 = vmatprep.subr.mxu0 0.0
        %3327 = vmatpush1.msra.mxu0 %v3055
        %3328 = vmatprep.subr.mxu0 0.0
        %3329 = vmatpush1.msra.mxu0 %v3060
        %3330 = vmatprep.subr.mxu0 0.0
        %3331 = vmatpush1.msra.mxu0 %v3065
        %3332 = vmatprep.subr.mxu0 0.0
        %3333 = vmatpush1.msra.mxu0 %v3070
        %3334 = vmatprep.subr.mxu0 0.0
        %3335 = vmatpush1.msra.mxu0 %v3075
        %3336 = vmatprep.subr.mxu0 0.0
        %3337 = vmatpush1.msra.mxu0 %v3080
        %3338 = vmatprep.subr.mxu0 0.0
        %3339 = vmatpush1.msra.mxu0 %v3085
        %3340 = vmatprep.subr.mxu0 0.0
        %3341 = vmatpush1.msra.mxu0 %v3090
        %3342 = vmatprep.subr.mxu0 0.0
        %3343 = vmatpush1.msra.mxu0 %v3095
        %3344 = vmatprep.subr.mxu0 0.0
        %3345 = vmatpush1.msra.mxu0 %v3100
        %3346 = vmatprep.subr.mxu0 0.0
        %3347 = vmatpush1.msra.mxu0 %v3105
        %3348 = vmatprep.subr.mxu0 0.0
        %3349 = vmatpush1.msra.mxu0 %v3110
        %3350 = vmatprep.subr.mxu0 0.0
        %3351 = vmatpush1.msra.mxu0 %v3115
        %3352 = vmatprep.subr.mxu0 0.0
        %3353 = vmatpush1.msra.mxu0 %v3120
        %3354 = vmatprep.subr.mxu0 0.0
        %3355 = vmatpush1.msra.mxu0 %v3125
        %3356 = vmatprep.subr.mxu0 0.0
        %3357 = vmatpush1.msra.mxu0 %v3130
        %3358 = vmatprep.subr.mxu0 0.0
        %3359 = vmatpush1.msra.mxu0 %v3135
        %3360 = vmatprep.subr.mxu0 0.0
        %3361 = vmatpush1.msra.mxu0 %v3140
        %3362 = vmatprep.subr.mxu0 0.0
        %3363 = vmatpush1.msra.mxu0 %v3145
        %3364 = vmatprep.subr.mxu0 0.0
        %3365 = vmatpush1.msra.mxu0 %v3150
        %3366 = vmatprep.subr.mxu0 0.0
        %3367 = vmatpush1.msra.mxu0 %v3155
        %3368 = vmatprep.subr.mxu0 0.0
        %3369 = vmatpush1.msra.mxu0 %v3160
        %3370 = vmatprep.subr.mxu0 0.0
        %3371 = vmatpush1.msra.mxu0 %v3165
        %3372 = vmatprep.subr.mxu0 0.0
        %3373 = vmatpush1.msra.mxu0 %v3170
        %3374 = vmatprep.subr.mxu0 0.0
        %3375 = vmatpush1.msra.mxu0 %v3175
        %3376 = vmatprep.subr.mxu0 0.0
        %3377 = vmatpush1.msra.mxu0 %v3180
        %3378 = vmatprep.subr.mxu0 0.0
        %3379 = vmatpush1.msra.mxu0 %v3185
        %3380 = vmatprep.mubr.f32.mxu0 %v3189
        %3381 = vmatmul.mubr.f32.gmra.mrb[0].mxu0 %v3188
        %v3382 = vpop.f32.mrb[0].mxu0
        %v3383 = vadd.f32 %v3239, %v3382
        %v3384 = vpop.f32.mrb[0].mxu0
        %3385 = vmatprep.mubr.f32.mxu0 %v3191
        %3386 = vmatmul.mubr.f32.gmra.mrb[0].mxu0 %v3190
        %v3387 = vpop.f32.mrb[0].mxu0
        %v3388 = vadd.f32 %v3244, %v3387
        %v3389 = vpop.f32.mrb[0].mxu0
        %3390 = vmatprep.mubr.f32.mxu0 %v3193
        %3391 = vmatmul.mubr.f32.gmra.mrb[0].mxu0 %v3192
        %v3392 = vpop.f32.mrb[0].mxu0
        %v3393 = vadd.f32 %v3249, %v3392
        %v3394 = vpop.f32.mrb[0].mxu0
        %3395 = vmatprep.mubr.f32.mxu0 %v3195
        %3396 = vmatmul.mubr.f32.gmra.mrb[0].mxu0 %v3194
        %v3397 = vpop.f32.mrb[0].mxu0
        %v3398 = vadd.f32 %v3254, %v3397
        %v3399 = vpop.f32.mrb[0].mxu0
        %3400 = vmatprep.mubr.f32.mxu0 %v3197
        %3401 = vmatmul.mubr.f32.gmra.mrb[0].mxu0 %v3196
        %v3402 = vpop.f32.mrb[0].mxu0
        %v3403 = vadd.f32 %v3259, %v3402
        %v3404 = vpop.f32.mrb[0].mxu0
        %3405 = vmatprep.mubr.f32.mxu0 %v3199
        %3406 = vmatmul.mubr.f32.gmra.mrb[0].mxu0 %v3198
        %v3407 = vpop.f32.mrb[0].mxu0
        %v3408 = vadd.f32 %v3264, %v3407
        %v3409 = vpop.f32.mrb[0].mxu0
        %3410 = vmatprep.mubr.f32.mxu0 %v3201
        %3411 = vmatmul.mubr.f32.gmra.mrb[0].mxu0 %v3200
        %v3412 = vpop.f32.mrb[0].mxu0
        %v3413 = vadd.f32 %v3269, %v3412
        %v3414 = vpop.f32.mrb[0].mxu0
        %3415 = vmatprep.mubr.f32.mxu0 %v3203
        %3416 = vmatmul.mubr.f32.gmra.mrb[0].mxu0 %v3202
        %v3417 = vpop.f32.mrb[0].mxu0
        %v3418 = vadd.f32 %v3274, %v3417
        %v3419 = vpop.f32.mrb[0].mxu0
        %3420 = vmatprep.mubr.f32.mxu0 %v3205
        %3421 = vmatmul.mubr.f32.gmra.mrb[0].mxu0 %v3204
        %v3422 = vpop.f32.mrb[0].mxu0
        %v3423 = vadd.f32 %v3279, %v3422
        %v3424 = vpop.f32.mrb[0].mxu0
        %3425 = vmatprep.mubr.f32.mxu0 %v3207
        %3426 = vmatmul.mubr.f32.gmra.mrb[0].mxu0 %v3206
        %v3427 = vpop.f32.mrb[0].mxu0
        %v3428 = vadd.f32 %v3284, %v3427
        %v3429 = vpop.f32.mrb[0].mxu0
        %3430 = vmatprep.mubr.f32.mxu0 %v3209
        %3431 = vmatmul.mubr.f32.gmra.mrb[0].mxu0 %v3208
        %v3432 = vpop.f32.mrb[0].mxu0
        %v3433 = vadd.f32 %v3289, %v3432
        %v3434 = vpop.f32.mrb[0].mxu0
        %3435 = vmatprep.mubr.f32.mxu0 %v3211
        %3436 = vmatmul.mubr.f32.gmra.mrb[0].mxu0 %v3210
        %v3437 = vpop.f32.mrb[0].mxu0
        %v3438 = vadd.f32 %v3294, %v3437
        %v3439 = vpop.f32.mrb[0].mxu0
        %3440 = vmatprep.mubr.f32.mxu0 %v3213
        %3441 = vmatmul.mubr.f32.gmra.mrb[0].mxu0 %v3212
        %v3442 = vpop.f32.mrb[0].mxu0
        %v3443 = vadd.f32 %v3299, %v3442
        %v3444 = vpop.f32.mrb[0].mxu0
        %3445 = vmatprep.mubr.f32.mxu0 %v3215
        %3446 = vmatmul.mubr.f32.gmra.mrb[0].mxu0 %v3214
        %v3447 = vpop.f32.mrb[0].mxu0
        %v3448 = vadd.f32 %v3304, %v3447
        %v3449 = vpop.f32.mrb[0].mxu0
        %3450 = vmatprep.mubr.f32.mxu0 %v3217
        %3451 = vmatmul.mubr.f32.gmra.mrb[0].mxu0 %v3216
        %v3452 = vpop.f32.mrb[0].mxu0
        %v3453 = vadd.f32 %v3309, %v3452
        %v3454 = vpop.f32.mrb[0].mxu0
        %3455 = vmatprep.mubr.f32.mxu0 %v3219
        %3456 = vmatmul.mubr.f32.gmra.mrb[0].mxu0 %v3218
        %v3457 = vpop.f32.mrb[0].mxu0
        %v3458 = vadd.f32 %v3314, %v3457
        %v3459 = vpop.f32.mrb[0].mxu0
        %3460 = vdwg.mxu0
        %3462 = vset.pattern.permute.xlu0 0
        %3463 = vperm.xlu0 %3462, %v3383
        %v3464 = vpop.permute.xlu0 %3463
        %3467 = vset.pattern.permute.xlu0 0
        %3468 = vperm.xlu0 %3467, %v3388
        %v3469 = vpop.permute.xlu0 %3468
        %3472 = vset.pattern.permute.xlu0 0
        %3473 = vperm.xlu0 %3472, %v3393
        %v3474 = vpop.permute.xlu0 %3473
        %3477 = vset.pattern.permute.xlu0 0
        %3478 = vperm.xlu0 %3477, %v3398
        %v3479 = vpop.permute.xlu0 %3478
        %3482 = vset.pattern.permute.xlu0 0
        %3483 = vperm.xlu0 %3482, %v3403
        %v3484 = vpop.permute.xlu0 %3483
        %3487 = vset.pattern.permute.xlu0 0
        %3488 = vperm.xlu0 %3487, %v3408
        %v3489 = vpop.permute.xlu0 %3488
        %3492 = vset.pattern.permute.xlu0 0
        %3493 = vperm.xlu0 %3492, %v3413
        %v3494 = vpop.permute.xlu0 %3493
        %3497 = vset.pattern.permute.xlu0 0
        %3498 = vperm.xlu0 %3497, %v3418
        %v3499 = vpop.permute.xlu0 %3498
        %3502 = vset.pattern.permute.xlu0 0
        %3503 = vperm.xlu0 %3502, %v3423
        %v3504 = vpop.permute.xlu0 %3503
        %3507 = vset.pattern.permute.xlu0 0
        %3508 = vperm.xlu0 %3507, %v3428
        %v3509 = vpop.permute.xlu0 %3508
        %3512 = vset.pattern.permute.xlu0 0
        %3513 = vperm.xlu0 %3512, %v3433
        %v3514 = vpop.permute.xlu0 %3513
        %3517 = vset.pattern.permute.xlu0 0
        %3518 = vperm.xlu0 %3517, %v3438
        %v3519 = vpop.permute.xlu0 %3518
        %3522 = vset.pattern.permute.xlu0 0
        %3523 = vperm.xlu0 %3522, %v3443
        %v3524 = vpop.permute.xlu0 %3523
        %3527 = vset.pattern.permute.xlu0 0
        %3528 = vperm.xlu0 %3527, %v3448
        %v3529 = vpop.permute.xlu0 %3528
        %3532 = vset.pattern.permute.xlu0 0
        %3533 = vperm.xlu0 %3532, %v3453
        %v3534 = vpop.permute.xlu0 %3533
        %3537 = vset.pattern.permute.xlu0 0
        %3538 = vperm.xlu0 %3537, %v3458
        %v3539 = vpop.permute.xlu0 %3538
        %v3541 = vmul.f32 %v325, %v3464
        %v3542 = vmul.f32 %v326, %v3464
        %v3543 = vmul.f32 %v327, %v3469
        %v3544 = vmul.f32 %v328, %v3469
        %v3545 = vmul.f32 %v329, %v3474
        %v3546 = vmul.f32 %v330, %v3474
        %v3547 = vmul.f32 %v331, %v3479
        %v3548 = vmul.f32 %v332, %v3479
        %v3549 = vmul.f32 %v333, %v3484
        %v3550 = vmul.f32 %v334, %v3484
        %v3551 = vmul.f32 %v335, %v3489
        %v3552 = vmul.f32 %v336, %v3489
        %v3553 = vmul.f32 %v337, %v3494
        %v3554 = vmul.f32 %v338, %v3494
        %v3555 = vmul.f32 %v339, %v3499
        %v3556 = vmul.f32 %v340, %v3499
        %v3557 = vmul.f32 %v341, %v3504
        %v3558 = vmul.f32 %v342, %v3504
        %v3559 = vmul.f32 %v343, %v3509
        %v3560 = vmul.f32 %v344, %v3509
        %v3561 = vmul.f32 %v345, %v3514
        %v3562 = vmul.f32 %v346, %v3514
        %v3563 = vmul.f32 %v347, %v3519
        %v3564 = vmul.f32 %v348, %v3519
        %v3565 = vmul.f32 %v349, %v3524
        %v3566 = vmul.f32 %v350, %v3524
        %v3567 = vmul.f32 %v351, %v3529
        %v3568 = vmul.f32 %v352, %v3529
        %v3569 = vmul.f32 %v353, %v3534
        %v3570 = vmul.f32 %v354, %v3534
        %v3571 = vmul.f32 %v355, %v3539
        %v3572 = vmul.f32 %v356, %v3539
        %3573 = vst [vmem:[%s293] sm:$0xff] %v3541
        %3574 = vst [vmem:[%s293 + $0x8] sm:$0xff] %v3542
        %3575 = vst [vmem:[%s293 + $0x10] sm:$0xff] %v3543
        %3576 = vst [vmem:[%s293 + $0x18] sm:$0xff] %v3544
        %3577 = vst [vmem:[%s293 + $0x20] sm:$0xff] %v3545
        %3578 = vst [vmem:[%s293 + $0x28] sm:$0xff] %v3546
        %3579 = vst [vmem:[%s293 + $0x30] sm:$0xff] %v3547
        %3580 = vst [vmem:[%s293 + $0x38] sm:$0xff] %v3548
        %3581 = vst [vmem:[%s293 + $0x40] sm:$0xff] %v3549
        %3582 = vst [vmem:[%s293 + $0x48] sm:$0xff] %v3550
        %3583 = vst [vmem:[%s293 + $0x50] sm:$0xff] %v3551
        %3584 = vst [vmem:[%s293 + $0x58] sm:$0xff] %v3552
        %3585 = vst [vmem:[%s293 + $0x60] sm:$0xff] %v3553
        %3586 = vst [vmem:[%s293 + $0x68] sm:$0xff] %v3554
        %3587 = vst [vmem:[%s293 + $0x70] sm:$0xff] %v3555
        %3588 = vst [vmem:[%s293 + $0x78] sm:$0xff] %v3556
        %3589 = vst [vmem:[%s293 + $0x80] sm:$0xff] %v3557
        %3590 = vst [vmem:[%s293 + $0x88] sm:$0xff] %v3558
        %3591 = vst [vmem:[%s293 + $0x90] sm:$0xff] %v3559
        %3592 = vst [vmem:[%s293 + $0x98] sm:$0xff] %v3560
        %3593 = vst [vmem:[%s293 + $0xa0] sm:$0xff] %v3561
        %3594 = vst [vmem:[%s293 + $0xa8] sm:$0xff] %v3562
        %3595 = vst [vmem:[%s293 + $0xb0] sm:$0xff] %v3563
        %3596 = vst [vmem:[%s293 + $0xb8] sm:$0xff] %v3564
        %3597 = vst [vmem:[%s293 + $0xc0] sm:$0xff] %v3565
        %3598 = vst [vmem:[%s293 + $0xc8] sm:$0xff] %v3566
        %3599 = vst [vmem:[%s293 + $0xd0] sm:$0xff] %v3567
        %3600 = vst [vmem:[%s293 + $0xd8] sm:$0xff] %v3568
        %3601 = vst [vmem:[%s293 + $0xe0] sm:$0xff] %v3569
        %3602 = vst [vmem:[%s293 + $0xe8] sm:$0xff] %v3570
        %3603 = vst [vmem:[%s293 + $0xf0] sm:$0xff] %v3571
        %3604 = vst [vmem:[%s293 + $0xf8] sm:$0xff] %v3572
        %p3605 = scmp.lt.s32.totalorder %s19, 1
        %s3606 = scalar_select %p3605, %s19, 1
        %s3607 = smul.addr %s3606, 32
        %s3608 = smul.addr %s3607, 8
        %s3609 = scalar_lea.vmem %s7, %s3608
        // Predicated region
        $region53: #{convfuse_forward.1} parent=47 // pred_check
          %p3610 = pneg %p189
        $region54: #{convfuse_forward.1} parent=47 // pred_check_branch
          %3612 = sbr.rel (%p3610) target = $region56
        $region55: #{convfuse_forward.1} parent=47 // pred_region
          _
        $region56: #{convfuse_forward.1} parent=47 // pred_fallthru
          _
      $region48: #{convfuse_forward.1} parent=5 // pred_fallthru
        _
      %p3613 = scmp.le.s32.totalorder 2, %s14
      // Predicated region
      $region57: #{convfuse_forward.1} parent=5 // pred_check
        %p3614 = pneg %p3613
      $region58: #{convfuse_forward.1} parent=5 // pred_check_branch
        %3616 = sbr.rel (%p3614) target = $region60
      $region59: #{convfuse_forward.1} parent=5 // pred_region
        %s3617 = ssub.s32 %s14, 2
        // Predicated region
        $region61: #{convfuse_forward.1} parent=59 // pred_check
          %p3618 = pneg %p195
        $region62: #{convfuse_forward.1} parent=59 // pred_check_branch
          %3620 = sbr.rel (%p3618) target = $region64
        $region63: #{convfuse_forward.1} parent=59 // pred_region
          %p3621 = scmp.lt.s32.totalorder %s20, 1
          %s3622 = scalar_select %p3621, %s20, 1
          %s3623 = smul.addr %s3622, 32
          %s3624 = smul.addr %s3623, 8
          %s3625 = scalar_lea.vmem %s7, %s3624
        $region64: #{convfuse_forward.1} parent=59 // pred_fallthru
          _
      $region60: #{convfuse_forward.1} parent=5 // pred_fallthru
        _
    $region6: #{convfuse_forward.1} parent=1 // loop_footer
      %s18 = sadd.s32 1, %s14
    $region7: #{convfuse_forward.1} parent=1 // loop_footer_branch
      %13 = sbr.rel target = $region3
    $region8: #{convfuse_forward.1} parent=1 // loop_exit
      _
    %3626 = vsyncpa [#allocation3], 1
    %s3627 = scalar_lea.sflag [#allocation3], 1
    %3628 = vsyncpa %s3627, 1

</llo_original>
